<compile_context>
chip_gen: v5e
topology: v5e:2x2
jax: 0.10.0
libtpu: 0.0.40
codegen_flags: <defaults>
</compile_context>

<pallas_src>
import functools

import jax
import jax.numpy as jnp
import numpy as np
from jax.experimental import pallas as pl
from jax.experimental.pallas import tpu as pltpu

_BN_EPS = 1e-5
_LANE = 128
_SUBLANE = 8


def _round_up(x, m):
    return (x + m - 1) // m * m


def _vmem_limit_bytes():
    """Scoped-VMEM limit adapted to the part: ~85% of physical, capped at 112 MiB
    (=> ~109 MiB on v5e/v6e 128-MiB parts, ~54 MiB on v7x 64-MiB parts)."""
    cap = 128 * 1024 * 1024
    try:
        cap = int(getattr(pltpu.get_tpu_info(), "vmem_capacity_bytes", cap))
    except Exception:
        pass
    return max(32 * 1024 * 1024, min(int(cap * 0.85), 112 * 1024 * 1024))


# ----------------------------- fused Pallas kernel -----------------------------

def _block_kernel(x_ref, mask_ref, *refs, n_rep, relu_flags, has_skip_conv, Hp, Wp):
    """Fused Block forward for one batch element.

    x_ref    : (1, Cin_p, Sp)  zero-halo flattened input (channels on sublanes,
                               flat padded spatial on lanes, f32)
    mask_ref : (1, Sp)         1.0 on interior voxels, 0.0 on halo / lane pad
    refs     : per rep [w_dw (Cin_p,27) f32, w_pw_scaled (Cout_p,Cin_p) bf16]
               then (if skip conv) [w_skip_scaled (Cout_p,Cin_p) bf16]
               then bias tile (Cout_p, n_bias) f32, then output (1, Cout_p, Sp).
    """
    o_ref = refs[-1]
    bias_ref = refs[-2]
    params = refs[:-2]

    Sp = x_ref.shape[-1]
    x0 = x_ref[0]                      # (Cin_p, Sp) f32
    mask = mask_ref[...]               # (1, Sp)    f32

    def depthwise(v, wdw_ref):
        # 27-tap depthwise conv: lane rolls on the XLU slot, 1 mul + 1 add per tap
        # on the VPU (no boundary-mask multiply thanks to the zero halo).
        acc = None
        t = 0
        for kd in (-1, 0, 1):
            for kh in (-1, 0, 1):
                for kw in (-1, 0, 1):
                    off = kd * Hp * Wp + kh * Wp + kw
                    shifted = v if off == 0 else pltpu.roll(v, shift=(-off) % Sp, axis=1)
                    term = shifted * wdw_ref[:, t:t + 1]        # (C_p,1) bcast on lanes
                    acc = term if acc is None else acc + term
                    t += 1
        return acc

    v = x0
    for li in range(n_rep):
        wdw_ref, wpw_ref = params[2 * li], params[2 * li + 1]
        if relu_flags[li]:
            v = jnp.maximum(v, 0.0)
        v = depthwise(v, wdw_ref)
        # Pointwise 1x1x1 conv (BN scale pre-folded) on the MXU, bf16 in / f32 acc;
        # spatial is the lane-dense N dim, so this overlaps the VALU-bound depthwise.
        v = jnp.dot(wpw_ref[...], v.astype(jnp.bfloat16),
                    preferred_element_type=jnp.float32) + bias_ref[:, li:li + 1]
        if li < n_rep - 1:
            # Re-zero halo + lane-pad columns so the next depthwise sees padding=1
            # zeros and pad garbage never leaks into valid voxels (one mul per rep
            # instead of 27 per rep).
            v = v * mask

    if has_skip_conv:
        wsk_ref = params[2 * n_rep]
        skip = jnp.dot(wsk_ref[...], x0.astype(jnp.bfloat16),
                       preferred_element_type=jnp.float32) + bias_ref[:, n_rep:n_rep + 1]
    else:
        skip = x0                      # identity skip (Cin == Cout, asserted host-side)

    o_ref[0] = (v + skip).astype(o_ref.dtype)


# ----------------------------- host-side helpers -----------------------------

def _bn_fold(bn):
    scale = bn['gamma'] / jnp.sqrt(bn['var'] + _BN_EPS)
    shift = bn['beta'] - bn['mean'] * scale
    return scale.astype(jnp.float32), shift.astype(jnp.float32)


# ----------------------------- Block forward -----------------------------

def block_forward(x_ncdhw, params):
    """Forward of Block. x_ncdhw: (N, Cin, D, H, W) -> (N, planes, D, H, W)."""
    N, Cin, D, H, W = x_ncdhw.shape
    Dp, Hp, Wp = D + 2, H + 2, W + 2
    S_halo = Dp * Hp * Wp
    Sp = _round_up(S_halo, _LANE)
    Cin_p = _round_up(Cin, _SUBLANE)

    # Zero-halo flattened layout: 1 zero voxel on every face (== conv padding=1
    # zeros), channels padded to a sublane multiple, flat spatial to a lane multiple.
    xp = jnp.pad(x_ncdhw.astype(jnp.float32),
                 ((0, 0), (0, Cin_p - Cin), (1, 1), (1, 1), (1, 1)))
    x3 = xp.reshape(N, Cin_p, S_halo)
    if Sp != S_halo:
        x3 = jnp.pad(x3, ((0, 0), (0, 0), (0, Sp - S_halo)))

    # Single (1, Sp) interior mask (replaces the old (27,1,Sp) per-tap mask tensor).
    m = np.zeros((Dp, Hp, Wp), np.float32)
    m[1:-1, 1:-1, 1:-1] = 1.0
    mask = jnp.asarray(np.pad(m.reshape(-1), (0, Sp - S_halo))[None, :])

    args = [x3, mask]
    in_specs = [
        pl.BlockSpec((1, Cin_p, Sp), lambda n: (n, 0, 0)),
        pl.BlockSpec((1, Sp), lambda n: (0, 0)),
    ]

    def const_spec(shape):
        nd = len(shape)
        return pl.BlockSpec(shape, lambda n, _nd=nd: (0,) * _nd)

    relu_flags, bias_cols = [], []
    c_prev = Cin
    for layer in params['rep']:
        cin, cout = layer['w_pw'].shape
        assert cin == c_prev
        cin_p, cout_p = _round_up(cin, _SUBLANE), _round_up(cout, _SUBLANE)
        # Depthwise taps packed channels-on-sublanes, taps-on-lanes: (cin_p, 27).
        w27 = jnp.pad(layer['w_dw'].reshape(27, cin).T.astype(jnp.float32),
                      ((0, cin_p - cin), (0, 0)))
        # Pointwise conv with BN scale folded in, transposed to (Cout_p, Cin_p), bf16.
        scale, shift = _bn_fold(layer['bn'])
        wps = (layer['w_pw'].astype(jnp.float32) * scale[None, :]).T
        wps = jnp.pad(wps, ((0, cout_p - cout), (0, cin_p - cin))).astype(jnp.bfloat16)
        args += [w27, wps]
        in_specs += [const_spec((cin_p, 27)), const_spec((cout_p, cin_p))]
        bias_cols.append(jnp.pad(shift, (0, cout_p - cout)))
        relu_flags.append(bool(layer['relu']))
        c_prev = cout

    cout = c_prev
    cout_p = _round_up(cout, _SUBLANE)
    has_skip = params['skip'] is not None
    if has_skip:
        scale, shift = _bn_fold(params['skip']['bn'])
        wsk = (params['skip']['w'].astype(jnp.float32) * scale[None, :]).T
        wsk = jnp.pad(wsk, ((0, cout_p - cout), (0, Cin_p - Cin))).astype(jnp.bfloat16)
        args += [wsk]
        in_specs += [const_spec((cout_p, Cin_p))]
        bias_cols.append(jnp.pad(shift, (0, cout_p - cout)))
    else:
        # Identity skip adds x0 directly to the rep output: shapes must match.
        assert Cin == cout and Cin_p == cout_p, "identity skip requires Cin == Cout"

    # All BN shifts in ONE (cout_p, n_bias) tile -> a single 1->128 lane pad total.
    bias_tile = jnp.stack(bias_cols, axis=1).astype(jnp.float32)
    args += [bias_tile]
    in_specs += [const_spec((cout_p, len(bias_cols)))]

    kernel = functools.partial(
        _block_kernel, n_rep=len(params['rep']), relu_flags=tuple(relu_flags),
        has_skip_conv=has_skip, Hp=Hp, Wp=Wp)

    out = pl.pallas_call(
        kernel,
        out_shape=jax.ShapeDtypeStruct((N, cout_p, Sp), x_ncdhw.dtype),
        grid=(N,),
        in_specs=in_specs,
        out_specs=pl.BlockSpec((1, cout_p, Sp), lambda n: (n, 0, 0)),
        compiler_params=pltpu.CompilerParams(
            dimension_semantics=("parallel",),
            vmem_limit_bytes=_vmem_limit_bytes()),
    )(*args)

    # Strip channel/lane padding and the 1-voxel halo (one extra HBM pass; cheap
    # next to the 27*reps-tap kernel; consumers accepting the padded layout can skip).
    out = out[:, :cout, :S_halo].reshape(N, cout, Dp, Hp, Wp)
    return out[:, :, 1:-1, 1:-1, 1:-1]


# ----------------------------- parameter init -----------------------------

def _bn_init(key, c):
    k1, k2, k3, k4 = jax.random.split(key, 4)
    return dict(
        gamma=1.0 + 0.1 * jax.random.normal(k1, (c,), jnp.float32),
        beta=0.1 * jax.random.normal(k2, (c,), jnp.float32),
        mean=0.1 * jax.random.normal(k3, (c,), jnp.float32),
        var=0.9 + 0.2 * jax.random.uniform(k4, (c,), jnp.float32),
    )


def init_block_params(key, inplanes, planes, reps, stride=1, dilation=1,
                      start_with_relu=True):
    # TODO(synk): only the stride=1, dilation=1 configuration is supported.
    assert stride == 1 and dilation == 1
    keys = jax.random.split(key, 2 * reps + 1)
    layers = []
    cin = inplanes
    for i in range(reps):
        cout = planes  # first layer in->planes, remaining planes->planes
        w_dw = 0.2 * jax.random.normal(keys[2 * i], (3, 3, 3, cin), jnp.float32)
        w_pw = 0.3 * jax.random.normal(keys[2 * i + 1], (cin, cout), jnp.float32)
        bn = _bn_init(jax.random.fold_in(key, 100 + i), cout)
        relu_flag = bool(start_with_relu) if i == 0 else True
        layers.append(dict(w_dw=w_dw, w_pw=w_pw, bn=bn, relu=relu_flag))
        cin = cout
    skip = None
    if planes != inplanes or stride != 1:
        w_skip = 0.3 * jax.random.normal(keys[-1], (inplanes, planes), jnp.float32)
        skip = dict(w=w_skip, bn=_bn_init(jax.random.fold_in(key, 999), planes))
    return dict(rep=layers, skip=skip)


# ----------------------------- pure-JAX reference -----------------------------

def block_forward_ref(x, params):
    def bn(v, p):
        shp = (1, -1, 1, 1, 1)
        return ((v - p['mean'].reshape(shp))
                / jnp.sqrt(p['var'].reshape(shp) + _BN_EPS)
                * p['gamma'].reshape(shp) + p['beta'].reshape(shp))

    rep = x
    for layer in params['rep']:
        if layer['relu']:
            rep = jnp.maximum(rep, 0.0)
        C = rep.shape[1]
        w_dw = jnp.transpose(layer['w_dw'], (3, 0, 1, 2))[:, None]  # (C,1,3,3,3)
        rep = jax.lax.conv_general_dilated(
            rep, w_dw, window_strides=(1, 1, 1),
            padding=((1, 1), (1, 1), (1, 1)),
            feature_group_count=C,
            dimension_numbers=('NCDHW', 'OIDHW', 'NCDHW'))
        rep = jnp.einsum('ncdhw,co->nodhw', rep, layer['w_pw'])
        rep = bn(rep, layer['bn'])
    if params['skip'] is not None:
        skip = jnp.einsum('ncdhw,co->nodhw', x, params['skip']['w'])
        skip = bn(skip, params['skip']['bn'])
    else:
        skip = x
    return rep + skip


# ----------------------------- main -----------------------------

if __name__ == "__main__":
    key = jax.random.PRNGKey(0)
    kx, kp = jax.random.split(key)

    N, inplanes, planes, S = 2, 4, 8, 8  # NCDHW input, like PyTorch
    x = jax.random.normal(kx, (N, inplanes, S, S, S), jnp.float32)
    params = init_block_params(kp, inplanes, planes, reps=2,
                               stride=1, dilation=1, start_with_relu=True)

    out = jax.block_until_ready(block_forward(x, params))
    assert out.shape == (N, planes, S, S, S)

    ref = jax.block_until_ready(block_forward_ref(x, params))
    np.testing.assert_allclose(np.asarray(out), np.asarray(ref), rtol=2e-2, atol=2e-2)

    print("KERNEL_OK")
</pallas_src>

<mosaic_0001>
module attributes {stable_mosaic.version = 11 : i64} {
  func.func @_block_kernel(%arg0: i32, %arg1: memref<1x8x1024xf32, #tpu.memory_space<vmem>>, %arg2: memref<1x1024xf32, #tpu.memory_space<vmem>>, %arg3: memref<8x27xf32, #tpu.memory_space<vmem>>, %arg4: memref<8x8xbf16, #tpu.memory_space<vmem>>, %arg5: memref<8x27xf32, #tpu.memory_space<vmem>>, %arg6: memref<8x8xbf16, #tpu.memory_space<vmem>>, %arg7: memref<8x8xbf16, #tpu.memory_space<vmem>>, %arg8: memref<8x3xf32, #tpu.memory_space<vmem>>, %arg9: memref<1x8x1024xf32, #tpu.memory_space<vmem>>) attributes {dimension_semantics = [#tpu.dimension_semantics<parallel>], iteration_bounds = array<i64: 2>, scalar_prefetch = 0 : i64, scratch_operands = 0 : i64, tpu.core_type = #tpu.core_type<tc>, window_params = [{transform_indices = @transform_0, window_bounds = array<i64: 1, 8, 1024>}, {pipeline_mode = #tpu.pipeline_mode<synchronous>, transform_indices = @transform_1, window_bounds = array<i64: 1, 1024>}, {pipeline_mode = #tpu.pipeline_mode<synchronous>, transform_indices = @transform_2, window_bounds = array<i64: 8, 27>}, {pipeline_mode = #tpu.pipeline_mode<synchronous>, transform_indices = @transform_3, window_bounds = array<i64: 8, 8>}, {pipeline_mode = #tpu.pipeline_mode<synchronous>, transform_indices = @transform_4, window_bounds = array<i64: 8, 27>}, {pipeline_mode = #tpu.pipeline_mode<synchronous>, transform_indices = @transform_5, window_bounds = array<i64: 8, 8>}, {pipeline_mode = #tpu.pipeline_mode<synchronous>, transform_indices = @transform_6, window_bounds = array<i64: 8, 8>}, {pipeline_mode = #tpu.pipeline_mode<synchronous>, transform_indices = @transform_7, window_bounds = array<i64: 8, 3>}, {transform_indices = @transform_8, window_bounds = array<i64: 1, 8, 1024>}]} {
    %c0 = arith.constant 0 : index
    %c0_0 = arith.constant 0 : index
    %c0_1 = arith.constant 0 : index
    %0 = vector.load %arg1[%c0, %c0_0, %c0_1] : memref<1x8x1024xf32, #tpu.memory_space<vmem>>, vector<1x8x1024xf32>
    %1 = vector.shape_cast %0 : vector<1x8x1024xf32> to vector<8x1024xf32>
    %c0_2 = arith.constant 0 : index
    %c0_3 = arith.constant 0 : index
    %2 = vector.load %arg2[%c0_2, %c0_3] : memref<1x1024xf32, #tpu.memory_space<vmem>>, vector<1x1024xf32>
    %cst = arith.constant 0.000000e+00 : f32
    %3 = vector.broadcast %cst : f32 to vector<8x1024xf32>
    %4 = arith.maximumf %1, %3 : vector<8x1024xf32>
    %c111_i32 = arith.constant 111 : i32
    %5 = tpu.dynamic_rotate %4 by %c111_i32 dim 1 : vector<8x1024xf32>, i32 -> vector<8x1024xf32>
    %c0_4 = arith.constant 0 : index
    %c0_5 = arith.constant 0 : index
    %6 = vector.load %arg3[%c0_4, %c0_5] : memref<8x27xf32, #tpu.memory_space<vmem>>, vector<8x1xf32>
    %7 = vector.broadcast %6 : vector<8x1xf32> to vector<8x1024xf32>
    %8 = arith.mulf %5, %7 : vector<8x1024xf32>
    %c110_i32 = arith.constant 110 : i32
    %9 = tpu.dynamic_rotate %4 by %c110_i32 dim 1 : vector<8x1024xf32>, i32 -> vector<8x1024xf32>
    %c0_6 = arith.constant 0 : index
    %c1 = arith.constant 1 : index
    %10 = vector.load %arg3[%c0_6, %c1] : memref<8x27xf32, #tpu.memory_space<vmem>>, vector<8x1xf32>
    %11 = vector.broadcast %10 : vector<8x1xf32> to vector<8x1024xf32>
    %12 = arith.mulf %9, %11 : vector<8x1024xf32>
    %13 = arith.addf %8, %12 : vector<8x1024xf32>
    %c109_i32 = arith.constant 109 : i32
    %14 = tpu.dynamic_rotate %4 by %c109_i32 dim 1 : vector<8x1024xf32>, i32 -> vector<8x1024xf32>
    %c0_7 = arith.constant 0 : index
    %c2 = arith.constant 2 : index
    %15 = vector.load %arg3[%c0_7, %c2] : memref<8x27xf32, #tpu.memory_space<vmem>>, vector<8x1xf32>
    %16 = vector.broadcast %15 : vector<8x1xf32> to vector<8x1024xf32>
    %17 = arith.mulf %14, %16 : vector<8x1024xf32>
    %18 = arith.addf %13, %17 : vector<8x1024xf32>
    %c101_i32 = arith.constant 101 : i32
    %19 = tpu.dynamic_rotate %4 by %c101_i32 dim 1 : vector<8x1024xf32>, i32 -> vector<8x1024xf32>
    %c0_8 = arith.constant 0 : index
    %c3 = arith.constant 3 : index
    %20 = vector.load %arg3[%c0_8, %c3] : memref<8x27xf32, #tpu.memory_space<vmem>>, vector<8x1xf32>
    %21 = vector.broadcast %20 : vector<8x1xf32> to vector<8x1024xf32>
    %22 = arith.mulf %19, %21 : vector<8x1024xf32>
    %23 = arith.addf %18, %22 : vector<8x1024xf32>
    %c100_i32 = arith.constant 100 : i32
    %24 = tpu.dynamic_rotate %4 by %c100_i32 dim 1 : vector<8x1024xf32>, i32 -> vector<8x1024xf32>
    %c0_9 = arith.constant 0 : index
    %c4 = arith.constant 4 : index
    %25 = vector.load %arg3[%c0_9, %c4] : memref<8x27xf32, #tpu.memory_space<vmem>>, vector<8x1xf32>
    %26 = vector.broadcast %25 : vector<8x1xf32> to vector<8x1024xf32>
    %27 = arith.mulf %24, %26 : vector<8x1024xf32>
    %28 = arith.addf %23, %27 : vector<8x1024xf32>
    %c99_i32 = arith.constant 99 : i32
    %29 = tpu.dynamic_rotate %4 by %c99_i32 dim 1 : vector<8x1024xf32>, i32 -> vector<8x1024xf32>
    %c0_10 = arith.constant 0 : index
    %c5 = arith.constant 5 : index
    %30 = vector.load %arg3[%c0_10, %c5] : memref<8x27xf32, #tpu.memory_space<vmem>>, vector<8x1xf32>
    %31 = vector.broadcast %30 : vector<8x1xf32> to vector<8x1024xf32>
    %32 = arith.mulf %29, %31 : vector<8x1024xf32>
    %33 = arith.addf %28, %32 : vector<8x1024xf32>
    %c91_i32 = arith.constant 91 : i32
    %34 = tpu.dynamic_rotate %4 by %c91_i32 dim 1 : vector<8x1024xf32>, i32 -> vector<8x1024xf32>
    %c0_11 = arith.constant 0 : index
    %c6 = arith.constant 6 : index
    %35 = vector.load %arg3[%c0_11, %c6] : memref<8x27xf32, #tpu.memory_space<vmem>>, vector<8x1xf32>
    %36 = vector.broadcast %35 : vector<8x1xf32> to vector<8x1024xf32>
    %37 = arith.mulf %34, %36 : vector<8x1024xf32>
    %38 = arith.addf %33, %37 : vector<8x1024xf32>
    %c90_i32 = arith.constant 90 : i32
    %39 = tpu.dynamic_rotate %4 by %c90_i32 dim 1 : vector<8x1024xf32>, i32 -> vector<8x1024xf32>
    %c0_12 = arith.constant 0 : index
    %c7 = arith.constant 7 : index
    %40 = vector.load %arg3[%c0_12, %c7] : memref<8x27xf32, #tpu.memory_space<vmem>>, vector<8x1xf32>
    %41 = vector.broadcast %40 : vector<8x1xf32> to vector<8x1024xf32>
    %42 = arith.mulf %39, %41 : vector<8x1024xf32>
    %43 = arith.addf %38, %42 : vector<8x1024xf32>
    %c89_i32 = arith.constant 89 : i32
    %44 = tpu.dynamic_rotate %4 by %c89_i32 dim 1 : vector<8x1024xf32>, i32 -> vector<8x1024xf32>
    %c0_13 = arith.constant 0 : index
    %c8 = arith.constant 8 : index
    %45 = vector.load %arg3[%c0_13, %c8] : memref<8x27xf32, #tpu.memory_space<vmem>>, vector<8x1xf32>
    %46 = vector.broadcast %45 : vector<8x1xf32> to vector<8x1024xf32>
    %47 = arith.mulf %44, %46 : vector<8x1024xf32>
    %48 = arith.addf %43, %47 : vector<8x1024xf32>
    %c11_i32 = arith.constant 11 : i32
    %49 = tpu.dynamic_rotate %4 by %c11_i32 dim 1 : vector<8x1024xf32>, i32 -> vector<8x1024xf32>
    %c0_14 = arith.constant 0 : index
    %c9 = arith.constant 9 : index
    %50 = vector.load %arg3[%c0_14, %c9] : memref<8x27xf32, #tpu.memory_space<vmem>>, vector<8x1xf32>
    %51 = vector.broadcast %50 : vector<8x1xf32> to vector<8x1024xf32>
    %52 = arith.mulf %49, %51 : vector<8x1024xf32>
    %53 = arith.addf %48, %52 : vector<8x1024xf32>
    %c10_i32 = arith.constant 10 : i32
    %54 = tpu.dynamic_rotate %4 by %c10_i32 dim 1 : vector<8x1024xf32>, i32 -> vector<8x1024xf32>
    %c0_15 = arith.constant 0 : index
    %c10 = arith.constant 10 : index
    %55 = vector.load %arg3[%c0_15, %c10] : memref<8x27xf32, #tpu.memory_space<vmem>>, vector<8x1xf32>
    %56 = vector.broadcast %55 : vector<8x1xf32> to vector<8x1024xf32>
    %57 = arith.mulf %54, %56 : vector<8x1024xf32>
    %58 = arith.addf %53, %57 : vector<8x1024xf32>
    %c9_i32 = arith.constant 9 : i32
    %59 = tpu.dynamic_rotate %4 by %c9_i32 dim 1 : vector<8x1024xf32>, i32 -> vector<8x1024xf32>
    %c0_16 = arith.constant 0 : index
    %c11 = arith.constant 11 : index
    %60 = vector.load %arg3[%c0_16, %c11] : memref<8x27xf32, #tpu.memory_space<vmem>>, vector<8x1xf32>
    %61 = vector.broadcast %60 : vector<8x1xf32> to vector<8x1024xf32>
    %62 = arith.mulf %59, %61 : vector<8x1024xf32>
    %63 = arith.addf %58, %62 : vector<8x1024xf32>
    %c1_i32 = arith.constant 1 : i32
    %64 = tpu.dynamic_rotate %4 by %c1_i32 dim 1 : vector<8x1024xf32>, i32 -> vector<8x1024xf32>
    %c0_17 = arith.constant 0 : index
    %c12 = arith.constant 12 : index
    %65 = vector.load %arg3[%c0_17, %c12] : memref<8x27xf32, #tpu.memory_space<vmem>>, vector<8x1xf32>
    %66 = vector.broadcast %65 : vector<8x1xf32> to vector<8x1024xf32>
    %67 = arith.mulf %64, %66 : vector<8x1024xf32>
    %68 = arith.addf %63, %67 : vector<8x1024xf32>
    %c0_18 = arith.constant 0 : index
    %c13 = arith.constant 13 : index
    %69 = vector.load %arg3[%c0_18, %c13] : memref<8x27xf32, #tpu.memory_space<vmem>>, vector<8x1xf32>
    %70 = vector.broadcast %69 : vector<8x1xf32> to vector<8x1024xf32>
    %71 = arith.mulf %4, %70 : vector<8x1024xf32>
    %72 = arith.addf %68, %71 : vector<8x1024xf32>
    %c1023_i32 = arith.constant 1023 : i32
    %73 = tpu.dynamic_rotate %4 by %c1023_i32 dim 1 : vector<8x1024xf32>, i32 -> vector<8x1024xf32>
    %c0_19 = arith.constant 0 : index
    %c14 = arith.constant 14 : index
    %74 = vector.load %arg3[%c0_19, %c14] : memref<8x27xf32, #tpu.memory_space<vmem>>, vector<8x1xf32>
    %75 = vector.broadcast %74 : vector<8x1xf32> to vector<8x1024xf32>
    %76 = arith.mulf %73, %75 : vector<8x1024xf32>
    %77 = arith.addf %72, %76 : vector<8x1024xf32>
    %c1015_i32 = arith.constant 1015 : i32
    %78 = tpu.dynamic_rotate %4 by %c1015_i32 dim 1 : vector<8x1024xf32>, i32 -> vector<8x1024xf32>
    %c0_20 = arith.constant 0 : index
    %c15 = arith.constant 15 : index
    %79 = vector.load %arg3[%c0_20, %c15] : memref<8x27xf32, #tpu.memory_space<vmem>>, vector<8x1xf32>
    %80 = vector.broadcast %79 : vector<8x1xf32> to vector<8x1024xf32>
    %81 = arith.mulf %78, %80 : vector<8x1024xf32>
    %82 = arith.addf %77, %81 : vector<8x1024xf32>
    %c1014_i32 = arith.constant 1014 : i32
    %83 = tpu.dynamic_rotate %4 by %c1014_i32 dim 1 : vector<8x1024xf32>, i32 -> vector<8x1024xf32>
    %c0_21 = arith.constant 0 : index
    %c16 = arith.constant 16 : index
    %84 = vector.load %arg3[%c0_21, %c16] : memref<8x27xf32, #tpu.memory_space<vmem>>, vector<8x1xf32>
    %85 = vector.broadcast %84 : vector<8x1xf32> to vector<8x1024xf32>
    %86 = arith.mulf %83, %85 : vector<8x1024xf32>
    %87 = arith.addf %82, %86 : vector<8x1024xf32>
    %c1013_i32 = arith.constant 1013 : i32
    %88 = tpu.dynamic_rotate %4 by %c1013_i32 dim 1 : vector<8x1024xf32>, i32 -> vector<8x1024xf32>
    %c0_22 = arith.constant 0 : index
    %c17 = arith.constant 17 : index
    %89 = vector.load %arg3[%c0_22, %c17] : memref<8x27xf32, #tpu.memory_space<vmem>>, vector<8x1xf32>
    %90 = vector.broadcast %89 : vector<8x1xf32> to vector<8x1024xf32>
    %91 = arith.mulf %88, %90 : vector<8x1024xf32>
    %92 = arith.addf %87, %91 : vector<8x1024xf32>
    %c935_i32 = arith.constant 935 : i32
    %93 = tpu.dynamic_rotate %4 by %c935_i32 dim 1 : vector<8x1024xf32>, i32 -> vector<8x1024xf32>
    %c0_23 = arith.constant 0 : index
    %c18 = arith.constant 18 : index
    %94 = vector.load %arg3[%c0_23, %c18] : memref<8x27xf32, #tpu.memory_space<vmem>>, vector<8x1xf32>
    %95 = vector.broadcast %94 : vector<8x1xf32> to vector<8x1024xf32>
    %96 = arith.mulf %93, %95 : vector<8x1024xf32>
    %97 = arith.addf %92, %96 : vector<8x1024xf32>
    %c934_i32 = arith.constant 934 : i32
    %98 = tpu.dynamic_rotate %4 by %c934_i32 dim 1 : vector<8x1024xf32>, i32 -> vector<8x1024xf32>
    %c0_24 = arith.constant 0 : index
    %c19 = arith.constant 19 : index
    %99 = vector.load %arg3[%c0_24, %c19] : memref<8x27xf32, #tpu.memory_space<vmem>>, vector<8x1xf32>
    %100 = vector.broadcast %99 : vector<8x1xf32> to vector<8x1024xf32>
    %101 = arith.mulf %98, %100 : vector<8x1024xf32>
    %102 = arith.addf %97, %101 : vector<8x1024xf32>
    %c933_i32 = arith.constant 933 : i32
    %103 = tpu.dynamic_rotate %4 by %c933_i32 dim 1 : vector<8x1024xf32>, i32 -> vector<8x1024xf32>
    %c0_25 = arith.constant 0 : index
    %c20 = arith.constant 20 : index
    %104 = vector.load %arg3[%c0_25, %c20] : memref<8x27xf32, #tpu.memory_space<vmem>>, vector<8x1xf32>
    %105 = vector.broadcast %104 : vector<8x1xf32> to vector<8x1024xf32>
    %106 = arith.mulf %103, %105 : vector<8x1024xf32>
    %107 = arith.addf %102, %106 : vector<8x1024xf32>
    %c925_i32 = arith.constant 925 : i32
    %108 = tpu.dynamic_rotate %4 by %c925_i32 dim 1 : vector<8x1024xf32>, i32 -> vector<8x1024xf32>
    %c0_26 = arith.constant 0 : index
    %c21 = arith.constant 21 : index
    %109 = vector.load %arg3[%c0_26, %c21] : memref<8x27xf32, #tpu.memory_space<vmem>>, vector<8x1xf32>
    %110 = vector.broadcast %109 : vector<8x1xf32> to vector<8x1024xf32>
    %111 = arith.mulf %108, %110 : vector<8x1024xf32>
    %112 = arith.addf %107, %111 : vector<8x1024xf32>
    %c924_i32 = arith.constant 924 : i32
    %113 = tpu.dynamic_rotate %4 by %c924_i32 dim 1 : vector<8x1024xf32>, i32 -> vector<8x1024xf32>
    %c0_27 = arith.constant 0 : index
    %c22 = arith.constant 22 : index
    %114 = vector.load %arg3[%c0_27, %c22] : memref<8x27xf32, #tpu.memory_space<vmem>>, vector<8x1xf32>
    %115 = vector.broadcast %114 : vector<8x1xf32> to vector<8x1024xf32>
    %116 = arith.mulf %113, %115 : vector<8x1024xf32>
    %117 = arith.addf %112, %116 : vector<8x1024xf32>
    %c923_i32 = arith.constant 923 : i32
    %118 = tpu.dynamic_rotate %4 by %c923_i32 dim 1 : vector<8x1024xf32>, i32 -> vector<8x1024xf32>
    %c0_28 = arith.constant 0 : index
    %c23 = arith.constant 23 : index
    %119 = vector.load %arg3[%c0_28, %c23] : memref<8x27xf32, #tpu.memory_space<vmem>>, vector<8x1xf32>
    %120 = vector.broadcast %119 : vector<8x1xf32> to vector<8x1024xf32>
    %121 = arith.mulf %118, %120 : vector<8x1024xf32>
    %122 = arith.addf %117, %121 : vector<8x1024xf32>
    %c915_i32 = arith.constant 915 : i32
    %123 = tpu.dynamic_rotate %4 by %c915_i32 dim 1 : vector<8x1024xf32>, i32 -> vector<8x1024xf32>
    %c0_29 = arith.constant 0 : index
    %c24 = arith.constant 24 : index
    %124 = vector.load %arg3[%c0_29, %c24] : memref<8x27xf32, #tpu.memory_space<vmem>>, vector<8x1xf32>
    %125 = vector.broadcast %124 : vector<8x1xf32> to vector<8x1024xf32>
    %126 = arith.mulf %123, %125 : vector<8x1024xf32>
    %127 = arith.addf %122, %126 : vector<8x1024xf32>
    %c914_i32 = arith.constant 914 : i32
    %128 = tpu.dynamic_rotate %4 by %c914_i32 dim 1 : vector<8x1024xf32>, i32 -> vector<8x1024xf32>
    %c0_30 = arith.constant 0 : index
    %c25 = arith.constant 25 : index
    %129 = vector.load %arg3[%c0_30, %c25] : memref<8x27xf32, #tpu.memory_space<vmem>>, vector<8x1xf32>
    %130 = vector.broadcast %129 : vector<8x1xf32> to vector<8x1024xf32>
    %131 = arith.mulf %128, %130 : vector<8x1024xf32>
    %132 = arith.addf %127, %131 : vector<8x1024xf32>
    %c913_i32 = arith.constant 913 : i32
    %133 = tpu.dynamic_rotate %4 by %c913_i32 dim 1 : vector<8x1024xf32>, i32 -> vector<8x1024xf32>
    %c0_31 = arith.constant 0 : index
    %c26 = arith.constant 26 : index
    %134 = vector.load %arg3[%c0_31, %c26] : memref<8x27xf32, #tpu.memory_space<vmem>>, vector<8x1xf32>
    %135 = vector.broadcast %134 : vector<8x1xf32> to vector<8x1024xf32>
    %136 = arith.mulf %133, %135 : vector<8x1024xf32>
    %137 = arith.addf %132, %136 : vector<8x1024xf32>
    %c0_32 = arith.constant 0 : index
    %c0_33 = arith.constant 0 : index
    %138 = vector.load %arg4[%c0_32, %c0_33] : memref<8x8xbf16, #tpu.memory_space<vmem>>, vector<8x8xbf16>
    %139 = arith.truncf %137 : vector<8x1024xf32> to vector<8x1024xbf16>
    %cst_34 = arith.constant dense<0.000000e+00> : vector<8x1024xf32>
    %140 = tpu.matmul %138, %139, %cst_34 {dimension_numbers = #tpu.dot_dimension_numbers<[1], [0], [0], [1], [0, 0, 1, 1], [], []>} : vector<8x8xbf16>, vector<8x1024xbf16>, vector<8x1024xf32> -> vector<8x1024xf32>
    %c0_35 = arith.constant 0 : index
    %c0_36 = arith.constant 0 : index
    %141 = vector.load %arg8[%c0_35, %c0_36] : memref<8x3xf32, #tpu.memory_space<vmem>>, vector<8x1xf32>
    %142 = vector.broadcast %141 : vector<8x1xf32> to vector<8x1024xf32>
    %143 = arith.addf %140, %142 : vector<8x1024xf32>
    %144 = vector.broadcast %2 : vector<1x1024xf32> to vector<8x1024xf32>
    %145 = arith.mulf %143, %144 : vector<8x1024xf32>
    %cst_37 = arith.constant 0.000000e+00 : f32
    %146 = vector.broadcast %cst_37 : f32 to vector<8x1024xf32>
    %147 = arith.maximumf %145, %146 : vector<8x1024xf32>
    %c111_i32_38 = arith.constant 111 : i32
    %148 = tpu.dynamic_rotate %147 by %c111_i32_38 dim 1 : vector<8x1024xf32>, i32 -> vector<8x1024xf32>
    %c0_39 = arith.constant 0 : index
    %c0_40 = arith.constant 0 : index
    %149 = vector.load %arg5[%c0_39, %c0_40] : memref<8x27xf32, #tpu.memory_space<vmem>>, vector<8x1xf32>
    %150 = vector.broadcast %149 : vector<8x1xf32> to vector<8x1024xf32>
    %151 = arith.mulf %148, %150 : vector<8x1024xf32>
    %c110_i32_41 = arith.constant 110 : i32
    %152 = tpu.dynamic_rotate %147 by %c110_i32_41 dim 1 : vector<8x1024xf32>, i32 -> vector<8x1024xf32>
    %c0_42 = arith.constant 0 : index
    %c1_43 = arith.constant 1 : index
    %153 = vector.load %arg5[%c0_42, %c1_43] : memref<8x27xf32, #tpu.memory_space<vmem>>, vector<8x1xf32>
    %154 = vector.broadcast %153 : vector<8x1xf32> to vector<8x1024xf32>
    %155 = arith.mulf %152, %154 : vector<8x1024xf32>
    %156 = arith.addf %151, %155 : vector<8x1024xf32>
    %c109_i32_44 = arith.constant 109 : i32
    %157 = tpu.dynamic_rotate %147 by %c109_i32_44 dim 1 : vector<8x1024xf32>, i32 -> vector<8x1024xf32>
    %c0_45 = arith.constant 0 : index
    %c2_46 = arith.constant 2 : index
    %158 = vector.load %arg5[%c0_45, %c2_46] : memref<8x27xf32, #tpu.memory_space<vmem>>, vector<8x1xf32>
    %159 = vector.broadcast %158 : vector<8x1xf32> to vector<8x1024xf32>
    %160 = arith.mulf %157, %159 : vector<8x1024xf32>
    %161 = arith.addf %156, %160 : vector<8x1024xf32>
    %c101_i32_47 = arith.constant 101 : i32
    %162 = tpu.dynamic_rotate %147 by %c101_i32_47 dim 1 : vector<8x1024xf32>, i32 -> vector<8x1024xf32>
    %c0_48 = arith.constant 0 : index
    %c3_49 = arith.constant 3 : index
    %163 = vector.load %arg5[%c0_48, %c3_49] : memref<8x27xf32, #tpu.memory_space<vmem>>, vector<8x1xf32>
    %164 = vector.broadcast %163 : vector<8x1xf32> to vector<8x1024xf32>
    %165 = arith.mulf %162, %164 : vector<8x1024xf32>
    %166 = arith.addf %161, %165 : vector<8x1024xf32>
    %c100_i32_50 = arith.constant 100 : i32
    %167 = tpu.dynamic_rotate %147 by %c100_i32_50 dim 1 : vector<8x1024xf32>, i32 -> vector<8x1024xf32>
    %c0_51 = arith.constant 0 : index
    %c4_52 = arith.constant 4 : index
    %168 = vector.load %arg5[%c0_51, %c4_52] : memref<8x27xf32, #tpu.memory_space<vmem>>, vector<8x1xf32>
    %169 = vector.broadcast %168 : vector<8x1xf32> to vector<8x1024xf32>
    %170 = arith.mulf %167, %169 : vector<8x1024xf32>
    %171 = arith.addf %166, %170 : vector<8x1024xf32>
    %c99_i32_53 = arith.constant 99 : i32
    %172 = tpu.dynamic_rotate %147 by %c99_i32_53 dim 1 : vector<8x1024xf32>, i32 -> vector<8x1024xf32>
    %c0_54 = arith.constant 0 : index
    %c5_55 = arith.constant 5 : index
    %173 = vector.load %arg5[%c0_54, %c5_55] : memref<8x27xf32, #tpu.memory_space<vmem>>, vector<8x1xf32>
    %174 = vector.broadcast %173 : vector<8x1xf32> to vector<8x1024xf32>
    %175 = arith.mulf %172, %174 : vector<8x1024xf32>
    %176 = arith.addf %171, %175 : vector<8x1024xf32>
    %c91_i32_56 = arith.constant 91 : i32
    %177 = tpu.dynamic_rotate %147 by %c91_i32_56 dim 1 : vector<8x1024xf32>, i32 -> vector<8x1024xf32>
    %c0_57 = arith.constant 0 : index
    %c6_58 = arith.constant 6 : index
    %178 = vector.load %arg5[%c0_57, %c6_58] : memref<8x27xf32, #tpu.memory_space<vmem>>, vector<8x1xf32>
    %179 = vector.broadcast %178 : vector<8x1xf32> to vector<8x1024xf32>
    %180 = arith.mulf %177, %179 : vector<8x1024xf32>
    %181 = arith.addf %176, %180 : vector<8x1024xf32>
    %c90_i32_59 = arith.constant 90 : i32
    %182 = tpu.dynamic_rotate %147 by %c90_i32_59 dim 1 : vector<8x1024xf32>, i32 -> vector<8x1024xf32>
    %c0_60 = arith.constant 0 : index
    %c7_61 = arith.constant 7 : index
    %183 = vector.load %arg5[%c0_60, %c7_61] : memref<8x27xf32, #tpu.memory_space<vmem>>, vector<8x1xf32>
    %184 = vector.broadcast %183 : vector<8x1xf32> to vector<8x1024xf32>
    %185 = arith.mulf %182, %184 : vector<8x1024xf32>
    %186 = arith.addf %181, %185 : vector<8x1024xf32>
    %c89_i32_62 = arith.constant 89 : i32
    %187 = tpu.dynamic_rotate %147 by %c89_i32_62 dim 1 : vector<8x1024xf32>, i32 -> vector<8x1024xf32>
    %c0_63 = arith.constant 0 : index
    %c8_64 = arith.constant 8 : index
    %188 = vector.load %arg5[%c0_63, %c8_64] : memref<8x27xf32, #tpu.memory_space<vmem>>, vector<8x1xf32>
    %189 = vector.broadcast %188 : vector<8x1xf32> to vector<8x1024xf32>
    %190 = arith.mulf %187, %189 : vector<8x1024xf32>
    %191 = arith.addf %186, %190 : vector<8x1024xf32>
    %c11_i32_65 = arith.constant 11 : i32
    %192 = tpu.dynamic_rotate %147 by %c11_i32_65 dim 1 : vector<8x1024xf32>, i32 -> vector<8x1024xf32>
    %c0_66 = arith.constant 0 : index
    %c9_67 = arith.constant 9 : index
    %193 = vector.load %arg5[%c0_66, %c9_67] : memref<8x27xf32, #tpu.memory_space<vmem>>, vector<8x1xf32>
    %194 = vector.broadcast %193 : vector<8x1xf32> to vector<8x1024xf32>
    %195 = arith.mulf %192, %194 : vector<8x1024xf32>
    %196 = arith.addf %191, %195 : vector<8x1024xf32>
    %c10_i32_68 = arith.constant 10 : i32
    %197 = tpu.dynamic_rotate %147 by %c10_i32_68 dim 1 : vector<8x1024xf32>, i32 -> vector<8x1024xf32>
    %c0_69 = arith.constant 0 : index
    %c10_70 = arith.constant 10 : index
    %198 = vector.load %arg5[%c0_69, %c10_70] : memref<8x27xf32, #tpu.memory_space<vmem>>, vector<8x1xf32>
    %199 = vector.broadcast %198 : vector<8x1xf32> to vector<8x1024xf32>
    %200 = arith.mulf %197, %199 : vector<8x1024xf32>
    %201 = arith.addf %196, %200 : vector<8x1024xf32>
    %c9_i32_71 = arith.constant 9 : i32
    %202 = tpu.dynamic_rotate %147 by %c9_i32_71 dim 1 : vector<8x1024xf32>, i32 -> vector<8x1024xf32>
    %c0_72 = arith.constant 0 : index
    %c11_73 = arith.constant 11 : index
    %203 = vector.load %arg5[%c0_72, %c11_73] : memref<8x27xf32, #tpu.memory_space<vmem>>, vector<8x1xf32>
    %204 = vector.broadcast %203 : vector<8x1xf32> to vector<8x1024xf32>
    %205 = arith.mulf %202, %204 : vector<8x1024xf32>
    %206 = arith.addf %201, %205 : vector<8x1024xf32>
    %c1_i32_74 = arith.constant 1 : i32
    %207 = tpu.dynamic_rotate %147 by %c1_i32_74 dim 1 : vector<8x1024xf32>, i32 -> vector<8x1024xf32>
    %c0_75 = arith.constant 0 : index
    %c12_76 = arith.constant 12 : index
    %208 = vector.load %arg5[%c0_75, %c12_76] : memref<8x27xf32, #tpu.memory_space<vmem>>, vector<8x1xf32>
    %209 = vector.broadcast %208 : vector<8x1xf32> to vector<8x1024xf32>
    %210 = arith.mulf %207, %209 : vector<8x1024xf32>
    %211 = arith.addf %206, %210 : vector<8x1024xf32>
    %c0_77 = arith.constant 0 : index
    %c13_78 = arith.constant 13 : index
    %212 = vector.load %arg5[%c0_77, %c13_78] : memref<8x27xf32, #tpu.memory_space<vmem>>, vector<8x1xf32>
    %213 = vector.broadcast %212 : vector<8x1xf32> to vector<8x1024xf32>
    %214 = arith.mulf %147, %213 : vector<8x1024xf32>
    %215 = arith.addf %211, %214 : vector<8x1024xf32>
    %c1023_i32_79 = arith.constant 1023 : i32
    %216 = tpu.dynamic_rotate %147 by %c1023_i32_79 dim 1 : vector<8x1024xf32>, i32 -> vector<8x1024xf32>
    %c0_80 = arith.constant 0 : index
    %c14_81 = arith.constant 14 : index
    %217 = vector.load %arg5[%c0_80, %c14_81] : memref<8x27xf32, #tpu.memory_space<vmem>>, vector<8x1xf32>
    %218 = vector.broadcast %217 : vector<8x1xf32> to vector<8x1024xf32>
    %219 = arith.mulf %216, %218 : vector<8x1024xf32>
    %220 = arith.addf %215, %219 : vector<8x1024xf32>
    %c1015_i32_82 = arith.constant 1015 : i32
    %221 = tpu.dynamic_rotate %147 by %c1015_i32_82 dim 1 : vector<8x1024xf32>, i32 -> vector<8x1024xf32>
    %c0_83 = arith.constant 0 : index
    %c15_84 = arith.constant 15 : index
    %222 = vector.load %arg5[%c0_83, %c15_84] : memref<8x27xf32, #tpu.memory_space<vmem>>, vector<8x1xf32>
    %223 = vector.broadcast %222 : vector<8x1xf32> to vector<8x1024xf32>
    %224 = arith.mulf %221, %223 : vector<8x1024xf32>
    %225 = arith.addf %220, %224 : vector<8x1024xf32>
    %c1014_i32_85 = arith.constant 1014 : i32
    %226 = tpu.dynamic_rotate %147 by %c1014_i32_85 dim 1 : vector<8x1024xf32>, i32 -> vector<8x1024xf32>
    %c0_86 = arith.constant 0 : index
    %c16_87 = arith.constant 16 : index
    %227 = vector.load %arg5[%c0_86, %c16_87] : memref<8x27xf32, #tpu.memory_space<vmem>>, vector<8x1xf32>
    %228 = vector.broadcast %227 : vector<8x1xf32> to vector<8x1024xf32>
    %229 = arith.mulf %226, %228 : vector<8x1024xf32>
    %230 = arith.addf %225, %229 : vector<8x1024xf32>
    %c1013_i32_88 = arith.constant 1013 : i32
    %231 = tpu.dynamic_rotate %147 by %c1013_i32_88 dim 1 : vector<8x1024xf32>, i32 -> vector<8x1024xf32>
    %c0_89 = arith.constant 0 : index
    %c17_90 = arith.constant 17 : index
    %232 = vector.load %arg5[%c0_89, %c17_90] : memref<8x27xf32, #tpu.memory_space<vmem>>, vector<8x1xf32>
    %233 = vector.broadcast %232 : vector<8x1xf32> to vector<8x1024xf32>
    %234 = arith.mulf %231, %233 : vector<8x1024xf32>
    %235 = arith.addf %230, %234 : vector<8x1024xf32>
    %c935_i32_91 = arith.constant 935 : i32
    %236 = tpu.dynamic_rotate %147 by %c935_i32_91 dim 1 : vector<8x1024xf32>, i32 -> vector<8x1024xf32>
    %c0_92 = arith.constant 0 : index
    %c18_93 = arith.constant 18 : index
    %237 = vector.load %arg5[%c0_92, %c18_93] : memref<8x27xf32, #tpu.memory_space<vmem>>, vector<8x1xf32>
    %238 = vector.broadcast %237 : vector<8x1xf32> to vector<8x1024xf32>
    %239 = arith.mulf %236, %238 : vector<8x1024xf32>
    %240 = arith.addf %235, %239 : vector<8x1024xf32>
    %c934_i32_94 = arith.constant 934 : i32
    %241 = tpu.dynamic_rotate %147 by %c934_i32_94 dim 1 : vector<8x1024xf32>, i32 -> vector<8x1024xf32>
    %c0_95 = arith.constant 0 : index
    %c19_96 = arith.constant 19 : index
    %242 = vector.load %arg5[%c0_95, %c19_96] : memref<8x27xf32, #tpu.memory_space<vmem>>, vector<8x1xf32>
    %243 = vector.broadcast %242 : vector<8x1xf32> to vector<8x1024xf32>
    %244 = arith.mulf %241, %243 : vector<8x1024xf32>
    %245 = arith.addf %240, %244 : vector<8x1024xf32>
    %c933_i32_97 = arith.constant 933 : i32
    %246 = tpu.dynamic_rotate %147 by %c933_i32_97 dim 1 : vector<8x1024xf32>, i32 -> vector<8x1024xf32>
    %c0_98 = arith.constant 0 : index
    %c20_99 = arith.constant 20 : index
    %247 = vector.load %arg5[%c0_98, %c20_99] : memref<8x27xf32, #tpu.memory_space<vmem>>, vector<8x1xf32>
    %248 = vector.broadcast %247 : vector<8x1xf32> to vector<8x1024xf32>
    %249 = arith.mulf %246, %248 : vector<8x1024xf32>
    %250 = arith.addf %245, %249 : vector<8x1024xf32>
    %c925_i32_100 = arith.constant 925 : i32
    %251 = tpu.dynamic_rotate %147 by %c925_i32_100 dim 1 : vector<8x1024xf32>, i32 -> vector<8x1024xf32>
    %c0_101 = arith.constant 0 : index
    %c21_102 = arith.constant 21 : index
    %252 = vector.load %arg5[%c0_101, %c21_102] : memref<8x27xf32, #tpu.memory_space<vmem>>, vector<8x1xf32>
    %253 = vector.broadcast %252 : vector<8x1xf32> to vector<8x1024xf32>
    %254 = arith.mulf %251, %253 : vector<8x1024xf32>
    %255 = arith.addf %250, %254 : vector<8x1024xf32>
    %c924_i32_103 = arith.constant 924 : i32
    %256 = tpu.dynamic_rotate %147 by %c924_i32_103 dim 1 : vector<8x1024xf32>, i32 -> vector<8x1024xf32>
    %c0_104 = arith.constant 0 : index
    %c22_105 = arith.constant 22 : index
    %257 = vector.load %arg5[%c0_104, %c22_105] : memref<8x27xf32, #tpu.memory_space<vmem>>, vector<8x1xf32>
    %258 = vector.broadcast %257 : vector<8x1xf32> to vector<8x1024xf32>
    %259 = arith.mulf %256, %258 : vector<8x1024xf32>
    %260 = arith.addf %255, %259 : vector<8x1024xf32>
    %c923_i32_106 = arith.constant 923 : i32
    %261 = tpu.dynamic_rotate %147 by %c923_i32_106 dim 1 : vector<8x1024xf32>, i32 -> vector<8x1024xf32>
    %c0_107 = arith.constant 0 : index
    %c23_108 = arith.constant 23 : index
    %262 = vector.load %arg5[%c0_107, %c23_108] : memref<8x27xf32, #tpu.memory_space<vmem>>, vector<8x1xf32>
    %263 = vector.broadcast %262 : vector<8x1xf32> to vector<8x1024xf32>
    %264 = arith.mulf %261, %263 : vector<8x1024xf32>
    %265 = arith.addf %260, %264 : vector<8x1024xf32>
    %c915_i32_109 = arith.constant 915 : i32
    %266 = tpu.dynamic_rotate %147 by %c915_i32_109 dim 1 : vector<8x1024xf32>, i32 -> vector<8x1024xf32>
    %c0_110 = arith.constant 0 : index
    %c24_111 = arith.constant 24 : index
    %267 = vector.load %arg5[%c0_110, %c24_111] : memref<8x27xf32, #tpu.memory_space<vmem>>, vector<8x1xf32>
    %268 = vector.broadcast %267 : vector<8x1xf32> to vector<8x1024xf32>
    %269 = arith.mulf %266, %268 : vector<8x1024xf32>
    %270 = arith.addf %265, %269 : vector<8x1024xf32>
    %c914_i32_112 = arith.constant 914 : i32
    %271 = tpu.dynamic_rotate %147 by %c914_i32_112 dim 1 : vector<8x1024xf32>, i32 -> vector<8x1024xf32>
    %c0_113 = arith.constant 0 : index
    %c25_114 = arith.constant 25 : index
    %272 = vector.load %arg5[%c0_113, %c25_114] : memref<8x27xf32, #tpu.memory_space<vmem>>, vector<8x1xf32>
    %273 = vector.broadcast %272 : vector<8x1xf32> to vector<8x1024xf32>
    %274 = arith.mulf %271, %273 : vector<8x1024xf32>
    %275 = arith.addf %270, %274 : vector<8x1024xf32>
    %c913_i32_115 = arith.constant 913 : i32
    %276 = tpu.dynamic_rotate %147 by %c913_i32_115 dim 1 : vector<8x1024xf32>, i32 -> vector<8x1024xf32>
    %c0_116 = arith.constant 0 : index
    %c26_117 = arith.constant 26 : index
    %277 = vector.load %arg5[%c0_116, %c26_117] : memref<8x27xf32, #tpu.memory_space<vmem>>, vector<8x1xf32>
    %278 = vector.broadcast %277 : vector<8x1xf32> to vector<8x1024xf32>
    %279 = arith.mulf %276, %278 : vector<8x1024xf32>
    %280 = arith.addf %275, %279 : vector<8x1024xf32>
    %c0_118 = arith.constant 0 : index
    %c0_119 = arith.constant 0 : index
    %281 = vector.load %arg6[%c0_118, %c0_119] : memref<8x8xbf16, #tpu.memory_space<vmem>>, vector<8x8xbf16>
    %282 = arith.truncf %280 : vector<8x1024xf32> to vector<8x1024xbf16>
    %cst_120 = arith.constant dense<0.000000e+00> : vector<8x1024xf32>
    %283 = tpu.matmul %281, %282, %cst_120 {dimension_numbers = #tpu.dot_dimension_numbers<[1], [0], [0], [1], [0, 0, 1, 1], [], []>} : vector<8x8xbf16>, vector<8x1024xbf16>, vector<8x1024xf32> -> vector<8x1024xf32>
    %c0_121 = arith.constant 0 : index
    %c1_122 = arith.constant 1 : index
    %284 = vector.load %arg8[%c0_121, %c1_122] : memref<8x3xf32, #tpu.memory_space<vmem>>, vector<8x1xf32>
    %285 = vector.broadcast %284 : vector<8x1xf32> to vector<8x1024xf32>
    %286 = arith.addf %283, %285 : vector<8x1024xf32>
    %c0_123 = arith.constant 0 : index
    %c0_124 = arith.constant 0 : index
    %287 = vector.load %arg7[%c0_123, %c0_124] : memref<8x8xbf16, #tpu.memory_space<vmem>>, vector<8x8xbf16>
    %288 = arith.truncf %1 : vector<8x1024xf32> to vector<8x1024xbf16>
    %cst_125 = arith.constant dense<0.000000e+00> : vector<8x1024xf32>
    %289 = tpu.matmul %287, %288, %cst_125 {dimension_numbers = #tpu.dot_dimension_numbers<[1], [0], [0], [1], [0, 0, 1, 1], [], []>} : vector<8x8xbf16>, vector<8x1024xbf16>, vector<8x1024xf32> -> vector<8x1024xf32>
    %c0_126 = arith.constant 0 : index
    %c2_127 = arith.constant 2 : index
    %290 = vector.load %arg8[%c0_126, %c2_127] : memref<8x3xf32, #tpu.memory_space<vmem>>, vector<8x1xf32>
    %291 = vector.broadcast %290 : vector<8x1xf32> to vector<8x1024xf32>
    %292 = arith.addf %289, %291 : vector<8x1024xf32>
    %293 = arith.addf %286, %292 : vector<8x1024xf32>
    %c0_128 = arith.constant 0 : index
    %c0_129 = arith.constant 0 : index
    %c0_130 = arith.constant 0 : index
    %294 = vector.load %arg9[%c0_128, %c0_129, %c0_130] : memref<1x8x1024xf32, #tpu.memory_space<vmem>>, vector<1x8x1024xf32>
    %295 = vector.shape_cast %294 : vector<1x8x1024xf32> to vector<8x1024xf32>
    %296 = vector.shape_cast %293 : vector<8x1024xf32> to vector<1x8x1024xf32>
    tpu.vector_store %arg9[%c0_128, %c0_129, %c0_130], %296 {strides = array<i32>} : memref<1x8x1024xf32, #tpu.memory_space<vmem>>, vector<1x8x1024xf32>,
    return
  }
  func.func @transform_0(%arg0: i32) -> (i32, i32, i32) {
    %c0_i32 = arith.constant 0 : i32
    %c0_i32_0 = arith.constant 0 : i32
    %c0_i32_1 = arith.constant 0 : i32
    return %arg0, %c0_i32, %c0_i32_0 : i32, i32, i32
  }
  func.func @transform_1(%arg0: i32) -> (i32, i32) {
    %c0_i32 = arith.constant 0 : i32
    %c0_i32_0 = arith.constant 0 : i32
    %c0_i32_1 = arith.constant 0 : i32
    return %c0_i32, %c0_i32_0 : i32, i32
  }
  func.func @transform_2(%arg0: i32) -> (i32, i32) {
    %c0_i32 = arith.constant 0 : i32
    %c0_i32_0 = arith.constant 0 : i32
    %c0_i32_1 = arith.constant 0 : i32
    return %c0_i32, %c0_i32_0 : i32, i32
  }
  func.func @transform_3(%arg0: i32) -> (i32, i32) {
    %c0_i32 = arith.constant 0 : i32
    %c0_i32_0 = arith.constant 0 : i32
    %c0_i32_1 = arith.constant 0 : i32
    return %c0_i32, %c0_i32_0 : i32, i32
  }
  func.func @transform_4(%arg0: i32) -> (i32, i32) {
    %c0_i32 = arith.constant 0 : i32
    %c0_i32_0 = arith.constant 0 : i32
    %c0_i32_1 = arith.constant 0 : i32
    return %c0_i32, %c0_i32_0 : i32, i32
  }
  func.func @transform_5(%arg0: i32) -> (i32, i32) {
    %c0_i32 = arith.constant 0 : i32
    %c0_i32_0 = arith.constant 0 : i32
    %c0_i32_1 = arith.constant 0 : i32
    return %c0_i32, %c0_i32_0 : i32, i32
  }
  func.func @transform_6(%arg0: i32) -> (i32, i32) {
    %c0_i32 = arith.constant 0 : i32
    %c0_i32_0 = arith.constant 0 : i32
    %c0_i32_1 = arith.constant 0 : i32
    return %c0_i32, %c0_i32_0 : i32, i32
  }
  func.func @transform_7(%arg0: i32) -> (i32, i32) {
    %c0_i32 = arith.constant 0 : i32
    %c0_i32_0 = arith.constant 0 : i32
    %c0_i32_1 = arith.constant 0 : i32
    return %c0_i32, %c0_i32_0 : i32, i32
  }
  func.func @transform_8(%arg0: i32) -> (i32, i32, i32) {
    %c0_i32 = arith.constant 0 : i32
    %c0_i32_0 = arith.constant 0 : i32
    %c0_i32_1 = arith.constant 0 : i32
    return %arg0, %c0_i32, %c0_i32_0 : i32, i32, i32
  }
}

</mosaic_0001>

<llo_original>
// kernel: tpu_custom_call.1
$region0: #{tpu_custom_call.1}
  #allocation0 [shape = 'u32[]', space=smem, size = 0x4, offset = 0x4, fixed_abs, tag = 'smem constant byte address 0x4 - core index']
  #allocation1 [shape = 'u32[72,128]{1,0:T(1,128)}', space=vmem, size = 0x9000, scoped, tag = 'internal scratch']
  %s0 = inlined_call_operand.hbm [shape: f32[2,8,1024], index: 0, kind: input, shape index: {}]
  %s1 = inlined_call_operand.vmem [shape: f32[1,1024], index: 1, kind: input, shape index: {}]
  %s2 = inlined_call_operand.hbm [shape: f32[8,27], index: 2, kind: input, shape index: {}]
  %s3 = inlined_call_operand.vmem [shape: bf16[8,8], index: 3, kind: input, shape index: {}]
  %s4 = inlined_call_operand.hbm [shape: f32[8,27], index: 4, kind: input, shape index: {}]
  %s5 = inlined_call_operand.hbm [shape: bf16[8,8], index: 5, kind: input, shape index: {}]
  %s6 = inlined_call_operand.hbm [shape: bf16[8,8], index: 6, kind: input, shape index: {}]
  %s7 = inlined_call_operand.vmem [shape: f32[8,3], index: 7, kind: input, shape index: {}]
  %s8 = inlined_call_operand.hbm [shape: f32[2,8,1024], index: 8, kind: output, shape index: {}]
  %s9 = sld [smem:[#allocation0]]
  $region85: #{tpu_custom_call.1} parent=0
    _
  %s11 = ssub.s32 1, %s9
  %s12 = scalar_select 0, %s11, %s9
  $region1: #{tpu_custom_call.1} parent=0
    #allocation2 [shape = 'u8[65536]{0}', space=vmem, size = 0x10000, scoped, tag = 'input window, operand 0']
    #allocation3 [shape = 's32[2]{0}', space=sflag, size = 0x8, scoped, tag = 'scoped memory for tpu_custom_call.1']
    #allocation4 [shape = 's32[2]{0}', space=sflag, size = 0x8, scoped, tag = 'scoped memory for tpu_custom_call.1']
    #allocation5 [shape = 'u8[4096]{0}', space=vmem, size = 0x1000, scoped, tag = 'input window, operand 2, single buffered']
    #allocation6 [shape = 's32[1]{0}', space=sflag, size = 0x4, scoped, tag = 'scoped memory for tpu_custom_call.1']
    #allocation7 [shape = 'u8[4096]{0}', space=vmem, size = 0x1000, scoped, tag = 'input window, operand 4, single buffered']
    #allocation8 [shape = 'u8[2048]{0}', space=vmem, size = 0x800, scoped, tag = 'input window, operand 5, single buffered']
    #allocation9 [shape = 's32[1]{0}', space=sflag, size = 0x4, scoped, tag = 'scoped memory for tpu_custom_call.1']
    #allocation10 [shape = 'u8[2048]{0}', space=vmem, size = 0x800, scoped, tag = 'input window, operand 6, single buffered']
    #allocation11 [shape = 'u8[65536]{0}', space=vmem, size = 0x10000, scoped, tag = 'output window, operand 0']
    %13 = vsyncpa [#allocation3], 0
    %s14 = scalar_lea.sflag [#allocation3], 1
    %15 = vsyncpa %s14, 0
    %16 = vsyncpa [#allocation6], 0
    %17 = vsyncpa [#allocation9], 0
    %18 = vsyncpa [#allocation4], 0
    %s19 = scalar_lea.sflag [#allocation4], 1
    %20 = vsyncpa %s19, 0
    loop: start=0, step=1, limit=4
    $region2: #{tpu_custom_call.1} parent=1 // loop_pre_header
      _
    $region3: #{tpu_custom_call.1} parent=1 // loop_header
      %s22 = sphi 0, %s26
      %p23 = scmp.ge.s32.totalorder %s22, 4
      %s32 = sphi 0, %s34
      %s35 = sphi 0, %s32
      %s36 = sphi 0, %s35
      %s52 = sphi 0, %s36
      %s56 = sphi 0, %s56
      %s58 = sphi 0, %s56
      %s59 = sphi 0, %s58
      %s73 = sphi 0, %s59
      %s77 = sphi 0, %s77
      %s79 = sphi 0, %s77
      %s80 = sphi 0, %s79
      %s94 = sphi 0, %s80
      %s98 = sphi 0, %s98
      %s100 = sphi 0, %s98
      %s101 = sphi 0, %s100
      %s115 = sphi 0, %s101
      %s119 = sphi 0, %s119
      %s121 = sphi 0, %s119
      %s122 = sphi 0, %s121
      %s136 = sphi 0, %s122
      %s140 = sphi 0, %s140
      %s142 = sphi 0, %s140
      %s143 = sphi 0, %s142
      %s157 = sphi 0, %s143
      %s161 = sphi 0, %s161
      %s163 = sphi 0, %s161
      %s164 = sphi 0, %s163
      %s178 = sphi 0, %s164
      %s182 = sphi 0, %s182
      %s184 = sphi 0, %s182
      %s185 = sphi 0, %s184
      %s199 = sphi 0, %s185
      %s205 = sphi 0, %s207
      %s208 = sphi 0, %s205
      %s209 = sphi 0, %s208
      %s225 = sphi 0, %s209
    $region4: #{tpu_custom_call.1} parent=1 // loop_header_branch
      %25 = sbr.rel (%p23) target = $region8
    $region5: #{tpu_custom_call.1} parent=1 // loop_body
      %s27 = ssub.s32 %s22, 1
      %s28 = ssub.s32 %s22, 2
      %s29 = sadd.s32 %s22, 1
      %s30 = ssub.s32 %s22, %s29
      %p31 = scmp.eq.s32.totalorder %s30, 0
      %s33 = sadd.s32 %s32, 1
      %s34 = scalar_select %p31, %s32, %s33
      %p37 = pneg %p31
      %p38 = scmp.eq.s32.totalorder %s22, 1
      %p39 = por %p37, %p38
      %p40 = scmp.ne.s32.totalorder %s32, %s35
      %p41 = scmp.eq.s32.totalorder %s22, 0
      %p42 = por %p40, %p41
      %p43 = scmp.ne.s32.totalorder %s32, %s35
      %p44 = scmp.eq.s32.totalorder %s27, 1
      %p45 = por %p43, %p44
      %p46 = scmp.ne.s32.totalorder %s35, %s36
      %p47 = scmp.eq.s32.totalorder %s27, 0
      %p48 = por %p46, %p47
      %p49 = scmp.ne.s32.totalorder %s35, %s36
      %p50 = scmp.eq.s32.totalorder %s28, 1
      %p51 = por %p49, %p50
      %p53 = scmp.ne.s32.totalorder %s36, %s52
      %p54 = scmp.eq.s32.totalorder %s28, 0
      %p55 = por %p53, %p54
      %s57 = sadd.s32 %s56, 1
      %p60 = scmp.eq.s32.totalorder %s22, 1
      %p61 = scmp.ne.s32.totalorder %s56, %s58
      %p62 = scmp.eq.s32.totalorder %s22, 0
      %p63 = por %p61, %p62
      %p64 = scmp.ne.s32.totalorder %s56, %s58
      %p65 = scmp.eq.s32.totalorder %s27, 1
      %p66 = por %p64, %p65
      %p67 = scmp.ne.s32.totalorder %s58, %s59
      %p68 = scmp.eq.s32.totalorder %s27, 0
      %p69 = por %p67, %p68
      %p70 = scmp.ne.s32.totalorder %s58, %s59
      %p71 = scmp.eq.s32.totalorder %s28, 1
      %p72 = por %p70, %p71
      %p74 = scmp.ne.s32.totalorder %s59, %s73
      %p75 = scmp.eq.s32.totalorder %s28, 0
      %p76 = por %p74, %p75
      %s78 = sadd.s32 %s77, 1
      %p81 = scmp.eq.s32.totalorder %s22, 1
      %p82 = scmp.ne.s32.totalorder %s77, %s79
      %p83 = scmp.eq.s32.totalorder %s22, 0
      %p84 = por %p82, %p83
      %p85 = scmp.ne.s32.totalorder %s77, %s79
      %p86 = scmp.eq.s32.totalorder %s27, 1
      %p87 = por %p85, %p86
      %p88 = scmp.ne.s32.totalorder %s79, %s80
      %p89 = scmp.eq.s32.totalorder %s27, 0
      %p90 = por %p88, %p89
      %p91 = scmp.ne.s32.totalorder %s79, %s80
      %p92 = scmp.eq.s32.totalorder %s28, 1
      %p93 = por %p91, %p92
      %p95 = scmp.ne.s32.totalorder %s80, %s94
      %p96 = scmp.eq.s32.totalorder %s28, 0
      %p97 = por %p95, %p96
      %s99 = sadd.s32 %s98, 1
      %p102 = scmp.eq.s32.totalorder %s22, 1
      %p103 = scmp.ne.s32.totalorder %s98, %s100
      %p104 = scmp.eq.s32.totalorder %s22, 0
      %p105 = por %p103, %p104
      %p106 = scmp.ne.s32.totalorder %s98, %s100
      %p107 = scmp.eq.s32.totalorder %s27, 1
      %p108 = por %p106, %p107
      %p109 = scmp.ne.s32.totalorder %s100, %s101
      %p110 = scmp.eq.s32.totalorder %s27, 0
      %p111 = por %p109, %p110
      %p112 = scmp.ne.s32.totalorder %s100, %s101
      %p113 = scmp.eq.s32.totalorder %s28, 1
      %p114 = por %p112, %p113
      %p116 = scmp.ne.s32.totalorder %s101, %s115
      %p117 = scmp.eq.s32.totalorder %s28, 0
      %p118 = por %p116, %p117
      %s120 = sadd.s32 %s119, 1
      %p123 = scmp.eq.s32.totalorder %s22, 1
      %p124 = scmp.ne.s32.totalorder %s119, %s121
      %p125 = scmp.eq.s32.totalorder %s22, 0
      %p126 = por %p124, %p125
      %p127 = scmp.ne.s32.totalorder %s119, %s121
      %p128 = scmp.eq.s32.totalorder %s27, 1
      %p129 = por %p127, %p128
      %p130 = scmp.ne.s32.totalorder %s121, %s122
      %p131 = scmp.eq.s32.totalorder %s27, 0
      %p132 = por %p130, %p131
      %p133 = scmp.ne.s32.totalorder %s121, %s122
      %p134 = scmp.eq.s32.totalorder %s28, 1
      %p135 = por %p133, %p134
      %p137 = scmp.ne.s32.totalorder %s122, %s136
      %p138 = scmp.eq.s32.totalorder %s28, 0
      %p139 = por %p137, %p138
      %s141 = sadd.s32 %s140, 1
      %p144 = scmp.eq.s32.totalorder %s22, 1
      %p145 = scmp.ne.s32.totalorder %s140, %s142
      %p146 = scmp.eq.s32.totalorder %s22, 0
      %p147 = por %p145, %p146
      %p148 = scmp.ne.s32.totalorder %s140, %s142
      %p149 = scmp.eq.s32.totalorder %s27, 1
      %p150 = por %p148, %p149
      %p151 = scmp.ne.s32.totalorder %s142, %s143
      %p152 = scmp.eq.s32.totalorder %s27, 0
      %p153 = por %p151, %p152
      %p154 = scmp.ne.s32.totalorder %s142, %s143
      %p155 = scmp.eq.s32.totalorder %s28, 1
      %p156 = por %p154, %p155
      %p158 = scmp.ne.s32.totalorder %s143, %s157
      %p159 = scmp.eq.s32.totalorder %s28, 0
      %p160 = por %p158, %p159
      %s162 = sadd.s32 %s161, 1
      %p165 = scmp.eq.s32.totalorder %s22, 1
      %p166 = scmp.ne.s32.totalorder %s161, %s163
      %p167 = scmp.eq.s32.totalorder %s22, 0
      %p168 = por %p166, %p167
      %p169 = scmp.ne.s32.totalorder %s161, %s163
      %p170 = scmp.eq.s32.totalorder %s27, 1
      %p171 = por %p169, %p170
      %p172 = scmp.ne.s32.totalorder %s163, %s164
      %p173 = scmp.eq.s32.totalorder %s27, 0
      %p174 = por %p172, %p173
      %p175 = scmp.ne.s32.totalorder %s163, %s164
      %p176 = scmp.eq.s32.totalorder %s28, 1
      %p177 = por %p175, %p176
      %p179 = scmp.ne.s32.totalorder %s164, %s178
      %p180 = scmp.eq.s32.totalorder %s28, 0
      %p181 = por %p179, %p180
      %s183 = sadd.s32 %s182, 1
      %p186 = scmp.eq.s32.totalorder %s22, 1
      %p187 = scmp.ne.s32.totalorder %s182, %s184
      %p188 = scmp.eq.s32.totalorder %s22, 0
      %p189 = por %p187, %p188
      %p190 = scmp.ne.s32.totalorder %s182, %s184
      %p191 = scmp.eq.s32.totalorder %s27, 1
      %p192 = por %p190, %p191
      %p193 = scmp.ne.s32.totalorder %s184, %s185
      %p194 = scmp.eq.s32.totalorder %s27, 0
      %p195 = por %p193, %p194
      %p196 = scmp.ne.s32.totalorder %s184, %s185
      %p197 = scmp.eq.s32.totalorder %s28, 1
      %p198 = por %p196, %p197
      %p200 = scmp.ne.s32.totalorder %s185, %s199
      %p201 = scmp.eq.s32.totalorder %s28, 0
      %p202 = por %p200, %p201
      %s203 = ssub.s32 %s22, %s29
      %p204 = scmp.eq.s32.totalorder %s203, 0
      %s206 = sadd.s32 %s205, 1
      %s207 = scalar_select %p204, %s205, %s206
      %p210 = pneg %p204
      %p211 = scmp.eq.s32.totalorder %s22, 1
      %p212 = por %p210, %p211
      %p213 = scmp.ne.s32.totalorder %s205, %s208
      %p214 = scmp.eq.s32.totalorder %s22, 0
      %p215 = por %p213, %p214
      %p216 = scmp.ne.s32.totalorder %s205, %s208
      %p217 = scmp.eq.s32.totalorder %s27, 1
      %p218 = por %p216, %p217
      %p219 = scmp.ne.s32.totalorder %s208, %s209
      %p220 = scmp.eq.s32.totalorder %s27, 0
      %p221 = por %p219, %p220
      %p222 = scmp.ne.s32.totalorder %s208, %s209
      %p223 = scmp.eq.s32.totalorder %s28, 1
      %p224 = por %p222, %p223
      %p226 = scmp.ne.s32.totalorder %s209, %s225
      %p227 = scmp.eq.s32.totalorder %s28, 0
      %p228 = por %p226, %p227
      %p229 = scmp.le.s32.totalorder 1, %s22
      %p230 = scmp.lt.s32.totalorder %s22, 3
      %p231 = pnand %p229, %p230
      %p232 = pneg %p231
      // Predicated region
      $region9: #{tpu_custom_call.1} parent=5 // pred_check
        _
      $region10: #{tpu_custom_call.1} parent=5 // pred_check_branch
        %234 = sbr.rel (%p231) target = $region12
      $region11: #{tpu_custom_call.1} parent=5 // pred_region
        %s235 = ssub.s32 %s22, 1
        // Predicated region
        $region13: #{tpu_custom_call.1} parent=11 // pred_check
          %p236 = pneg %p69
        $region14: #{tpu_custom_call.1} parent=11 // pred_check_branch
          %238 = sbr.rel (%p236) target = $region16
        $region15: #{tpu_custom_call.1} parent=11 // pred_region
          _
        $region16: #{tpu_custom_call.1} parent=11 // pred_fallthru
          _
        // Predicated region
        $region17: #{tpu_custom_call.1} parent=11 // pred_check
          %p239 = pneg %p90
        $region18: #{tpu_custom_call.1} parent=11 // pred_check_branch
          %241 = sbr.rel (%p239) target = $region20
        $region19: #{tpu_custom_call.1} parent=11 // pred_region
          %243 = vsyncadd [#allocation6], 0
          %s245 = sshll.u32 %s2, 4
          %s246 = int_to_ptr.hbm [resolvable:$true] %s245
          %s247 = sshll.u32 [#allocation5], 4
          %s248 = int_to_ptr.vmem [resolvable:$true] %s247
          %250 = dma.hbm_to_vmem [thread:$0]  %s246, 128, %s248, [#allocation6]
        $region20: #{tpu_custom_call.1} parent=11 // pred_fallthru
          _
        // Predicated region
        $region21: #{tpu_custom_call.1} parent=11 // pred_check
          %p251 = pneg %p111
        $region22: #{tpu_custom_call.1} parent=11 // pred_check_branch
          %253 = sbr.rel (%p251) target = $region24
        $region23: #{tpu_custom_call.1} parent=11 // pred_region
          _
        $region24: #{tpu_custom_call.1} parent=11 // pred_fallthru
          _
        // Predicated region
        $region25: #{tpu_custom_call.1} parent=11 // pred_check
          %p254 = pneg %p132
        $region26: #{tpu_custom_call.1} parent=11 // pred_check_branch
          %256 = sbr.rel (%p254) target = $region28
        $region27: #{tpu_custom_call.1} parent=11 // pred_region
          %258 = vsyncadd [#allocation6], 0
          %s260 = sshll.u32 %s4, 4
          %s261 = int_to_ptr.hbm [resolvable:$true] %s260
          %s262 = sshll.u32 [#allocation7], 4
          %s263 = int_to_ptr.vmem [resolvable:$true] %s262
          %265 = dma.hbm_to_vmem [thread:$0]  %s261, 128, %s263, [#allocation6]
        $region28: #{tpu_custom_call.1} parent=11 // pred_fallthru
          _
        // Predicated region
        $region29: #{tpu_custom_call.1} parent=11 // pred_check
          %p266 = pneg %p153
        $region30: #{tpu_custom_call.1} parent=11 // pred_check_branch
          %268 = sbr.rel (%p266) target = $region32
        $region31: #{tpu_custom_call.1} parent=11 // pred_region
          %270 = vsyncadd [#allocation9], 0
          %s272 = sshll.u32 %s5, 4
          %s273 = int_to_ptr.hbm [resolvable:$true] %s272
          %s274 = sshll.u32 [#allocation8], 4
          %s275 = int_to_ptr.vmem [resolvable:$true] %s274
          %277 = dma.hbm_to_vmem [thread:$0]  %s273, 64, %s275, [#allocation9]
        $region32: #{tpu_custom_call.1} parent=11 // pred_fallthru
          _
        // Predicated region
        $region33: #{tpu_custom_call.1} parent=11 // pred_check
          %p278 = pneg %p174
        $region34: #{tpu_custom_call.1} parent=11 // pred_check_branch
          %280 = sbr.rel (%p278) target = $region36
        $region35: #{tpu_custom_call.1} parent=11 // pred_region
          %282 = vsyncadd [#allocation9], 0
          %s284 = sshll.u32 %s6, 4
          %s285 = int_to_ptr.hbm [resolvable:$true] %s284
          %s286 = sshll.u32 [#allocation10], 4
          %s287 = int_to_ptr.vmem [resolvable:$true] %s286
          %289 = dma.hbm_to_vmem [thread:$0]  %s285, 64, %s287, [#allocation9]
        $region36: #{tpu_custom_call.1} parent=11 // pred_fallthru
          _
        // Predicated region
        $region37: #{tpu_custom_call.1} parent=11 // pred_check
          %p290 = pneg %p195
        $region38: #{tpu_custom_call.1} parent=11 // pred_check_branch
          %292 = sbr.rel (%p290) target = $region40
        $region39: #{tpu_custom_call.1} parent=11 // pred_region
          _
        $region40: #{tpu_custom_call.1} parent=11 // pred_fallthru
          _
      $region12: #{tpu_custom_call.1} parent=5 // pred_fallthru
        _
      %p293 = scmp.lt.s32.totalorder %s22, 2
      // Predicated region
      $region41: #{tpu_custom_call.1} parent=5 // pred_check
        %p294 = pneg %p293
      $region42: #{tpu_custom_call.1} parent=5 // pred_check_branch
        %296 = sbr.rel (%p294) target = $region44
      $region43: #{tpu_custom_call.1} parent=5 // pred_region
        // Predicated region
        $region45: #{tpu_custom_call.1} parent=43 // pred_check
          %p297 = pneg %p42
        $region46: #{tpu_custom_call.1} parent=43 // pred_check_branch
          %299 = sbr.rel (%p297) target = $region48
        $region47: #{tpu_custom_call.1} parent=43 // pred_region
          %s300 = sand.u32 %s32, 1
          %s301 = scalar_lea.sflag [#allocation3], %s300
          %s302 = sand.u32 %s32, 1
          %s303 = smul.addr %s302, 64
          %s304 = scalar_lea.vmem [#allocation2], %s303
          %306 = vsyncadd %s301, 0
          %s307 = smul.addr %s22, 8
          %s308 = smul.addr %s307, 8
          %s309 = scalar_lea.hbm %s0, %s308
          %s311 = sshll.u32 %s309, 4
          %s312 = int_to_ptr.hbm [resolvable:$true] %s311
          %s313 = sshll.u32 %s304, 4
          %s314 = int_to_ptr.vmem [resolvable:$true] %s313
          %316 = dma.hbm_to_vmem [thread:$0]  %s312, 1024, %s314, %s301
        $region48: #{tpu_custom_call.1} parent=43 // pred_fallthru
          _
      $region44: #{tpu_custom_call.1} parent=5 // pred_fallthru
        _
      %p317 = scmp.le.s32.totalorder 1, %s22
      %p318 = scmp.lt.s32.totalorder %s22, 3
      %p319 = pnand %p317, %p318
      %p320 = pneg %p319
      // Predicated region
      $region49: #{tpu_custom_call.1} parent=5 // pred_check
        _
      $region50: #{tpu_custom_call.1} parent=5 // pred_check_branch
        %322 = sbr.rel (%p319) target = $region52
      $region51: #{tpu_custom_call.1} parent=5 // pred_region
        %s323 = ssub.s32 %s22, 1
        %s324 = sand.u32 %s35, 1
        %s325 = scalar_lea.sflag [#allocation3], %s324
        %s326 = sand.u32 %s35, 1
        %s327 = smul.addr %s326, 64
        %s328 = scalar_lea.vmem [#allocation2], %s327
        // Predicated region
        $region53: #{tpu_custom_call.1} parent=51 // pred_check
          %p329 = pneg %p48
        $region54: #{tpu_custom_call.1} parent=51 // pred_check_branch
          %331 = sbr.rel (%p329) target = $region56
        $region55: #{tpu_custom_call.1} parent=51 // pred_region
          %333 = dma.done %s325, 1024
        $region56: #{tpu_custom_call.1} parent=51 // pred_fallthru
          _
        // Predicated region
        $region57: #{tpu_custom_call.1} parent=51 // pred_check
          %p334 = pneg %p90
        $region58: #{tpu_custom_call.1} parent=51 // pred_check_branch
          %336 = sbr.rel (%p334) target = $region60
        $region59: #{tpu_custom_call.1} parent=51 // pred_region
          %338 = dma.done [#allocation6], 128
        $region60: #{tpu_custom_call.1} parent=51 // pred_fallthru
          _
        // Predicated region
        $region61: #{tpu_custom_call.1} parent=51 // pred_check
          %p339 = pneg %p132
        $region62: #{tpu_custom_call.1} parent=51 // pred_check_branch
          %341 = sbr.rel (%p339) target = $region64
        $region63: #{tpu_custom_call.1} parent=51 // pred_region
          %343 = dma.done [#allocation6], 128
        $region64: #{tpu_custom_call.1} parent=51 // pred_fallthru
          _
        // Predicated region
        $region65: #{tpu_custom_call.1} parent=51 // pred_check
          %p344 = pneg %p153
        $region66: #{tpu_custom_call.1} parent=51 // pred_check_branch
          %346 = sbr.rel (%p344) target = $region68
        $region67: #{tpu_custom_call.1} parent=51 // pred_region
          %348 = dma.done [#allocation9], 64
        $region68: #{tpu_custom_call.1} parent=51 // pred_fallthru
          _
        // Predicated region
        $region69: #{tpu_custom_call.1} parent=51 // pred_check
          %p349 = pneg %p174
        $region70: #{tpu_custom_call.1} parent=51 // pred_check_branch
          %351 = sbr.rel (%p349) target = $region72
        $region71: #{tpu_custom_call.1} parent=51 // pred_region
          %353 = dma.done [#allocation9], 64
        $region72: #{tpu_custom_call.1} parent=51 // pred_fallthru
          _
        %s354 = sand.u32 %s35, 1
        %s355 = scalar_lea.sflag [#allocation3], %s354
        %s356 = sand.u32 %s35, 1
        %s357 = smul.addr %s356, 64
        %s358 = scalar_lea.vmem [#allocation2], %s357
        %p359 = pneg %p48
        %p360 = pneg %p45
        %p361 = pneg %p69
        %p362 = pneg %p66
        %p363 = pneg %p90
        %p364 = pneg %p87
        %p365 = pneg %p111
        %p366 = pneg %p108
        %p367 = pneg %p132
        %p368 = pneg %p129
        %p369 = pneg %p153
        %p370 = pneg %p150
        %p371 = pneg %p174
        %p372 = pneg %p171
        %p373 = pneg %p195
        %p374 = pneg %p192
        %p375 = pneg %p221
        %p376 = pneg %p218
        %s377 = sand.u32 %s208, 1
        %s378 = scalar_lea.sflag [#allocation4], %s377
        %s379 = sand.u32 %s208, 1
        %s380 = smul.addr %s379, 64
        %s381 = scalar_lea.vmem [#allocation11], %s380
        %v383 = vld [vmem:[%s328] sm:$0xff]
        %v384 = vld [vmem:[%s328 + $0x8] sm:$0xff]
        %v385 = vld [vmem:[%s328 + $0x10] sm:$0xff]
        %v386 = vld [vmem:[%s328 + $0x18] sm:$0xff]
        %v387 = vld [vmem:[%s328 + $0x20] sm:$0xff]
        %v388 = vld [vmem:[%s328 + $0x28] sm:$0xff]
        %v389 = vld [vmem:[%s328 + $0x30] sm:$0xff]
        %v390 = vld [vmem:[%s328 + $0x38] sm:$0xff]
        %v391 = vld [vmem:[%s1] sm:$0xff]
        %v392 = vmax.f32 %v383, 0.0
        %v393 = vmax.f32 %v384, 0.0
        %v394 = vmax.f32 %v385, 0.0
        %v395 = vmax.f32 %v386, 0.0
        %v396 = vmax.f32 %v387, 0.0
        %v397 = vmax.f32 %v388, 0.0
        %v398 = vmax.f32 %v389, 0.0
        %v399 = vmax.f32 %v390, 0.0
        %400 = vrot.lane.b32.xlu0 %v392, 111
        %v401 = vpop.permute.xlu0 %400
        %402 = vrot.lane.b32.xlu0 %v393, 111
        %v403 = vpop.permute.xlu0 %402
        %404 = vrot.lane.b32.xlu0 %v394, 111
        %v405 = vpop.permute.xlu0 %404
        %406 = vrot.lane.b32.xlu0 %v395, 111
        %v407 = vpop.permute.xlu0 %406
        %408 = vrot.lane.b32.xlu0 %v396, 111
        %v409 = vpop.permute.xlu0 %408
        %410 = vrot.lane.b32.xlu0 %v397, 111
        %v411 = vpop.permute.xlu0 %410
        %412 = vrot.lane.b32.xlu0 %v398, 111
        %v413 = vpop.permute.xlu0 %412
        %414 = vrot.lane.b32.xlu0 %v399, 111
        %v415 = vpop.permute.xlu0 %414
        %v416 = vlaneseq
        %v417 = vand.u32 %v416, 127
        %vm418 = vcmp.lt.s32.totalorder %v417, 111
        %v419 = vsel %vm418, %v413, %v415
        %v420 = vsel %vm418, %v411, %v413
        %v421 = vsel %vm418, %v409, %v411
        %v422 = vsel %vm418, %v407, %v409
        %v423 = vsel %vm418, %v405, %v407
        %v424 = vsel %vm418, %v403, %v405
        %v425 = vsel %vm418, %v401, %v403
        %v426 = vsel %vm418, %v415, %v401
        %v427 = vld [vmem:[#allocation5] sm:$0xff]
        %429 = vset.pattern.permute.xlu0 0
        %430 = vperm.xlu0 %429, %v427
        %v431 = vpop.permute.xlu0 %430
        %v433 = vmul.f32 %v426, %v431
        %v434 = vmul.f32 %v425, %v431
        %v435 = vmul.f32 %v424, %v431
        %v436 = vmul.f32 %v423, %v431
        %v437 = vmul.f32 %v422, %v431
        %v438 = vmul.f32 %v421, %v431
        %v439 = vmul.f32 %v420, %v431
        %v440 = vmul.f32 %v419, %v431
        %441 = vrot.lane.b32.xlu0 %v392, 110
        %v442 = vpop.permute.xlu0 %441
        %443 = vrot.lane.b32.xlu0 %v393, 110
        %v444 = vpop.permute.xlu0 %443
        %445 = vrot.lane.b32.xlu0 %v394, 110
        %v446 = vpop.permute.xlu0 %445
        %447 = vrot.lane.b32.xlu0 %v395, 110
        %v448 = vpop.permute.xlu0 %447
        %449 = vrot.lane.b32.xlu0 %v396, 110
        %v450 = vpop.permute.xlu0 %449
        %451 = vrot.lane.b32.xlu0 %v397, 110
        %v452 = vpop.permute.xlu0 %451
        %453 = vrot.lane.b32.xlu0 %v398, 110
        %v454 = vpop.permute.xlu0 %453
        %455 = vrot.lane.b32.xlu0 %v399, 110
        %v456 = vpop.permute.xlu0 %455
        %vm457 = vcmp.lt.s32.totalorder %v417, 110
        %v458 = vsel %vm457, %v454, %v456
        %v459 = vsel %vm457, %v452, %v454
        %v460 = vsel %vm457, %v450, %v452
        %v461 = vsel %vm457, %v448, %v450
        %v462 = vsel %vm457, %v446, %v448
        %v463 = vsel %vm457, %v444, %v446
        %v464 = vsel %vm457, %v442, %v444
        %v465 = vsel %vm457, %v456, %v442
        %466 = vset.pattern.permute.xlu0 1
        %467 = vperm.xlu0 %466, %v427
        %v468 = vpop.permute.xlu0 %467
        %v470 = vmul.f32 %v465, %v468
        %v471 = vmul.f32 %v464, %v468
        %v472 = vmul.f32 %v463, %v468
        %v473 = vmul.f32 %v462, %v468
        %v474 = vmul.f32 %v461, %v468
        %v475 = vmul.f32 %v460, %v468
        %v476 = vmul.f32 %v459, %v468
        %v477 = vmul.f32 %v458, %v468
        %v478 = vadd.f32 %v433, %v470
        %v479 = vadd.f32 %v434, %v471
        %v480 = vadd.f32 %v435, %v472
        %v481 = vadd.f32 %v436, %v473
        %v482 = vadd.f32 %v437, %v474
        %v483 = vadd.f32 %v438, %v475
        %v484 = vadd.f32 %v439, %v476
        %v485 = vadd.f32 %v440, %v477
        %486 = vrot.lane.b32.xlu0 %v392, 109
        %v487 = vpop.permute.xlu0 %486
        %488 = vrot.lane.b32.xlu0 %v393, 109
        %v489 = vpop.permute.xlu0 %488
        %490 = vrot.lane.b32.xlu0 %v394, 109
        %v491 = vpop.permute.xlu0 %490
        %492 = vrot.lane.b32.xlu0 %v395, 109
        %v493 = vpop.permute.xlu0 %492
        %494 = vrot.lane.b32.xlu0 %v396, 109
        %v495 = vpop.permute.xlu0 %494
        %496 = vrot.lane.b32.xlu0 %v397, 109
        %v497 = vpop.permute.xlu0 %496
        %498 = vrot.lane.b32.xlu0 %v398, 109
        %v499 = vpop.permute.xlu0 %498
        %500 = vrot.lane.b32.xlu0 %v399, 109
        %v501 = vpop.permute.xlu0 %500
        %vm502 = vcmp.lt.s32.totalorder %v417, 109
        %v503 = vsel %vm502, %v499, %v501
        %v504 = vsel %vm502, %v497, %v499
        %v505 = vsel %vm502, %v495, %v497
        %v506 = vsel %vm502, %v493, %v495
        %v507 = vsel %vm502, %v491, %v493
        %v508 = vsel %vm502, %v489, %v491
        %v509 = vsel %vm502, %v487, %v489
        %v510 = vsel %vm502, %v501, %v487
        %511 = vset.pattern.permute.xlu0 2
        %512 = vperm.xlu0 %511, %v427
        %v513 = vpop.permute.xlu0 %512
        %v515 = vmul.f32 %v510, %v513
        %v516 = vmul.f32 %v509, %v513
        %v517 = vmul.f32 %v508, %v513
        %v518 = vmul.f32 %v507, %v513
        %v519 = vmul.f32 %v506, %v513
        %v520 = vmul.f32 %v505, %v513
        %v521 = vmul.f32 %v504, %v513
        %v522 = vmul.f32 %v503, %v513
        %v523 = vadd.f32 %v478, %v515
        %v524 = vadd.f32 %v479, %v516
        %v525 = vadd.f32 %v480, %v517
        %v526 = vadd.f32 %v481, %v518
        %v527 = vadd.f32 %v482, %v519
        %v528 = vadd.f32 %v483, %v520
        %v529 = vadd.f32 %v484, %v521
        %v530 = vadd.f32 %v485, %v522
        %531 = vrot.lane.b32.xlu0 %v392, 101
        %v532 = vpop.permute.xlu0 %531
        %533 = vrot.lane.b32.xlu0 %v393, 101
        %v534 = vpop.permute.xlu0 %533
        %535 = vrot.lane.b32.xlu0 %v394, 101
        %v536 = vpop.permute.xlu0 %535
        %537 = vrot.lane.b32.xlu0 %v395, 101
        %v538 = vpop.permute.xlu0 %537
        %539 = vrot.lane.b32.xlu0 %v396, 101
        %v540 = vpop.permute.xlu0 %539
        %541 = vrot.lane.b32.xlu0 %v397, 101
        %v542 = vpop.permute.xlu0 %541
        %543 = vrot.lane.b32.xlu0 %v398, 101
        %v544 = vpop.permute.xlu0 %543
        %545 = vrot.lane.b32.xlu0 %v399, 101
        %v546 = vpop.permute.xlu0 %545
        %vm547 = vcmp.lt.s32.totalorder %v417, 101
        %v548 = vsel %vm547, %v544, %v546
        %v549 = vsel %vm547, %v542, %v544
        %v550 = vsel %vm547, %v540, %v542
        %v551 = vsel %vm547, %v538, %v540
        %v552 = vsel %vm547, %v536, %v538
        %v553 = vsel %vm547, %v534, %v536
        %v554 = vsel %vm547, %v532, %v534
        %v555 = vsel %vm547, %v546, %v532
        %556 = vset.pattern.permute.xlu0 3
        %557 = vperm.xlu0 %556, %v427
        %v558 = vpop.permute.xlu0 %557
        %v560 = vmul.f32 %v555, %v558
        %v561 = vmul.f32 %v554, %v558
        %v562 = vmul.f32 %v553, %v558
        %v563 = vmul.f32 %v552, %v558
        %v564 = vmul.f32 %v551, %v558
        %v565 = vmul.f32 %v550, %v558
        %v566 = vmul.f32 %v549, %v558
        %v567 = vmul.f32 %v548, %v558
        %v568 = vadd.f32 %v523, %v560
        %v569 = vadd.f32 %v524, %v561
        %v570 = vadd.f32 %v525, %v562
        %v571 = vadd.f32 %v526, %v563
        %v572 = vadd.f32 %v527, %v564
        %v573 = vadd.f32 %v528, %v565
        %v574 = vadd.f32 %v529, %v566
        %v575 = vadd.f32 %v530, %v567
        %576 = vrot.lane.b32.xlu0 %v392, 100
        %v577 = vpop.permute.xlu0 %576
        %578 = vrot.lane.b32.xlu0 %v393, 100
        %v579 = vpop.permute.xlu0 %578
        %580 = vrot.lane.b32.xlu0 %v394, 100
        %v581 = vpop.permute.xlu0 %580
        %582 = vrot.lane.b32.xlu0 %v395, 100
        %v583 = vpop.permute.xlu0 %582
        %584 = vrot.lane.b32.xlu0 %v396, 100
        %v585 = vpop.permute.xlu0 %584
        %586 = vrot.lane.b32.xlu0 %v397, 100
        %v587 = vpop.permute.xlu0 %586
        %588 = vrot.lane.b32.xlu0 %v398, 100
        %v589 = vpop.permute.xlu0 %588
        %590 = vrot.lane.b32.xlu0 %v399, 100
        %v591 = vpop.permute.xlu0 %590
        %vm592 = vcmp.lt.s32.totalorder %v417, 100
        %v593 = vsel %vm592, %v589, %v591
        %v594 = vsel %vm592, %v587, %v589
        %v595 = vsel %vm592, %v585, %v587
        %v596 = vsel %vm592, %v583, %v585
        %v597 = vsel %vm592, %v581, %v583
        %v598 = vsel %vm592, %v579, %v581
        %v599 = vsel %vm592, %v577, %v579
        %v600 = vsel %vm592, %v591, %v577
        %601 = vset.pattern.permute.xlu0 4
        %602 = vperm.xlu0 %601, %v427
        %v603 = vpop.permute.xlu0 %602
        %v605 = vmul.f32 %v600, %v603
        %v606 = vmul.f32 %v599, %v603
        %v607 = vmul.f32 %v598, %v603
        %v608 = vmul.f32 %v597, %v603
        %v609 = vmul.f32 %v596, %v603
        %v610 = vmul.f32 %v595, %v603
        %v611 = vmul.f32 %v594, %v603
        %v612 = vmul.f32 %v593, %v603
        %v613 = vadd.f32 %v568, %v605
        %v614 = vadd.f32 %v569, %v606
        %v615 = vadd.f32 %v570, %v607
        %v616 = vadd.f32 %v571, %v608
        %v617 = vadd.f32 %v572, %v609
        %v618 = vadd.f32 %v573, %v610
        %v619 = vadd.f32 %v574, %v611
        %v620 = vadd.f32 %v575, %v612
        %621 = vrot.lane.b32.xlu0 %v392, 99
        %v622 = vpop.permute.xlu0 %621
        %623 = vrot.lane.b32.xlu0 %v393, 99
        %v624 = vpop.permute.xlu0 %623
        %625 = vrot.lane.b32.xlu0 %v394, 99
        %v626 = vpop.permute.xlu0 %625
        %627 = vrot.lane.b32.xlu0 %v395, 99
        %v628 = vpop.permute.xlu0 %627
        %629 = vrot.lane.b32.xlu0 %v396, 99
        %v630 = vpop.permute.xlu0 %629
        %631 = vrot.lane.b32.xlu0 %v397, 99
        %v632 = vpop.permute.xlu0 %631
        %633 = vrot.lane.b32.xlu0 %v398, 99
        %v634 = vpop.permute.xlu0 %633
        %635 = vrot.lane.b32.xlu0 %v399, 99
        %v636 = vpop.permute.xlu0 %635
        %vm637 = vcmp.lt.s32.totalorder %v417, 99
        %v638 = vsel %vm637, %v634, %v636
        %v639 = vsel %vm637, %v632, %v634
        %v640 = vsel %vm637, %v630, %v632
        %v641 = vsel %vm637, %v628, %v630
        %v642 = vsel %vm637, %v626, %v628
        %v643 = vsel %vm637, %v624, %v626
        %v644 = vsel %vm637, %v622, %v624
        %v645 = vsel %vm637, %v636, %v622
        %646 = vset.pattern.permute.xlu0 5
        %647 = vperm.xlu0 %646, %v427
        %v648 = vpop.permute.xlu0 %647
        %v650 = vmul.f32 %v645, %v648
        %v651 = vmul.f32 %v644, %v648
        %v652 = vmul.f32 %v643, %v648
        %v653 = vmul.f32 %v642, %v648
        %v654 = vmul.f32 %v641, %v648
        %v655 = vmul.f32 %v640, %v648
        %v656 = vmul.f32 %v639, %v648
        %v657 = vmul.f32 %v638, %v648
        %v658 = vadd.f32 %v613, %v650
        %v659 = vadd.f32 %v614, %v651
        %v660 = vadd.f32 %v615, %v652
        %v661 = vadd.f32 %v616, %v653
        %v662 = vadd.f32 %v617, %v654
        %v663 = vadd.f32 %v618, %v655
        %v664 = vadd.f32 %v619, %v656
        %v665 = vadd.f32 %v620, %v657
        %666 = vrot.lane.b32.xlu0 %v392, 91
        %v667 = vpop.permute.xlu0 %666
        %668 = vrot.lane.b32.xlu0 %v393, 91
        %v669 = vpop.permute.xlu0 %668
        %670 = vrot.lane.b32.xlu0 %v394, 91
        %v671 = vpop.permute.xlu0 %670
        %672 = vrot.lane.b32.xlu0 %v395, 91
        %v673 = vpop.permute.xlu0 %672
        %674 = vrot.lane.b32.xlu0 %v396, 91
        %v675 = vpop.permute.xlu0 %674
        %676 = vrot.lane.b32.xlu0 %v397, 91
        %v677 = vpop.permute.xlu0 %676
        %678 = vrot.lane.b32.xlu0 %v398, 91
        %v679 = vpop.permute.xlu0 %678
        %680 = vrot.lane.b32.xlu0 %v399, 91
        %v681 = vpop.permute.xlu0 %680
        %vm682 = vcmp.lt.s32.totalorder %v417, 91
        %v683 = vsel %vm682, %v679, %v681
        %v684 = vsel %vm682, %v677, %v679
        %v685 = vsel %vm682, %v675, %v677
        %v686 = vsel %vm682, %v673, %v675
        %v687 = vsel %vm682, %v671, %v673
        %v688 = vsel %vm682, %v669, %v671
        %v689 = vsel %vm682, %v667, %v669
        %v690 = vsel %vm682, %v681, %v667
        %691 = vset.pattern.permute.xlu0 6
        %692 = vperm.xlu0 %691, %v427
        %v693 = vpop.permute.xlu0 %692
        %v695 = vmul.f32 %v690, %v693
        %v696 = vmul.f32 %v689, %v693
        %v697 = vmul.f32 %v688, %v693
        %v698 = vmul.f32 %v687, %v693
        %v699 = vmul.f32 %v686, %v693
        %v700 = vmul.f32 %v685, %v693
        %v701 = vmul.f32 %v684, %v693
        %v702 = vmul.f32 %v683, %v693
        %v703 = vadd.f32 %v658, %v695
        %v704 = vadd.f32 %v659, %v696
        %v705 = vadd.f32 %v660, %v697
        %v706 = vadd.f32 %v661, %v698
        %v707 = vadd.f32 %v662, %v699
        %v708 = vadd.f32 %v663, %v700
        %v709 = vadd.f32 %v664, %v701
        %v710 = vadd.f32 %v665, %v702
        %711 = vrot.lane.b32.xlu0 %v392, 90
        %v712 = vpop.permute.xlu0 %711
        %713 = vrot.lane.b32.xlu0 %v393, 90
        %v714 = vpop.permute.xlu0 %713
        %715 = vrot.lane.b32.xlu0 %v394, 90
        %v716 = vpop.permute.xlu0 %715
        %717 = vrot.lane.b32.xlu0 %v395, 90
        %v718 = vpop.permute.xlu0 %717
        %719 = vrot.lane.b32.xlu0 %v396, 90
        %v720 = vpop.permute.xlu0 %719
        %721 = vrot.lane.b32.xlu0 %v397, 90
        %v722 = vpop.permute.xlu0 %721
        %723 = vrot.lane.b32.xlu0 %v398, 90
        %v724 = vpop.permute.xlu0 %723
        %725 = vrot.lane.b32.xlu0 %v399, 90
        %v726 = vpop.permute.xlu0 %725
        %vm727 = vcmp.lt.s32.totalorder %v417, 90
        %v728 = vsel %vm727, %v724, %v726
        %v729 = vsel %vm727, %v722, %v724
        %v730 = vsel %vm727, %v720, %v722
        %v731 = vsel %vm727, %v718, %v720
        %v732 = vsel %vm727, %v716, %v718
        %v733 = vsel %vm727, %v714, %v716
        %v734 = vsel %vm727, %v712, %v714
        %v735 = vsel %vm727, %v726, %v712
        %736 = vset.pattern.permute.xlu0 7
        %737 = vperm.xlu0 %736, %v427
        %v738 = vpop.permute.xlu0 %737
        %v740 = vmul.f32 %v735, %v738
        %v741 = vmul.f32 %v734, %v738
        %v742 = vmul.f32 %v733, %v738
        %v743 = vmul.f32 %v732, %v738
        %v744 = vmul.f32 %v731, %v738
        %v745 = vmul.f32 %v730, %v738
        %v746 = vmul.f32 %v729, %v738
        %v747 = vmul.f32 %v728, %v738
        %v748 = vadd.f32 %v703, %v740
        %v749 = vadd.f32 %v704, %v741
        %v750 = vadd.f32 %v705, %v742
        %v751 = vadd.f32 %v706, %v743
        %v752 = vadd.f32 %v707, %v744
        %v753 = vadd.f32 %v708, %v745
        %v754 = vadd.f32 %v709, %v746
        %v755 = vadd.f32 %v710, %v747
        %756 = vrot.lane.b32.xlu0 %v392, 89
        %v757 = vpop.permute.xlu0 %756
        %758 = vrot.lane.b32.xlu0 %v393, 89
        %v759 = vpop.permute.xlu0 %758
        %760 = vrot.lane.b32.xlu0 %v394, 89
        %v761 = vpop.permute.xlu0 %760
        %762 = vrot.lane.b32.xlu0 %v395, 89
        %v763 = vpop.permute.xlu0 %762
        %764 = vrot.lane.b32.xlu0 %v396, 89
        %v765 = vpop.permute.xlu0 %764
        %766 = vrot.lane.b32.xlu0 %v397, 89
        %v767 = vpop.permute.xlu0 %766
        %768 = vrot.lane.b32.xlu0 %v398, 89
        %v769 = vpop.permute.xlu0 %768
        %770 = vrot.lane.b32.xlu0 %v399, 89
        %v771 = vpop.permute.xlu0 %770
        %vm772 = vcmp.lt.s32.totalorder %v417, 89
        %v773 = vsel %vm772, %v769, %v771
        %v774 = vsel %vm772, %v767, %v769
        %v775 = vsel %vm772, %v765, %v767
        %v776 = vsel %vm772, %v763, %v765
        %v777 = vsel %vm772, %v761, %v763
        %v778 = vsel %vm772, %v759, %v761
        %v779 = vsel %vm772, %v757, %v759
        %v780 = vsel %vm772, %v771, %v757
        %781 = vset.pattern.permute.xlu0 8
        %782 = vperm.xlu0 %781, %v427
        %v783 = vpop.permute.xlu0 %782
        %v785 = vmul.f32 %v780, %v783
        %v786 = vmul.f32 %v779, %v783
        %v787 = vmul.f32 %v778, %v783
        %v788 = vmul.f32 %v777, %v783
        %v789 = vmul.f32 %v776, %v783
        %v790 = vmul.f32 %v775, %v783
        %v791 = vmul.f32 %v774, %v783
        %v792 = vmul.f32 %v773, %v783
        %v793 = vadd.f32 %v748, %v785
        %v794 = vadd.f32 %v749, %v786
        %v795 = vadd.f32 %v750, %v787
        %v796 = vadd.f32 %v751, %v788
        %v797 = vadd.f32 %v752, %v789
        %v798 = vadd.f32 %v753, %v790
        %v799 = vadd.f32 %v754, %v791
        %v800 = vadd.f32 %v755, %v792
        %801 = vrot.lane.b32.xlu0 %v392, 11
        %v802 = vpop.permute.xlu0 %801
        %803 = vrot.lane.b32.xlu0 %v393, 11
        %v804 = vpop.permute.xlu0 %803
        %805 = vrot.lane.b32.xlu0 %v394, 11
        %v806 = vpop.permute.xlu0 %805
        %807 = vrot.lane.b32.xlu0 %v395, 11
        %v808 = vpop.permute.xlu0 %807
        %809 = vrot.lane.b32.xlu0 %v396, 11
        %v810 = vpop.permute.xlu0 %809
        %811 = vrot.lane.b32.xlu0 %v397, 11
        %v812 = vpop.permute.xlu0 %811
        %813 = vrot.lane.b32.xlu0 %v398, 11
        %v814 = vpop.permute.xlu0 %813
        %815 = vrot.lane.b32.xlu0 %v399, 11
        %v816 = vpop.permute.xlu0 %815
        %vm817 = vcmp.lt.s32.totalorder %v417, 11
        %v818 = vsel %vm817, %v814, %v816
        %v819 = vsel %vm817, %v812, %v814
        %v820 = vsel %vm817, %v810, %v812
        %v821 = vsel %vm817, %v808, %v810
        %v822 = vsel %vm817, %v806, %v808
        %v823 = vsel %vm817, %v804, %v806
        %v824 = vsel %vm817, %v802, %v804
        %v825 = vsel %vm817, %v816, %v802
        %826 = vset.pattern.permute.xlu0 9
        %827 = vperm.xlu0 %826, %v427
        %v828 = vpop.permute.xlu0 %827
        %v830 = vmul.f32 %v825, %v828
        %v831 = vmul.f32 %v824, %v828
        %v832 = vmul.f32 %v823, %v828
        %v833 = vmul.f32 %v822, %v828
        %v834 = vmul.f32 %v821, %v828
        %v835 = vmul.f32 %v820, %v828
        %v836 = vmul.f32 %v819, %v828
        %v837 = vmul.f32 %v818, %v828
        %v838 = vadd.f32 %v793, %v830
        %v839 = vadd.f32 %v794, %v831
        %v840 = vadd.f32 %v795, %v832
        %v841 = vadd.f32 %v796, %v833
        %v842 = vadd.f32 %v797, %v834
        %v843 = vadd.f32 %v798, %v835
        %v844 = vadd.f32 %v799, %v836
        %v845 = vadd.f32 %v800, %v837
        %846 = vrot.lane.b32.xlu0 %v392, 10
        %v847 = vpop.permute.xlu0 %846
        %848 = vrot.lane.b32.xlu0 %v393, 10
        %v849 = vpop.permute.xlu0 %848
        %850 = vrot.lane.b32.xlu0 %v394, 10
        %v851 = vpop.permute.xlu0 %850
        %852 = vrot.lane.b32.xlu0 %v395, 10
        %v853 = vpop.permute.xlu0 %852
        %854 = vrot.lane.b32.xlu0 %v396, 10
        %v855 = vpop.permute.xlu0 %854
        %856 = vrot.lane.b32.xlu0 %v397, 10
        %v857 = vpop.permute.xlu0 %856
        %858 = vrot.lane.b32.xlu0 %v398, 10
        %v859 = vpop.permute.xlu0 %858
        %860 = vrot.lane.b32.xlu0 %v399, 10
        %v861 = vpop.permute.xlu0 %860
        %vm862 = vcmp.lt.s32.totalorder %v417, 10
        %v863 = vsel %vm862, %v859, %v861
        %v864 = vsel %vm862, %v857, %v859
        %v865 = vsel %vm862, %v855, %v857
        %v866 = vsel %vm862, %v853, %v855
        %v867 = vsel %vm862, %v851, %v853
        %v868 = vsel %vm862, %v849, %v851
        %v869 = vsel %vm862, %v847, %v849
        %v870 = vsel %vm862, %v861, %v847
        %871 = vset.pattern.permute.xlu0 10
        %872 = vperm.xlu0 %871, %v427
        %v873 = vpop.permute.xlu0 %872
        %v875 = vmul.f32 %v870, %v873
        %v876 = vmul.f32 %v869, %v873
        %v877 = vmul.f32 %v868, %v873
        %v878 = vmul.f32 %v867, %v873
        %v879 = vmul.f32 %v866, %v873
        %v880 = vmul.f32 %v865, %v873
        %v881 = vmul.f32 %v864, %v873
        %v882 = vmul.f32 %v863, %v873
        %v883 = vadd.f32 %v838, %v875
        %v884 = vadd.f32 %v839, %v876
        %v885 = vadd.f32 %v840, %v877
        %v886 = vadd.f32 %v841, %v878
        %v887 = vadd.f32 %v842, %v879
        %v888 = vadd.f32 %v843, %v880
        %v889 = vadd.f32 %v844, %v881
        %v890 = vadd.f32 %v845, %v882
        %891 = vrot.lane.b32.xlu0 %v392, 9
        %v892 = vpop.permute.xlu0 %891
        %893 = vrot.lane.b32.xlu0 %v393, 9
        %v894 = vpop.permute.xlu0 %893
        %895 = vrot.lane.b32.xlu0 %v394, 9
        %v896 = vpop.permute.xlu0 %895
        %897 = vrot.lane.b32.xlu0 %v395, 9
        %v898 = vpop.permute.xlu0 %897
        %899 = vrot.lane.b32.xlu0 %v396, 9
        %v900 = vpop.permute.xlu0 %899
        %901 = vrot.lane.b32.xlu0 %v397, 9
        %v902 = vpop.permute.xlu0 %901
        %903 = vrot.lane.b32.xlu0 %v398, 9
        %v904 = vpop.permute.xlu0 %903
        %905 = vrot.lane.b32.xlu0 %v399, 9
        %v906 = vpop.permute.xlu0 %905
        %vm907 = vcmp.lt.s32.totalorder %v417, 9
        %v908 = vsel %vm907, %v904, %v906
        %v909 = vsel %vm907, %v902, %v904
        %v910 = vsel %vm907, %v900, %v902
        %v911 = vsel %vm907, %v898, %v900
        %v912 = vsel %vm907, %v896, %v898
        %v913 = vsel %vm907, %v894, %v896
        %v914 = vsel %vm907, %v892, %v894
        %v915 = vsel %vm907, %v906, %v892
        %916 = vset.pattern.permute.xlu0 11
        %917 = vperm.xlu0 %916, %v427
        %v918 = vpop.permute.xlu0 %917
        %v920 = vmul.f32 %v915, %v918
        %v921 = vmul.f32 %v914, %v918
        %v922 = vmul.f32 %v913, %v918
        %v923 = vmul.f32 %v912, %v918
        %v924 = vmul.f32 %v911, %v918
        %v925 = vmul.f32 %v910, %v918
        %v926 = vmul.f32 %v909, %v918
        %v927 = vmul.f32 %v908, %v918
        %v928 = vadd.f32 %v883, %v920
        %v929 = vadd.f32 %v884, %v921
        %v930 = vadd.f32 %v885, %v922
        %v931 = vadd.f32 %v886, %v923
        %v932 = vadd.f32 %v887, %v924
        %v933 = vadd.f32 %v888, %v925
        %v934 = vadd.f32 %v889, %v926
        %v935 = vadd.f32 %v890, %v927
        %936 = vrot.lane.b32.xlu0 %v392, 1
        %v937 = vpop.permute.xlu0 %936
        %938 = vrot.lane.b32.xlu0 %v393, 1
        %v939 = vpop.permute.xlu0 %938
        %940 = vrot.lane.b32.xlu0 %v394, 1
        %v941 = vpop.permute.xlu0 %940
        %942 = vrot.lane.b32.xlu0 %v395, 1
        %v943 = vpop.permute.xlu0 %942
        %944 = vrot.lane.b32.xlu0 %v396, 1
        %v945 = vpop.permute.xlu0 %944
        %946 = vrot.lane.b32.xlu0 %v397, 1
        %v947 = vpop.permute.xlu0 %946
        %948 = vrot.lane.b32.xlu0 %v398, 1
        %v949 = vpop.permute.xlu0 %948
        %950 = vrot.lane.b32.xlu0 %v399, 1
        %v951 = vpop.permute.xlu0 %950
        %vm952 = vcmp.lt.s32.totalorder %v417, 1
        %v953 = vsel %vm952, %v949, %v951
        %v954 = vsel %vm952, %v947, %v949
        %v955 = vsel %vm952, %v945, %v947
        %v956 = vsel %vm952, %v943, %v945
        %v957 = vsel %vm952, %v941, %v943
        %v958 = vsel %vm952, %v939, %v941
        %v959 = vsel %vm952, %v937, %v939
        %v960 = vsel %vm952, %v951, %v937
        %961 = vset.pattern.permute.xlu0 12
        %962 = vperm.xlu0 %961, %v427
        %v963 = vpop.permute.xlu0 %962
        %v965 = vmul.f32 %v960, %v963
        %v966 = vmul.f32 %v959, %v963
        %v967 = vmul.f32 %v958, %v963
        %v968 = vmul.f32 %v957, %v963
        %v969 = vmul.f32 %v956, %v963
        %v970 = vmul.f32 %v955, %v963
        %v971 = vmul.f32 %v954, %v963
        %v972 = vmul.f32 %v953, %v963
        %v973 = vadd.f32 %v928, %v965
        %v974 = vadd.f32 %v929, %v966
        %v975 = vadd.f32 %v930, %v967
        %v976 = vadd.f32 %v931, %v968
        %v977 = vadd.f32 %v932, %v969
        %v978 = vadd.f32 %v933, %v970
        %v979 = vadd.f32 %v934, %v971
        %v980 = vadd.f32 %v935, %v972
        %981 = vset.pattern.permute.xlu0 13
        %982 = vperm.xlu0 %981, %v427
        %v983 = vpop.permute.xlu0 %982
        %v985 = vmul.f32 %v392, %v983
        %v986 = vmul.f32 %v393, %v983
        %v987 = vmul.f32 %v394, %v983
        %v988 = vmul.f32 %v395, %v983
        %v989 = vmul.f32 %v396, %v983
        %v990 = vmul.f32 %v397, %v983
        %v991 = vmul.f32 %v398, %v983
        %v992 = vmul.f32 %v399, %v983
        %v993 = vadd.f32 %v973, %v985
        %v994 = vadd.f32 %v974, %v986
        %v995 = vadd.f32 %v975, %v987
        %v996 = vadd.f32 %v976, %v988
        %v997 = vadd.f32 %v977, %v989
        %v998 = vadd.f32 %v978, %v990
        %v999 = vadd.f32 %v979, %v991
        %v1000 = vadd.f32 %v980, %v992
        %1001 = vrot.lane.b32.xlu0 %v392, 127
        %v1002 = vpop.permute.xlu0 %1001
        %1003 = vrot.lane.b32.xlu0 %v393, 127
        %v1004 = vpop.permute.xlu0 %1003
        %1005 = vrot.lane.b32.xlu0 %v394, 127
        %v1006 = vpop.permute.xlu0 %1005
        %1007 = vrot.lane.b32.xlu0 %v395, 127
        %v1008 = vpop.permute.xlu0 %1007
        %1009 = vrot.lane.b32.xlu0 %v396, 127
        %v1010 = vpop.permute.xlu0 %1009
        %1011 = vrot.lane.b32.xlu0 %v397, 127
        %v1012 = vpop.permute.xlu0 %1011
        %1013 = vrot.lane.b32.xlu0 %v398, 127
        %v1014 = vpop.permute.xlu0 %1013
        %1015 = vrot.lane.b32.xlu0 %v399, 127
        %v1016 = vpop.permute.xlu0 %1015
        %vm1017 = vcmp.lt.s32.totalorder %v417, 127
        %v1018 = vsel %vm1017, %v1014, %v1016
        %v1019 = vsel %vm1017, %v1012, %v1014
        %v1020 = vsel %vm1017, %v1010, %v1012
        %v1021 = vsel %vm1017, %v1008, %v1010
        %v1022 = vsel %vm1017, %v1006, %v1008
        %v1023 = vsel %vm1017, %v1004, %v1006
        %v1024 = vsel %vm1017, %v1002, %v1004
        %v1025 = vsel %vm1017, %v1016, %v1002
        %1026 = vset.pattern.permute.xlu0 14
        %1027 = vperm.xlu0 %1026, %v427
        %v1028 = vpop.permute.xlu0 %1027
        %v1030 = vmul.f32 %v1024, %v1028
        %v1031 = vmul.f32 %v1023, %v1028
        %v1032 = vmul.f32 %v1022, %v1028
        %v1033 = vmul.f32 %v1021, %v1028
        %v1034 = vmul.f32 %v1020, %v1028
        %v1035 = vmul.f32 %v1019, %v1028
        %v1036 = vmul.f32 %v1018, %v1028
        %v1037 = vmul.f32 %v1025, %v1028
        %v1038 = vadd.f32 %v993, %v1030
        %v1039 = vadd.f32 %v994, %v1031
        %v1040 = vadd.f32 %v995, %v1032
        %v1041 = vadd.f32 %v996, %v1033
        %v1042 = vadd.f32 %v997, %v1034
        %v1043 = vadd.f32 %v998, %v1035
        %v1044 = vadd.f32 %v999, %v1036
        %v1045 = vadd.f32 %v1000, %v1037
        %1046 = vrot.lane.b32.xlu0 %v392, 119
        %v1047 = vpop.permute.xlu0 %1046
        %1048 = vrot.lane.b32.xlu0 %v393, 119
        %v1049 = vpop.permute.xlu0 %1048
        %1050 = vrot.lane.b32.xlu0 %v394, 119
        %v1051 = vpop.permute.xlu0 %1050
        %1052 = vrot.lane.b32.xlu0 %v395, 119
        %v1053 = vpop.permute.xlu0 %1052
        %1054 = vrot.lane.b32.xlu0 %v396, 119
        %v1055 = vpop.permute.xlu0 %1054
        %1056 = vrot.lane.b32.xlu0 %v397, 119
        %v1057 = vpop.permute.xlu0 %1056
        %1058 = vrot.lane.b32.xlu0 %v398, 119
        %v1059 = vpop.permute.xlu0 %1058
        %1060 = vrot.lane.b32.xlu0 %v399, 119
        %v1061 = vpop.permute.xlu0 %1060
        %vm1062 = vcmp.lt.s32.totalorder %v417, 119
        %v1063 = vsel %vm1062, %v1059, %v1061
        %v1064 = vsel %vm1062, %v1057, %v1059
        %v1065 = vsel %vm1062, %v1055, %v1057
        %v1066 = vsel %vm1062, %v1053, %v1055
        %v1067 = vsel %vm1062, %v1051, %v1053
        %v1068 = vsel %vm1062, %v1049, %v1051
        %v1069 = vsel %vm1062, %v1047, %v1049
        %v1070 = vsel %vm1062, %v1061, %v1047
        %1071 = vset.pattern.permute.xlu0 15
        %1072 = vperm.xlu0 %1071, %v427
        %v1073 = vpop.permute.xlu0 %1072
        %v1075 = vmul.f32 %v1069, %v1073
        %v1076 = vmul.f32 %v1068, %v1073
        %v1077 = vmul.f32 %v1067, %v1073
        %v1078 = vmul.f32 %v1066, %v1073
        %v1079 = vmul.f32 %v1065, %v1073
        %v1080 = vmul.f32 %v1064, %v1073
        %v1081 = vmul.f32 %v1063, %v1073
        %v1082 = vmul.f32 %v1070, %v1073
        %v1083 = vadd.f32 %v1038, %v1075
        %v1084 = vadd.f32 %v1039, %v1076
        %v1085 = vadd.f32 %v1040, %v1077
        %v1086 = vadd.f32 %v1041, %v1078
        %v1087 = vadd.f32 %v1042, %v1079
        %v1088 = vadd.f32 %v1043, %v1080
        %v1089 = vadd.f32 %v1044, %v1081
        %v1090 = vadd.f32 %v1045, %v1082
        %1091 = vrot.lane.b32.xlu0 %v392, 118
        %v1092 = vpop.permute.xlu0 %1091
        %1093 = vrot.lane.b32.xlu0 %v393, 118
        %v1094 = vpop.permute.xlu0 %1093
        %1095 = vrot.lane.b32.xlu0 %v394, 118
        %v1096 = vpop.permute.xlu0 %1095
        %1097 = vrot.lane.b32.xlu0 %v395, 118
        %v1098 = vpop.permute.xlu0 %1097
        %1099 = vrot.lane.b32.xlu0 %v396, 118
        %v1100 = vpop.permute.xlu0 %1099
        %1101 = vrot.lane.b32.xlu0 %v397, 118
        %v1102 = vpop.permute.xlu0 %1101
        %1103 = vrot.lane.b32.xlu0 %v398, 118
        %v1104 = vpop.permute.xlu0 %1103
        %1105 = vrot.lane.b32.xlu0 %v399, 118
        %v1106 = vpop.permute.xlu0 %1105
        %vm1107 = vcmp.lt.s32.totalorder %v417, 118
        %v1108 = vsel %vm1107, %v1104, %v1106
        %v1109 = vsel %vm1107, %v1102, %v1104
        %v1110 = vsel %vm1107, %v1100, %v1102
        %v1111 = vsel %vm1107, %v1098, %v1100
        %v1112 = vsel %vm1107, %v1096, %v1098
        %v1113 = vsel %vm1107, %v1094, %v1096
        %v1114 = vsel %vm1107, %v1092, %v1094
        %v1115 = vsel %vm1107, %v1106, %v1092
        %1116 = vset.pattern.permute.xlu0 16
        %1117 = vperm.xlu0 %1116, %v427
        %v1118 = vpop.permute.xlu0 %1117
        %v1120 = vmul.f32 %v1114, %v1118
        %v1121 = vmul.f32 %v1113, %v1118
        %v1122 = vmul.f32 %v1112, %v1118
        %v1123 = vmul.f32 %v1111, %v1118
        %v1124 = vmul.f32 %v1110, %v1118
        %v1125 = vmul.f32 %v1109, %v1118
        %v1126 = vmul.f32 %v1108, %v1118
        %v1127 = vmul.f32 %v1115, %v1118
        %v1128 = vadd.f32 %v1083, %v1120
        %v1129 = vadd.f32 %v1084, %v1121
        %v1130 = vadd.f32 %v1085, %v1122
        %v1131 = vadd.f32 %v1086, %v1123
        %v1132 = vadd.f32 %v1087, %v1124
        %v1133 = vadd.f32 %v1088, %v1125
        %v1134 = vadd.f32 %v1089, %v1126
        %v1135 = vadd.f32 %v1090, %v1127
        %1136 = vrot.lane.b32.xlu0 %v392, 117
        %v1137 = vpop.permute.xlu0 %1136
        %1138 = vrot.lane.b32.xlu0 %v393, 117
        %v1139 = vpop.permute.xlu0 %1138
        %1140 = vrot.lane.b32.xlu0 %v394, 117
        %v1141 = vpop.permute.xlu0 %1140
        %1142 = vrot.lane.b32.xlu0 %v395, 117
        %v1143 = vpop.permute.xlu0 %1142
        %1144 = vrot.lane.b32.xlu0 %v396, 117
        %v1145 = vpop.permute.xlu0 %1144
        %1146 = vrot.lane.b32.xlu0 %v397, 117
        %v1147 = vpop.permute.xlu0 %1146
        %1148 = vrot.lane.b32.xlu0 %v398, 117
        %v1149 = vpop.permute.xlu0 %1148
        %1150 = vrot.lane.b32.xlu0 %v399, 117
        %v1151 = vpop.permute.xlu0 %1150
        %vm1152 = vcmp.lt.s32.totalorder %v417, 117
        %v1153 = vsel %vm1152, %v1149, %v1151
        %v1154 = vsel %vm1152, %v1147, %v1149
        %v1155 = vsel %vm1152, %v1145, %v1147
        %v1156 = vsel %vm1152, %v1143, %v1145
        %v1157 = vsel %vm1152, %v1141, %v1143
        %v1158 = vsel %vm1152, %v1139, %v1141
        %v1159 = vsel %vm1152, %v1137, %v1139
        %v1160 = vsel %vm1152, %v1151, %v1137
        %1161 = vset.pattern.permute.xlu0 17
        %1162 = vperm.xlu0 %1161, %v427
        %v1163 = vpop.permute.xlu0 %1162
        %v1165 = vmul.f32 %v1159, %v1163
        %v1166 = vmul.f32 %v1158, %v1163
        %v1167 = vmul.f32 %v1157, %v1163
        %v1168 = vmul.f32 %v1156, %v1163
        %v1169 = vmul.f32 %v1155, %v1163
        %v1170 = vmul.f32 %v1154, %v1163
        %v1171 = vmul.f32 %v1153, %v1163
        %v1172 = vmul.f32 %v1160, %v1163
        %v1173 = vadd.f32 %v1128, %v1165
        %v1174 = vadd.f32 %v1129, %v1166
        %v1175 = vadd.f32 %v1130, %v1167
        %v1176 = vadd.f32 %v1131, %v1168
        %v1177 = vadd.f32 %v1132, %v1169
        %v1178 = vadd.f32 %v1133, %v1170
        %v1179 = vadd.f32 %v1134, %v1171
        %v1180 = vadd.f32 %v1135, %v1172
        %1181 = vrot.lane.b32.xlu0 %v392, 39
        %v1182 = vpop.permute.xlu0 %1181
        %1183 = vrot.lane.b32.xlu0 %v393, 39
        %v1184 = vpop.permute.xlu0 %1183
        %1185 = vrot.lane.b32.xlu0 %v394, 39
        %v1186 = vpop.permute.xlu0 %1185
        %1187 = vrot.lane.b32.xlu0 %v395, 39
        %v1188 = vpop.permute.xlu0 %1187
        %1189 = vrot.lane.b32.xlu0 %v396, 39
        %v1190 = vpop.permute.xlu0 %1189
        %1191 = vrot.lane.b32.xlu0 %v397, 39
        %v1192 = vpop.permute.xlu0 %1191
        %1193 = vrot.lane.b32.xlu0 %v398, 39
        %v1194 = vpop.permute.xlu0 %1193
        %1195 = vrot.lane.b32.xlu0 %v399, 39
        %v1196 = vpop.permute.xlu0 %1195
        %vm1197 = vcmp.lt.s32.totalorder %v417, 39
        %v1198 = vsel %vm1197, %v1194, %v1196
        %v1199 = vsel %vm1197, %v1192, %v1194
        %v1200 = vsel %vm1197, %v1190, %v1192
        %v1201 = vsel %vm1197, %v1188, %v1190
        %v1202 = vsel %vm1197, %v1186, %v1188
        %v1203 = vsel %vm1197, %v1184, %v1186
        %v1204 = vsel %vm1197, %v1182, %v1184
        %v1205 = vsel %vm1197, %v1196, %v1182
        %1206 = vset.pattern.permute.xlu0 18
        %1207 = vperm.xlu0 %1206, %v427
        %v1208 = vpop.permute.xlu0 %1207
        %v1210 = vmul.f32 %v1204, %v1208
        %v1211 = vmul.f32 %v1203, %v1208
        %v1212 = vmul.f32 %v1202, %v1208
        %v1213 = vmul.f32 %v1201, %v1208
        %v1214 = vmul.f32 %v1200, %v1208
        %v1215 = vmul.f32 %v1199, %v1208
        %v1216 = vmul.f32 %v1198, %v1208
        %v1217 = vmul.f32 %v1205, %v1208
        %v1218 = vadd.f32 %v1173, %v1210
        %v1219 = vadd.f32 %v1174, %v1211
        %v1220 = vadd.f32 %v1175, %v1212
        %v1221 = vadd.f32 %v1176, %v1213
        %v1222 = vadd.f32 %v1177, %v1214
        %v1223 = vadd.f32 %v1178, %v1215
        %v1224 = vadd.f32 %v1179, %v1216
        %v1225 = vadd.f32 %v1180, %v1217
        %1226 = vrot.lane.b32.xlu0 %v392, 38
        %v1227 = vpop.permute.xlu0 %1226
        %1228 = vrot.lane.b32.xlu0 %v393, 38
        %v1229 = vpop.permute.xlu0 %1228
        %1230 = vrot.lane.b32.xlu0 %v394, 38
        %v1231 = vpop.permute.xlu0 %1230
        %1232 = vrot.lane.b32.xlu0 %v395, 38
        %v1233 = vpop.permute.xlu0 %1232
        %1234 = vrot.lane.b32.xlu0 %v396, 38
        %v1235 = vpop.permute.xlu0 %1234
        %1236 = vrot.lane.b32.xlu0 %v397, 38
        %v1237 = vpop.permute.xlu0 %1236
        %1238 = vrot.lane.b32.xlu0 %v398, 38
        %v1239 = vpop.permute.xlu0 %1238
        %1240 = vrot.lane.b32.xlu0 %v399, 38
        %v1241 = vpop.permute.xlu0 %1240
        %vm1242 = vcmp.lt.s32.totalorder %v417, 38
        %v1243 = vsel %vm1242, %v1239, %v1241
        %v1244 = vsel %vm1242, %v1237, %v1239
        %v1245 = vsel %vm1242, %v1235, %v1237
        %v1246 = vsel %vm1242, %v1233, %v1235
        %v1247 = vsel %vm1242, %v1231, %v1233
        %v1248 = vsel %vm1242, %v1229, %v1231
        %v1249 = vsel %vm1242, %v1227, %v1229
        %v1250 = vsel %vm1242, %v1241, %v1227
        %1251 = vset.pattern.permute.xlu0 19
        %1252 = vperm.xlu0 %1251, %v427
        %v1253 = vpop.permute.xlu0 %1252
        %v1255 = vmul.f32 %v1249, %v1253
        %v1256 = vmul.f32 %v1248, %v1253
        %v1257 = vmul.f32 %v1247, %v1253
        %v1258 = vmul.f32 %v1246, %v1253
        %v1259 = vmul.f32 %v1245, %v1253
        %v1260 = vmul.f32 %v1244, %v1253
        %v1261 = vmul.f32 %v1243, %v1253
        %v1262 = vmul.f32 %v1250, %v1253
        %v1263 = vadd.f32 %v1218, %v1255
        %v1264 = vadd.f32 %v1219, %v1256
        %v1265 = vadd.f32 %v1220, %v1257
        %v1266 = vadd.f32 %v1221, %v1258
        %v1267 = vadd.f32 %v1222, %v1259
        %v1268 = vadd.f32 %v1223, %v1260
        %v1269 = vadd.f32 %v1224, %v1261
        %v1270 = vadd.f32 %v1225, %v1262
        %1271 = vrot.lane.b32.xlu0 %v392, 37
        %v1272 = vpop.permute.xlu0 %1271
        %1273 = vrot.lane.b32.xlu0 %v393, 37
        %v1274 = vpop.permute.xlu0 %1273
        %1275 = vrot.lane.b32.xlu0 %v394, 37
        %v1276 = vpop.permute.xlu0 %1275
        %1277 = vrot.lane.b32.xlu0 %v395, 37
        %v1278 = vpop.permute.xlu0 %1277
        %1279 = vrot.lane.b32.xlu0 %v396, 37
        %v1280 = vpop.permute.xlu0 %1279
        %1281 = vrot.lane.b32.xlu0 %v397, 37
        %v1282 = vpop.permute.xlu0 %1281
        %1283 = vrot.lane.b32.xlu0 %v398, 37
        %v1284 = vpop.permute.xlu0 %1283
        %1285 = vrot.lane.b32.xlu0 %v399, 37
        %v1286 = vpop.permute.xlu0 %1285
        %vm1287 = vcmp.lt.s32.totalorder %v417, 37
        %v1288 = vsel %vm1287, %v1284, %v1286
        %v1289 = vsel %vm1287, %v1282, %v1284
        %v1290 = vsel %vm1287, %v1280, %v1282
        %v1291 = vsel %vm1287, %v1278, %v1280
        %v1292 = vsel %vm1287, %v1276, %v1278
        %v1293 = vsel %vm1287, %v1274, %v1276
        %v1294 = vsel %vm1287, %v1272, %v1274
        %v1295 = vsel %vm1287, %v1286, %v1272
        %1296 = vset.pattern.permute.xlu0 20
        %1297 = vperm.xlu0 %1296, %v427
        %v1298 = vpop.permute.xlu0 %1297
        %v1300 = vmul.f32 %v1294, %v1298
        %v1301 = vmul.f32 %v1293, %v1298
        %v1302 = vmul.f32 %v1292, %v1298
        %v1303 = vmul.f32 %v1291, %v1298
        %v1304 = vmul.f32 %v1290, %v1298
        %v1305 = vmul.f32 %v1289, %v1298
        %v1306 = vmul.f32 %v1288, %v1298
        %v1307 = vmul.f32 %v1295, %v1298
        %v1308 = vadd.f32 %v1263, %v1300
        %v1309 = vadd.f32 %v1264, %v1301
        %v1310 = vadd.f32 %v1265, %v1302
        %v1311 = vadd.f32 %v1266, %v1303
        %v1312 = vadd.f32 %v1267, %v1304
        %v1313 = vadd.f32 %v1268, %v1305
        %v1314 = vadd.f32 %v1269, %v1306
        %v1315 = vadd.f32 %v1270, %v1307
        %1316 = vrot.lane.b32.xlu0 %v392, 29
        %v1317 = vpop.permute.xlu0 %1316
        %1318 = vrot.lane.b32.xlu0 %v393, 29
        %v1319 = vpop.permute.xlu0 %1318
        %1320 = vrot.lane.b32.xlu0 %v394, 29
        %v1321 = vpop.permute.xlu0 %1320
        %1322 = vrot.lane.b32.xlu0 %v395, 29
        %v1323 = vpop.permute.xlu0 %1322
        %1324 = vrot.lane.b32.xlu0 %v396, 29
        %v1325 = vpop.permute.xlu0 %1324
        %1326 = vrot.lane.b32.xlu0 %v397, 29
        %v1327 = vpop.permute.xlu0 %1326
        %1328 = vrot.lane.b32.xlu0 %v398, 29
        %v1329 = vpop.permute.xlu0 %1328
        %1330 = vrot.lane.b32.xlu0 %v399, 29
        %v1331 = vpop.permute.xlu0 %1330
        %vm1332 = vcmp.lt.s32.totalorder %v417, 29
        %v1333 = vsel %vm1332, %v1329, %v1331
        %v1334 = vsel %vm1332, %v1327, %v1329
        %v1335 = vsel %vm1332, %v1325, %v1327
        %v1336 = vsel %vm1332, %v1323, %v1325
        %v1337 = vsel %vm1332, %v1321, %v1323
        %v1338 = vsel %vm1332, %v1319, %v1321
        %v1339 = vsel %vm1332, %v1317, %v1319
        %v1340 = vsel %vm1332, %v1331, %v1317
        %1341 = vset.pattern.permute.xlu0 21
        %1342 = vperm.xlu0 %1341, %v427
        %v1343 = vpop.permute.xlu0 %1342
        %v1345 = vmul.f32 %v1339, %v1343
        %v1346 = vmul.f32 %v1338, %v1343
        %v1347 = vmul.f32 %v1337, %v1343
        %v1348 = vmul.f32 %v1336, %v1343
        %v1349 = vmul.f32 %v1335, %v1343
        %v1350 = vmul.f32 %v1334, %v1343
        %v1351 = vmul.f32 %v1333, %v1343
        %v1352 = vmul.f32 %v1340, %v1343
        %v1353 = vadd.f32 %v1308, %v1345
        %v1354 = vadd.f32 %v1309, %v1346
        %v1355 = vadd.f32 %v1310, %v1347
        %v1356 = vadd.f32 %v1311, %v1348
        %v1357 = vadd.f32 %v1312, %v1349
        %v1358 = vadd.f32 %v1313, %v1350
        %v1359 = vadd.f32 %v1314, %v1351
        %v1360 = vadd.f32 %v1315, %v1352
        %1361 = vrot.lane.b32.xlu0 %v392, 28
        %v1362 = vpop.permute.xlu0 %1361
        %1363 = vrot.lane.b32.xlu0 %v393, 28
        %v1364 = vpop.permute.xlu0 %1363
        %1365 = vrot.lane.b32.xlu0 %v394, 28
        %v1366 = vpop.permute.xlu0 %1365
        %1367 = vrot.lane.b32.xlu0 %v395, 28
        %v1368 = vpop.permute.xlu0 %1367
        %1369 = vrot.lane.b32.xlu0 %v396, 28
        %v1370 = vpop.permute.xlu0 %1369
        %1371 = vrot.lane.b32.xlu0 %v397, 28
        %v1372 = vpop.permute.xlu0 %1371
        %1373 = vrot.lane.b32.xlu0 %v398, 28
        %v1374 = vpop.permute.xlu0 %1373
        %1375 = vrot.lane.b32.xlu0 %v399, 28
        %v1376 = vpop.permute.xlu0 %1375
        %vm1377 = vcmp.lt.s32.totalorder %v417, 28
        %v1378 = vsel %vm1377, %v1374, %v1376
        %v1379 = vsel %vm1377, %v1372, %v1374
        %v1380 = vsel %vm1377, %v1370, %v1372
        %v1381 = vsel %vm1377, %v1368, %v1370
        %v1382 = vsel %vm1377, %v1366, %v1368
        %v1383 = vsel %vm1377, %v1364, %v1366
        %v1384 = vsel %vm1377, %v1362, %v1364
        %v1385 = vsel %vm1377, %v1376, %v1362
        %1386 = vset.pattern.permute.xlu0 22
        %1387 = vperm.xlu0 %1386, %v427
        %v1388 = vpop.permute.xlu0 %1387
        %v1390 = vmul.f32 %v1384, %v1388
        %v1391 = vmul.f32 %v1383, %v1388
        %v1392 = vmul.f32 %v1382, %v1388
        %v1393 = vmul.f32 %v1381, %v1388
        %v1394 = vmul.f32 %v1380, %v1388
        %v1395 = vmul.f32 %v1379, %v1388
        %v1396 = vmul.f32 %v1378, %v1388
        %v1397 = vmul.f32 %v1385, %v1388
        %v1398 = vadd.f32 %v1353, %v1390
        %v1399 = vadd.f32 %v1354, %v1391
        %v1400 = vadd.f32 %v1355, %v1392
        %v1401 = vadd.f32 %v1356, %v1393
        %v1402 = vadd.f32 %v1357, %v1394
        %v1403 = vadd.f32 %v1358, %v1395
        %v1404 = vadd.f32 %v1359, %v1396
        %v1405 = vadd.f32 %v1360, %v1397
        %1406 = vrot.lane.b32.xlu0 %v392, 27
        %v1407 = vpop.permute.xlu0 %1406
        %1408 = vrot.lane.b32.xlu0 %v393, 27
        %v1409 = vpop.permute.xlu0 %1408
        %1410 = vrot.lane.b32.xlu0 %v394, 27
        %v1411 = vpop.permute.xlu0 %1410
        %1412 = vrot.lane.b32.xlu0 %v395, 27
        %v1413 = vpop.permute.xlu0 %1412
        %1414 = vrot.lane.b32.xlu0 %v396, 27
        %v1415 = vpop.permute.xlu0 %1414
        %1416 = vrot.lane.b32.xlu0 %v397, 27
        %v1417 = vpop.permute.xlu0 %1416
        %1418 = vrot.lane.b32.xlu0 %v398, 27
        %v1419 = vpop.permute.xlu0 %1418
        %1420 = vrot.lane.b32.xlu0 %v399, 27
        %v1421 = vpop.permute.xlu0 %1420
        %vm1422 = vcmp.lt.s32.totalorder %v417, 27
        %v1423 = vsel %vm1422, %v1419, %v1421
        %v1424 = vsel %vm1422, %v1417, %v1419
        %v1425 = vsel %vm1422, %v1415, %v1417
        %v1426 = vsel %vm1422, %v1413, %v1415
        %v1427 = vsel %vm1422, %v1411, %v1413
        %v1428 = vsel %vm1422, %v1409, %v1411
        %v1429 = vsel %vm1422, %v1407, %v1409
        %v1430 = vsel %vm1422, %v1421, %v1407
        %1431 = vset.pattern.permute.xlu0 23
        %1432 = vperm.xlu0 %1431, %v427
        %v1433 = vpop.permute.xlu0 %1432
        %v1435 = vmul.f32 %v1429, %v1433
        %v1436 = vmul.f32 %v1428, %v1433
        %v1437 = vmul.f32 %v1427, %v1433
        %v1438 = vmul.f32 %v1426, %v1433
        %v1439 = vmul.f32 %v1425, %v1433
        %v1440 = vmul.f32 %v1424, %v1433
        %v1441 = vmul.f32 %v1423, %v1433
        %v1442 = vmul.f32 %v1430, %v1433
        %v1443 = vadd.f32 %v1398, %v1435
        %v1444 = vadd.f32 %v1399, %v1436
        %v1445 = vadd.f32 %v1400, %v1437
        %v1446 = vadd.f32 %v1401, %v1438
        %v1447 = vadd.f32 %v1402, %v1439
        %v1448 = vadd.f32 %v1403, %v1440
        %v1449 = vadd.f32 %v1404, %v1441
        %v1450 = vadd.f32 %v1405, %v1442
        %1451 = vrot.lane.b32.xlu0 %v392, 19
        %v1452 = vpop.permute.xlu0 %1451
        %1453 = vrot.lane.b32.xlu0 %v393, 19
        %v1454 = vpop.permute.xlu0 %1453
        %1455 = vrot.lane.b32.xlu0 %v394, 19
        %v1456 = vpop.permute.xlu0 %1455
        %1457 = vrot.lane.b32.xlu0 %v395, 19
        %v1458 = vpop.permute.xlu0 %1457
        %1459 = vrot.lane.b32.xlu0 %v396, 19
        %v1460 = vpop.permute.xlu0 %1459
        %1461 = vrot.lane.b32.xlu0 %v397, 19
        %v1462 = vpop.permute.xlu0 %1461
        %1463 = vrot.lane.b32.xlu0 %v398, 19
        %v1464 = vpop.permute.xlu0 %1463
        %1465 = vrot.lane.b32.xlu0 %v399, 19
        %v1466 = vpop.permute.xlu0 %1465
        %vm1467 = vcmp.lt.s32.totalorder %v417, 19
        %v1468 = vsel %vm1467, %v1464, %v1466
        %v1469 = vsel %vm1467, %v1462, %v1464
        %v1470 = vsel %vm1467, %v1460, %v1462
        %v1471 = vsel %vm1467, %v1458, %v1460
        %v1472 = vsel %vm1467, %v1456, %v1458
        %v1473 = vsel %vm1467, %v1454, %v1456
        %v1474 = vsel %vm1467, %v1452, %v1454
        %v1475 = vsel %vm1467, %v1466, %v1452
        %1476 = vset.pattern.permute.xlu0 24
        %1477 = vperm.xlu0 %1476, %v427
        %v1478 = vpop.permute.xlu0 %1477
        %v1480 = vmul.f32 %v1474, %v1478
        %v1481 = vmul.f32 %v1473, %v1478
        %v1482 = vmul.f32 %v1472, %v1478
        %v1483 = vmul.f32 %v1471, %v1478
        %v1484 = vmul.f32 %v1470, %v1478
        %v1485 = vmul.f32 %v1469, %v1478
        %v1486 = vmul.f32 %v1468, %v1478
        %v1487 = vmul.f32 %v1475, %v1478
        %v1488 = vadd.f32 %v1443, %v1480
        %v1489 = vadd.f32 %v1444, %v1481
        %v1490 = vadd.f32 %v1445, %v1482
        %v1491 = vadd.f32 %v1446, %v1483
        %v1492 = vadd.f32 %v1447, %v1484
        %v1493 = vadd.f32 %v1448, %v1485
        %v1494 = vadd.f32 %v1449, %v1486
        %v1495 = vadd.f32 %v1450, %v1487
        %1496 = vrot.lane.b32.xlu0 %v392, 18
        %v1497 = vpop.permute.xlu0 %1496
        %1498 = vrot.lane.b32.xlu0 %v393, 18
        %v1499 = vpop.permute.xlu0 %1498
        %1500 = vrot.lane.b32.xlu0 %v394, 18
        %v1501 = vpop.permute.xlu0 %1500
        %1502 = vrot.lane.b32.xlu0 %v395, 18
        %v1503 = vpop.permute.xlu0 %1502
        %1504 = vrot.lane.b32.xlu0 %v396, 18
        %v1505 = vpop.permute.xlu0 %1504
        %1506 = vrot.lane.b32.xlu0 %v397, 18
        %v1507 = vpop.permute.xlu0 %1506
        %1508 = vrot.lane.b32.xlu0 %v398, 18
        %v1509 = vpop.permute.xlu0 %1508
        %1510 = vrot.lane.b32.xlu0 %v399, 18
        %v1511 = vpop.permute.xlu0 %1510
        %vm1512 = vcmp.lt.s32.totalorder %v417, 18
        %v1513 = vsel %vm1512, %v1509, %v1511
        %v1514 = vsel %vm1512, %v1507, %v1509
        %v1515 = vsel %vm1512, %v1505, %v1507
        %v1516 = vsel %vm1512, %v1503, %v1505
        %v1517 = vsel %vm1512, %v1501, %v1503
        %v1518 = vsel %vm1512, %v1499, %v1501
        %v1519 = vsel %vm1512, %v1497, %v1499
        %v1520 = vsel %vm1512, %v1511, %v1497
        %1521 = vset.pattern.permute.xlu0 25
        %1522 = vperm.xlu0 %1521, %v427
        %v1523 = vpop.permute.xlu0 %1522
        %v1525 = vmul.f32 %v1519, %v1523
        %v1526 = vmul.f32 %v1518, %v1523
        %v1527 = vmul.f32 %v1517, %v1523
        %v1528 = vmul.f32 %v1516, %v1523
        %v1529 = vmul.f32 %v1515, %v1523
        %v1530 = vmul.f32 %v1514, %v1523
        %v1531 = vmul.f32 %v1513, %v1523
        %v1532 = vmul.f32 %v1520, %v1523
        %v1533 = vadd.f32 %v1488, %v1525
        %v1534 = vadd.f32 %v1489, %v1526
        %v1535 = vadd.f32 %v1490, %v1527
        %v1536 = vadd.f32 %v1491, %v1528
        %v1537 = vadd.f32 %v1492, %v1529
        %v1538 = vadd.f32 %v1493, %v1530
        %v1539 = vadd.f32 %v1494, %v1531
        %v1540 = vadd.f32 %v1495, %v1532
        %1541 = vrot.lane.b32.xlu0 %v392, 17
        %v1542 = vpop.permute.xlu0 %1541
        %1543 = vrot.lane.b32.xlu0 %v393, 17
        %v1544 = vpop.permute.xlu0 %1543
        %1545 = vrot.lane.b32.xlu0 %v394, 17
        %v1546 = vpop.permute.xlu0 %1545
        %1547 = vrot.lane.b32.xlu0 %v395, 17
        %v1548 = vpop.permute.xlu0 %1547
        %1549 = vrot.lane.b32.xlu0 %v396, 17
        %v1550 = vpop.permute.xlu0 %1549
        %1551 = vrot.lane.b32.xlu0 %v397, 17
        %v1552 = vpop.permute.xlu0 %1551
        %1553 = vrot.lane.b32.xlu0 %v398, 17
        %v1554 = vpop.permute.xlu0 %1553
        %1555 = vrot.lane.b32.xlu0 %v399, 17
        %v1556 = vpop.permute.xlu0 %1555
        %vm1557 = vcmp.lt.s32.totalorder %v417, 17
        %v1558 = vsel %vm1557, %v1554, %v1556
        %v1559 = vsel %vm1557, %v1552, %v1554
        %v1560 = vsel %vm1557, %v1550, %v1552
        %v1561 = vsel %vm1557, %v1548, %v1550
        %v1562 = vsel %vm1557, %v1546, %v1548
        %v1563 = vsel %vm1557, %v1544, %v1546
        %v1564 = vsel %vm1557, %v1542, %v1544
        %v1565 = vsel %vm1557, %v1556, %v1542
        %1566 = vset.pattern.permute.xlu0 26
        %1567 = vperm.xlu0 %1566, %v427
        %v1568 = vpop.permute.xlu0 %1567
        %v1570 = vmul.f32 %v1564, %v1568
        %v1571 = vmul.f32 %v1563, %v1568
        %v1572 = vmul.f32 %v1562, %v1568
        %v1573 = vmul.f32 %v1561, %v1568
        %v1574 = vmul.f32 %v1560, %v1568
        %v1575 = vmul.f32 %v1559, %v1568
        %v1576 = vmul.f32 %v1558, %v1568
        %v1577 = vmul.f32 %v1565, %v1568
        %v1578 = vadd.f32 %v1533, %v1570
        %v1579 = vadd.f32 %v1534, %v1571
        %v1580 = vadd.f32 %v1535, %v1572
        %v1581 = vadd.f32 %v1536, %v1573
        %v1582 = vadd.f32 %v1537, %v1574
        %v1583 = vadd.f32 %v1538, %v1575
        %v1584 = vadd.f32 %v1539, %v1576
        %v1585 = vadd.f32 %v1540, %v1577
        %v1586 = vld [vmem:[%s3] sm:$0xf]
        %v1587 = vpack.c.bf16 %v1578, %v1578
        %v1588 = vpack.c.bf16 %v1579, %v1579
        %v1589 = vpack.c.bf16 %v1580, %v1580
        %v1590 = vpack.c.bf16 %v1581, %v1581
        %v1591 = vpack.c.bf16 %v1582, %v1582
        %v1592 = vpack.c.bf16 %v1583, %v1583
        %v1593 = vpack.c.bf16 %v1584, %v1584
        %v1594 = vpack.c.bf16 %v1585, %v1585
        %v1595 = vld [vmem:[%s7] sm:$0xff]
        %1597 = vset.pattern.permute.xlu0 0
        %1598 = vperm.xlu0 %1597, %v1595
        %v1599 = vpop.permute.xlu0 %1598
        %vm1601 = vcmask 64512
        %v1603 = vsel %vm1601, %v1586, 0
        %vm1605 = vcmask 1043456
        %v1607 = vsel %vm1605, %v1587, 0
        %v1610 = vsel %vm1605, %v1588, 0
        %v1613 = vsel %vm1605, %v1589, 0
        %v1616 = vsel %vm1605, %v1590, 0
        %v1619 = vsel %vm1605, %v1591, 0
        %v1622 = vsel %vm1605, %v1592, 0
        %v1625 = vsel %vm1605, %v1593, 0
        %v1628 = vsel %vm1605, %v1594, 0
        %1630 = vmatpush.bf16.msra.mxu0 0
        %1631 = vmatpush.bf16.msra.mxu0 0
        %1632 = vmatpush.bf16.msra.mxu0 0
        %1633 = vmatpush.bf16.msra.mxu0 0
        %1634 = vmatpush.bf16.msra.mxu0 0
        %1635 = vmatpush.bf16.msra.mxu0 0
        %1636 = vmatpush.bf16.msra.mxu0 0
        %1637 = vmatpush.bf16.msra.mxu0 %v1607
        %1638 = vmatmul.bf16.gmra.mxu0 %v1603
        %v1639 = vpop.f32.mrf.mxu0
        %v1640 = vadd.f32 %v1599, %v1639
        %v1641 = vpop.f32.mrf.mxu0
        %1642 = vdwg.mxu0
        %1643 = vmatpush.bf16.msra.mxu0 0
        %1644 = vmatpush.bf16.msra.mxu0 0
        %1645 = vmatpush.bf16.msra.mxu0 0
        %1646 = vmatpush.bf16.msra.mxu0 0
        %1647 = vmatpush.bf16.msra.mxu0 0
        %1648 = vmatpush.bf16.msra.mxu0 0
        %1649 = vmatpush.bf16.msra.mxu0 0
        %1650 = vmatpush.bf16.msra.mxu0 %v1610
        %1651 = vmatmul.bf16.gmra.mxu0 %v1603
        %v1652 = vpop.f32.mrf.mxu0
        %v1653 = vadd.f32 %v1599, %v1652
        %v1654 = vpop.f32.mrf.mxu0
        %1655 = vdwg.mxu0
        %1656 = vmatpush.bf16.msra.mxu0 0
        %1657 = vmatpush.bf16.msra.mxu0 0
        %1658 = vmatpush.bf16.msra.mxu0 0
        %1659 = vmatpush.bf16.msra.mxu0 0
        %1660 = vmatpush.bf16.msra.mxu0 0
        %1661 = vmatpush.bf16.msra.mxu0 0
        %1662 = vmatpush.bf16.msra.mxu0 0
        %1663 = vmatpush.bf16.msra.mxu0 %v1613
        %1664 = vmatmul.bf16.gmra.mxu0 %v1603
        %v1665 = vpop.f32.mrf.mxu0
        %v1666 = vadd.f32 %v1599, %v1665
        %v1667 = vpop.f32.mrf.mxu0
        %1668 = vdwg.mxu0
        %1669 = vmatpush.bf16.msra.mxu0 0
        %1670 = vmatpush.bf16.msra.mxu0 0
        %1671 = vmatpush.bf16.msra.mxu0 0
        %1672 = vmatpush.bf16.msra.mxu0 0
        %1673 = vmatpush.bf16.msra.mxu0 0
        %1674 = vmatpush.bf16.msra.mxu0 0
        %1675 = vmatpush.bf16.msra.mxu0 0
        %1676 = vmatpush.bf16.msra.mxu0 %v1616
        %1677 = vmatmul.bf16.gmra.mxu0 %v1603
        %v1678 = vpop.f32.mrf.mxu0
        %v1679 = vadd.f32 %v1599, %v1678
        %v1680 = vpop.f32.mrf.mxu0
        %1681 = vdwg.mxu0
        %1682 = vmatpush.bf16.msra.mxu0 0
        %1683 = vmatpush.bf16.msra.mxu0 0
        %1684 = vmatpush.bf16.msra.mxu0 0
        %1685 = vmatpush.bf16.msra.mxu0 0
        %1686 = vmatpush.bf16.msra.mxu0 0
        %1687 = vmatpush.bf16.msra.mxu0 0
        %1688 = vmatpush.bf16.msra.mxu0 0
        %1689 = vmatpush.bf16.msra.mxu0 %v1619
        %1690 = vmatmul.bf16.gmra.mxu0 %v1603
        %v1691 = vpop.f32.mrf.mxu0
        %v1692 = vadd.f32 %v1599, %v1691
        %v1693 = vpop.f32.mrf.mxu0
        %1694 = vdwg.mxu0
        %1695 = vmatpush.bf16.msra.mxu0 0
        %1696 = vmatpush.bf16.msra.mxu0 0
        %1697 = vmatpush.bf16.msra.mxu0 0
        %1698 = vmatpush.bf16.msra.mxu0 0
        %1699 = vmatpush.bf16.msra.mxu0 0
        %1700 = vmatpush.bf16.msra.mxu0 0
        %1701 = vmatpush.bf16.msra.mxu0 0
        %1702 = vmatpush.bf16.msra.mxu0 %v1622
        %1703 = vmatmul.bf16.gmra.mxu0 %v1603
        %v1704 = vpop.f32.mrf.mxu0
        %v1705 = vadd.f32 %v1599, %v1704
        %v1706 = vpop.f32.mrf.mxu0
        %1707 = vdwg.mxu0
        %1708 = vmatpush.bf16.msra.mxu0 0
        %1709 = vmatpush.bf16.msra.mxu0 0
        %1710 = vmatpush.bf16.msra.mxu0 0
        %1711 = vmatpush.bf16.msra.mxu0 0
        %1712 = vmatpush.bf16.msra.mxu0 0
        %1713 = vmatpush.bf16.msra.mxu0 0
        %1714 = vmatpush.bf16.msra.mxu0 0
        %1715 = vmatpush.bf16.msra.mxu0 %v1625
        %1716 = vmatmul.bf16.gmra.mxu0 %v1603
        %v1717 = vpop.f32.mrf.mxu0
        %v1718 = vadd.f32 %v1599, %v1717
        %v1719 = vpop.f32.mrf.mxu0
        %1720 = vdwg.mxu0
        %1721 = vmatpush.bf16.msra.mxu0 0
        %1722 = vmatpush.bf16.msra.mxu0 0
        %1723 = vmatpush.bf16.msra.mxu0 0
        %1724 = vmatpush.bf16.msra.mxu0 0
        %1725 = vmatpush.bf16.msra.mxu0 0
        %1726 = vmatpush.bf16.msra.mxu0 0
        %1727 = vmatpush.bf16.msra.mxu0 0
        %1728 = vmatpush.bf16.msra.mxu0 %v1628
        %1729 = vmatmul.bf16.gmra.mxu0 %v1603
        %v1730 = vpop.f32.mrf.mxu0
        %v1731 = vadd.f32 %v1599, %v1730
        %v1732 = vpop.f32.mrf.mxu0
        %1733 = vdwg.mxu0
        %v1735 = vperm.slane %v391, 0
        %v1736 = vperm.slane %v391, 1
        %v1737 = vperm.slane %v391, 2
        %v1738 = vperm.slane %v391, 3
        %v1739 = vperm.slane %v391, 4
        %v1740 = vperm.slane %v391, 5
        %v1741 = vperm.slane %v391, 6
        %v1742 = vperm.slane %v391, 7
        %v1751 = vmul.f32 %v1640, %v1735
        %v1752 = vmul.f32 %v1653, %v1736
        %v1753 = vmul.f32 %v1666, %v1737
        %v1754 = vmul.f32 %v1679, %v1738
        %v1755 = vmul.f32 %v1692, %v1739
        %v1756 = vmul.f32 %v1705, %v1740
        %v1757 = vmul.f32 %v1718, %v1741
        %v1758 = vmul.f32 %v1731, %v1742
        %v1759 = vmax.f32 %v1751, 0.0
        %v1760 = vmax.f32 %v1752, 0.0
        %v1761 = vmax.f32 %v1753, 0.0
        %v1762 = vmax.f32 %v1754, 0.0
        %v1763 = vmax.f32 %v1755, 0.0
        %v1764 = vmax.f32 %v1756, 0.0
        %v1765 = vmax.f32 %v1757, 0.0
        %v1766 = vmax.f32 %v1758, 0.0
        %1767 = vrot.lane.b32.xlu0 %v1759, 111
        %v1768 = vpop.permute.xlu0 %1767
        %1769 = vrot.lane.b32.xlu0 %v1760, 111
        %v1770 = vpop.permute.xlu0 %1769
        %1771 = vrot.lane.b32.xlu0 %v1761, 111
        %v1772 = vpop.permute.xlu0 %1771
        %1773 = vrot.lane.b32.xlu0 %v1762, 111
        %v1774 = vpop.permute.xlu0 %1773
        %1775 = vrot.lane.b32.xlu0 %v1763, 111
        %v1776 = vpop.permute.xlu0 %1775
        %1777 = vrot.lane.b32.xlu0 %v1764, 111
        %v1778 = vpop.permute.xlu0 %1777
        %1779 = vrot.lane.b32.xlu0 %v1765, 111
        %v1780 = vpop.permute.xlu0 %1779
        %1781 = vrot.lane.b32.xlu0 %v1766, 111
        %v1782 = vpop.permute.xlu0 %1781
        %v1783 = vsel %vm418, %v1780, %v1782
        %v1784 = vsel %vm418, %v1778, %v1780
        %v1785 = vsel %vm418, %v1776, %v1778
        %v1786 = vsel %vm418, %v1774, %v1776
        %v1787 = vsel %vm418, %v1772, %v1774
        %v1788 = vsel %vm418, %v1770, %v1772
        %v1789 = vsel %vm418, %v1768, %v1770
        %v1790 = vsel %vm418, %v1782, %v1768
        %v1791 = vld [vmem:[#allocation7] sm:$0xff]
        %1793 = vset.pattern.permute.xlu0 0
        %1794 = vperm.xlu0 %1793, %v1791
        %v1795 = vpop.permute.xlu0 %1794
        %v1797 = vmul.f32 %v1790, %v1795
        %v1798 = vmul.f32 %v1789, %v1795
        %v1799 = vmul.f32 %v1788, %v1795
        %v1800 = vmul.f32 %v1787, %v1795
        %v1801 = vmul.f32 %v1786, %v1795
        %v1802 = vmul.f32 %v1785, %v1795
        %v1803 = vmul.f32 %v1784, %v1795
        %v1804 = vmul.f32 %v1783, %v1795
        %1805 = vrot.lane.b32.xlu0 %v1759, 110
        %v1806 = vpop.permute.xlu0 %1805
        %1807 = vrot.lane.b32.xlu0 %v1760, 110
        %v1808 = vpop.permute.xlu0 %1807
        %1809 = vrot.lane.b32.xlu0 %v1761, 110
        %v1810 = vpop.permute.xlu0 %1809
        %1811 = vrot.lane.b32.xlu0 %v1762, 110
        %v1812 = vpop.permute.xlu0 %1811
        %1813 = vrot.lane.b32.xlu0 %v1763, 110
        %v1814 = vpop.permute.xlu0 %1813
        %1815 = vrot.lane.b32.xlu0 %v1764, 110
        %v1816 = vpop.permute.xlu0 %1815
        %1817 = vrot.lane.b32.xlu0 %v1765, 110
        %v1818 = vpop.permute.xlu0 %1817
        %1819 = vrot.lane.b32.xlu0 %v1766, 110
        %v1820 = vpop.permute.xlu0 %1819
        %v1821 = vsel %vm457, %v1818, %v1820
        %v1822 = vsel %vm457, %v1816, %v1818
        %v1823 = vsel %vm457, %v1814, %v1816
        %v1824 = vsel %vm457, %v1812, %v1814
        %v1825 = vsel %vm457, %v1810, %v1812
        %v1826 = vsel %vm457, %v1808, %v1810
        %v1827 = vsel %vm457, %v1806, %v1808
        %v1828 = vsel %vm457, %v1820, %v1806
        %1829 = vset.pattern.permute.xlu0 1
        %1830 = vperm.xlu0 %1829, %v1791
        %v1831 = vpop.permute.xlu0 %1830
        %v1833 = vmul.f32 %v1828, %v1831
        %v1834 = vmul.f32 %v1827, %v1831
        %v1835 = vmul.f32 %v1826, %v1831
        %v1836 = vmul.f32 %v1825, %v1831
        %v1837 = vmul.f32 %v1824, %v1831
        %v1838 = vmul.f32 %v1823, %v1831
        %v1839 = vmul.f32 %v1822, %v1831
        %v1840 = vmul.f32 %v1821, %v1831
        %v1841 = vadd.f32 %v1797, %v1833
        %v1842 = vadd.f32 %v1798, %v1834
        %v1843 = vadd.f32 %v1799, %v1835
        %v1844 = vadd.f32 %v1800, %v1836
        %v1845 = vadd.f32 %v1801, %v1837
        %v1846 = vadd.f32 %v1802, %v1838
        %v1847 = vadd.f32 %v1803, %v1839
        %v1848 = vadd.f32 %v1804, %v1840
        %1849 = vrot.lane.b32.xlu0 %v1759, 109
        %v1850 = vpop.permute.xlu0 %1849
        %1851 = vrot.lane.b32.xlu0 %v1760, 109
        %v1852 = vpop.permute.xlu0 %1851
        %1853 = vrot.lane.b32.xlu0 %v1761, 109
        %v1854 = vpop.permute.xlu0 %1853
        %1855 = vrot.lane.b32.xlu0 %v1762, 109
        %v1856 = vpop.permute.xlu0 %1855
        %1857 = vrot.lane.b32.xlu0 %v1763, 109
        %v1858 = vpop.permute.xlu0 %1857
        %1859 = vrot.lane.b32.xlu0 %v1764, 109
        %v1860 = vpop.permute.xlu0 %1859
        %1861 = vrot.lane.b32.xlu0 %v1765, 109
        %v1862 = vpop.permute.xlu0 %1861
        %1863 = vrot.lane.b32.xlu0 %v1766, 109
        %v1864 = vpop.permute.xlu0 %1863
        %v1865 = vsel %vm502, %v1862, %v1864
        %v1866 = vsel %vm502, %v1860, %v1862
        %v1867 = vsel %vm502, %v1858, %v1860
        %v1868 = vsel %vm502, %v1856, %v1858
        %v1869 = vsel %vm502, %v1854, %v1856
        %v1870 = vsel %vm502, %v1852, %v1854
        %v1871 = vsel %vm502, %v1850, %v1852
        %v1872 = vsel %vm502, %v1864, %v1850
        %1873 = vset.pattern.permute.xlu0 2
        %1874 = vperm.xlu0 %1873, %v1791
        %v1875 = vpop.permute.xlu0 %1874
        %v1877 = vmul.f32 %v1872, %v1875
        %v1878 = vmul.f32 %v1871, %v1875
        %v1879 = vmul.f32 %v1870, %v1875
        %v1880 = vmul.f32 %v1869, %v1875
        %v1881 = vmul.f32 %v1868, %v1875
        %v1882 = vmul.f32 %v1867, %v1875
        %v1883 = vmul.f32 %v1866, %v1875
        %v1884 = vmul.f32 %v1865, %v1875
        %v1885 = vadd.f32 %v1841, %v1877
        %v1886 = vadd.f32 %v1842, %v1878
        %v1887 = vadd.f32 %v1843, %v1879
        %v1888 = vadd.f32 %v1844, %v1880
        %v1889 = vadd.f32 %v1845, %v1881
        %v1890 = vadd.f32 %v1846, %v1882
        %v1891 = vadd.f32 %v1847, %v1883
        %v1892 = vadd.f32 %v1848, %v1884
        %1893 = vrot.lane.b32.xlu0 %v1759, 101
        %v1894 = vpop.permute.xlu0 %1893
        %1895 = vrot.lane.b32.xlu0 %v1760, 101
        %v1896 = vpop.permute.xlu0 %1895
        %1897 = vrot.lane.b32.xlu0 %v1761, 101
        %v1898 = vpop.permute.xlu0 %1897
        %1899 = vrot.lane.b32.xlu0 %v1762, 101
        %v1900 = vpop.permute.xlu0 %1899
        %1901 = vrot.lane.b32.xlu0 %v1763, 101
        %v1902 = vpop.permute.xlu0 %1901
        %1903 = vrot.lane.b32.xlu0 %v1764, 101
        %v1904 = vpop.permute.xlu0 %1903
        %1905 = vrot.lane.b32.xlu0 %v1765, 101
        %v1906 = vpop.permute.xlu0 %1905
        %1907 = vrot.lane.b32.xlu0 %v1766, 101
        %v1908 = vpop.permute.xlu0 %1907
        %v1909 = vsel %vm547, %v1906, %v1908
        %v1910 = vsel %vm547, %v1904, %v1906
        %v1911 = vsel %vm547, %v1902, %v1904
        %v1912 = vsel %vm547, %v1900, %v1902
        %v1913 = vsel %vm547, %v1898, %v1900
        %v1914 = vsel %vm547, %v1896, %v1898
        %v1915 = vsel %vm547, %v1894, %v1896
        %v1916 = vsel %vm547, %v1908, %v1894
        %1917 = vset.pattern.permute.xlu0 3
        %1918 = vperm.xlu0 %1917, %v1791
        %v1919 = vpop.permute.xlu0 %1918
        %v1921 = vmul.f32 %v1916, %v1919
        %v1922 = vmul.f32 %v1915, %v1919
        %v1923 = vmul.f32 %v1914, %v1919
        %v1924 = vmul.f32 %v1913, %v1919
        %v1925 = vmul.f32 %v1912, %v1919
        %v1926 = vmul.f32 %v1911, %v1919
        %v1927 = vmul.f32 %v1910, %v1919
        %v1928 = vmul.f32 %v1909, %v1919
        %v1929 = vadd.f32 %v1885, %v1921
        %v1930 = vadd.f32 %v1886, %v1922
        %v1931 = vadd.f32 %v1887, %v1923
        %v1932 = vadd.f32 %v1888, %v1924
        %v1933 = vadd.f32 %v1889, %v1925
        %v1934 = vadd.f32 %v1890, %v1926
        %v1935 = vadd.f32 %v1891, %v1927
        %v1936 = vadd.f32 %v1892, %v1928
        %1937 = vrot.lane.b32.xlu0 %v1759, 100
        %v1938 = vpop.permute.xlu0 %1937
        %1939 = vrot.lane.b32.xlu0 %v1760, 100
        %v1940 = vpop.permute.xlu0 %1939
        %1941 = vrot.lane.b32.xlu0 %v1761, 100
        %v1942 = vpop.permute.xlu0 %1941
        %1943 = vrot.lane.b32.xlu0 %v1762, 100
        %v1944 = vpop.permute.xlu0 %1943
        %1945 = vrot.lane.b32.xlu0 %v1763, 100
        %v1946 = vpop.permute.xlu0 %1945
        %1947 = vrot.lane.b32.xlu0 %v1764, 100
        %v1948 = vpop.permute.xlu0 %1947
        %1949 = vrot.lane.b32.xlu0 %v1765, 100
        %v1950 = vpop.permute.xlu0 %1949
        %1951 = vrot.lane.b32.xlu0 %v1766, 100
        %v1952 = vpop.permute.xlu0 %1951
        %v1953 = vsel %vm592, %v1950, %v1952
        %v1954 = vsel %vm592, %v1948, %v1950
        %v1955 = vsel %vm592, %v1946, %v1948
        %v1956 = vsel %vm592, %v1944, %v1946
        %v1957 = vsel %vm592, %v1942, %v1944
        %v1958 = vsel %vm592, %v1940, %v1942
        %v1959 = vsel %vm592, %v1938, %v1940
        %v1960 = vsel %vm592, %v1952, %v1938
        %1961 = vset.pattern.permute.xlu0 4
        %1962 = vperm.xlu0 %1961, %v1791
        %v1963 = vpop.permute.xlu0 %1962
        %v1965 = vmul.f32 %v1960, %v1963
        %v1966 = vmul.f32 %v1959, %v1963
        %v1967 = vmul.f32 %v1958, %v1963
        %v1968 = vmul.f32 %v1957, %v1963
        %v1969 = vmul.f32 %v1956, %v1963
        %v1970 = vmul.f32 %v1955, %v1963
        %v1971 = vmul.f32 %v1954, %v1963
        %v1972 = vmul.f32 %v1953, %v1963
        %v1973 = vadd.f32 %v1929, %v1965
        %v1974 = vadd.f32 %v1930, %v1966
        %v1975 = vadd.f32 %v1931, %v1967
        %v1976 = vadd.f32 %v1932, %v1968
        %v1977 = vadd.f32 %v1933, %v1969
        %v1978 = vadd.f32 %v1934, %v1970
        %v1979 = vadd.f32 %v1935, %v1971
        %v1980 = vadd.f32 %v1936, %v1972
        %1981 = vrot.lane.b32.xlu0 %v1759, 99
        %v1982 = vpop.permute.xlu0 %1981
        %1983 = vrot.lane.b32.xlu0 %v1760, 99
        %v1984 = vpop.permute.xlu0 %1983
        %1985 = vrot.lane.b32.xlu0 %v1761, 99
        %v1986 = vpop.permute.xlu0 %1985
        %1987 = vrot.lane.b32.xlu0 %v1762, 99
        %v1988 = vpop.permute.xlu0 %1987
        %1989 = vrot.lane.b32.xlu0 %v1763, 99
        %v1990 = vpop.permute.xlu0 %1989
        %1991 = vrot.lane.b32.xlu0 %v1764, 99
        %v1992 = vpop.permute.xlu0 %1991
        %1993 = vrot.lane.b32.xlu0 %v1765, 99
        %v1994 = vpop.permute.xlu0 %1993
        %1995 = vrot.lane.b32.xlu0 %v1766, 99
        %v1996 = vpop.permute.xlu0 %1995
        %v1997 = vsel %vm637, %v1994, %v1996
        %v1998 = vsel %vm637, %v1992, %v1994
        %v1999 = vsel %vm637, %v1990, %v1992
        %v2000 = vsel %vm637, %v1988, %v1990
        %v2001 = vsel %vm637, %v1986, %v1988
        %v2002 = vsel %vm637, %v1984, %v1986
        %v2003 = vsel %vm637, %v1982, %v1984
        %v2004 = vsel %vm637, %v1996, %v1982
        %2005 = vset.pattern.permute.xlu0 5
        %2006 = vperm.xlu0 %2005, %v1791
        %v2007 = vpop.permute.xlu0 %2006
        %v2009 = vmul.f32 %v2004, %v2007
        %v2010 = vmul.f32 %v2003, %v2007
        %v2011 = vmul.f32 %v2002, %v2007
        %v2012 = vmul.f32 %v2001, %v2007
        %v2013 = vmul.f32 %v2000, %v2007
        %v2014 = vmul.f32 %v1999, %v2007
        %v2015 = vmul.f32 %v1998, %v2007
        %v2016 = vmul.f32 %v1997, %v2007
        %v2017 = vadd.f32 %v1973, %v2009
        %v2018 = vadd.f32 %v1974, %v2010
        %v2019 = vadd.f32 %v1975, %v2011
        %v2020 = vadd.f32 %v1976, %v2012
        %v2021 = vadd.f32 %v1977, %v2013
        %v2022 = vadd.f32 %v1978, %v2014
        %v2023 = vadd.f32 %v1979, %v2015
        %v2024 = vadd.f32 %v1980, %v2016
        %2025 = vrot.lane.b32.xlu0 %v1759, 91
        %v2026 = vpop.permute.xlu0 %2025
        %2027 = vrot.lane.b32.xlu0 %v1760, 91
        %v2028 = vpop.permute.xlu0 %2027
        %2029 = vrot.lane.b32.xlu0 %v1761, 91
        %v2030 = vpop.permute.xlu0 %2029
        %2031 = vrot.lane.b32.xlu0 %v1762, 91
        %v2032 = vpop.permute.xlu0 %2031
        %2033 = vrot.lane.b32.xlu0 %v1763, 91
        %v2034 = vpop.permute.xlu0 %2033
        %2035 = vrot.lane.b32.xlu0 %v1764, 91
        %v2036 = vpop.permute.xlu0 %2035
        %2037 = vrot.lane.b32.xlu0 %v1765, 91
        %v2038 = vpop.permute.xlu0 %2037
        %2039 = vrot.lane.b32.xlu0 %v1766, 91
        %v2040 = vpop.permute.xlu0 %2039
        %v2041 = vsel %vm682, %v2038, %v2040
        %v2042 = vsel %vm682, %v2036, %v2038
        %v2043 = vsel %vm682, %v2034, %v2036
        %v2044 = vsel %vm682, %v2032, %v2034
        %v2045 = vsel %vm682, %v2030, %v2032
        %v2046 = vsel %vm682, %v2028, %v2030
        %v2047 = vsel %vm682, %v2026, %v2028
        %v2048 = vsel %vm682, %v2040, %v2026
        %2049 = vset.pattern.permute.xlu0 6
        %2050 = vperm.xlu0 %2049, %v1791
        %v2051 = vpop.permute.xlu0 %2050
        %v2053 = vmul.f32 %v2048, %v2051
        %v2054 = vmul.f32 %v2047, %v2051
        %v2055 = vmul.f32 %v2046, %v2051
        %v2056 = vmul.f32 %v2045, %v2051
        %v2057 = vmul.f32 %v2044, %v2051
        %v2058 = vmul.f32 %v2043, %v2051
        %v2059 = vmul.f32 %v2042, %v2051
        %v2060 = vmul.f32 %v2041, %v2051
        %v2061 = vadd.f32 %v2017, %v2053
        %v2062 = vadd.f32 %v2018, %v2054
        %v2063 = vadd.f32 %v2019, %v2055
        %v2064 = vadd.f32 %v2020, %v2056
        %v2065 = vadd.f32 %v2021, %v2057
        %v2066 = vadd.f32 %v2022, %v2058
        %v2067 = vadd.f32 %v2023, %v2059
        %v2068 = vadd.f32 %v2024, %v2060
        %2069 = vrot.lane.b32.xlu0 %v1759, 90
        %v2070 = vpop.permute.xlu0 %2069
        %2071 = vrot.lane.b32.xlu0 %v1760, 90
        %v2072 = vpop.permute.xlu0 %2071
        %2073 = vrot.lane.b32.xlu0 %v1761, 90
        %v2074 = vpop.permute.xlu0 %2073
        %2075 = vrot.lane.b32.xlu0 %v1762, 90
        %v2076 = vpop.permute.xlu0 %2075
        %2077 = vrot.lane.b32.xlu0 %v1763, 90
        %v2078 = vpop.permute.xlu0 %2077
        %2079 = vrot.lane.b32.xlu0 %v1764, 90
        %v2080 = vpop.permute.xlu0 %2079
        %2081 = vrot.lane.b32.xlu0 %v1765, 90
        %v2082 = vpop.permute.xlu0 %2081
        %2083 = vrot.lane.b32.xlu0 %v1766, 90
        %v2084 = vpop.permute.xlu0 %2083
        %v2085 = vsel %vm727, %v2082, %v2084
        %v2086 = vsel %vm727, %v2080, %v2082
        %v2087 = vsel %vm727, %v2078, %v2080
        %v2088 = vsel %vm727, %v2076, %v2078
        %v2089 = vsel %vm727, %v2074, %v2076
        %v2090 = vsel %vm727, %v2072, %v2074
        %v2091 = vsel %vm727, %v2070, %v2072
        %v2092 = vsel %vm727, %v2084, %v2070
        %2093 = vset.pattern.permute.xlu0 7
        %2094 = vperm.xlu0 %2093, %v1791
        %v2095 = vpop.permute.xlu0 %2094
        %v2097 = vmul.f32 %v2092, %v2095
        %v2098 = vmul.f32 %v2091, %v2095
        %v2099 = vmul.f32 %v2090, %v2095
        %v2100 = vmul.f32 %v2089, %v2095
        %v2101 = vmul.f32 %v2088, %v2095
        %v2102 = vmul.f32 %v2087, %v2095
        %v2103 = vmul.f32 %v2086, %v2095
        %v2104 = vmul.f32 %v2085, %v2095
        %v2105 = vadd.f32 %v2061, %v2097
        %v2106 = vadd.f32 %v2062, %v2098
        %v2107 = vadd.f32 %v2063, %v2099
        %v2108 = vadd.f32 %v2064, %v2100
        %v2109 = vadd.f32 %v2065, %v2101
        %v2110 = vadd.f32 %v2066, %v2102
        %v2111 = vadd.f32 %v2067, %v2103
        %v2112 = vadd.f32 %v2068, %v2104
        %2113 = vrot.lane.b32.xlu0 %v1759, 89
        %v2114 = vpop.permute.xlu0 %2113
        %2115 = vrot.lane.b32.xlu0 %v1760, 89
        %v2116 = vpop.permute.xlu0 %2115
        %2117 = vrot.lane.b32.xlu0 %v1761, 89
        %v2118 = vpop.permute.xlu0 %2117
        %2119 = vrot.lane.b32.xlu0 %v1762, 89
        %v2120 = vpop.permute.xlu0 %2119
        %2121 = vrot.lane.b32.xlu0 %v1763, 89
        %v2122 = vpop.permute.xlu0 %2121
        %2123 = vrot.lane.b32.xlu0 %v1764, 89
        %v2124 = vpop.permute.xlu0 %2123
        %2125 = vrot.lane.b32.xlu0 %v1765, 89
        %v2126 = vpop.permute.xlu0 %2125
        %2127 = vrot.lane.b32.xlu0 %v1766, 89
        %v2128 = vpop.permute.xlu0 %2127
        %v2129 = vsel %vm772, %v2126, %v2128
        %v2130 = vsel %vm772, %v2124, %v2126
        %v2131 = vsel %vm772, %v2122, %v2124
        %v2132 = vsel %vm772, %v2120, %v2122
        %v2133 = vsel %vm772, %v2118, %v2120
        %v2134 = vsel %vm772, %v2116, %v2118
        %v2135 = vsel %vm772, %v2114, %v2116
        %v2136 = vsel %vm772, %v2128, %v2114
        %2137 = vset.pattern.permute.xlu0 8
        %2138 = vperm.xlu0 %2137, %v1791
        %v2139 = vpop.permute.xlu0 %2138
        %v2141 = vmul.f32 %v2136, %v2139
        %v2142 = vmul.f32 %v2135, %v2139
        %v2143 = vmul.f32 %v2134, %v2139
        %v2144 = vmul.f32 %v2133, %v2139
        %v2145 = vmul.f32 %v2132, %v2139
        %v2146 = vmul.f32 %v2131, %v2139
        %v2147 = vmul.f32 %v2130, %v2139
        %v2148 = vmul.f32 %v2129, %v2139
        %v2149 = vadd.f32 %v2105, %v2141
        %v2150 = vadd.f32 %v2106, %v2142
        %v2151 = vadd.f32 %v2107, %v2143
        %v2152 = vadd.f32 %v2108, %v2144
        %v2153 = vadd.f32 %v2109, %v2145
        %v2154 = vadd.f32 %v2110, %v2146
        %v2155 = vadd.f32 %v2111, %v2147
        %v2156 = vadd.f32 %v2112, %v2148
        %2157 = vrot.lane.b32.xlu0 %v1759, 11
        %v2158 = vpop.permute.xlu0 %2157
        %2159 = vrot.lane.b32.xlu0 %v1760, 11
        %v2160 = vpop.permute.xlu0 %2159
        %2161 = vrot.lane.b32.xlu0 %v1761, 11
        %v2162 = vpop.permute.xlu0 %2161
        %2163 = vrot.lane.b32.xlu0 %v1762, 11
        %v2164 = vpop.permute.xlu0 %2163
        %2165 = vrot.lane.b32.xlu0 %v1763, 11
        %v2166 = vpop.permute.xlu0 %2165
        %2167 = vrot.lane.b32.xlu0 %v1764, 11
        %v2168 = vpop.permute.xlu0 %2167
        %2169 = vrot.lane.b32.xlu0 %v1765, 11
        %v2170 = vpop.permute.xlu0 %2169
        %2171 = vrot.lane.b32.xlu0 %v1766, 11
        %v2172 = vpop.permute.xlu0 %2171
        %v2173 = vsel %vm817, %v2170, %v2172
        %v2174 = vsel %vm817, %v2168, %v2170
        %v2175 = vsel %vm817, %v2166, %v2168
        %v2176 = vsel %vm817, %v2164, %v2166
        %v2177 = vsel %vm817, %v2162, %v2164
        %v2178 = vsel %vm817, %v2160, %v2162
        %v2179 = vsel %vm817, %v2158, %v2160
        %v2180 = vsel %vm817, %v2172, %v2158
        %2181 = vset.pattern.permute.xlu0 9
        %2182 = vperm.xlu0 %2181, %v1791
        %v2183 = vpop.permute.xlu0 %2182
        %v2185 = vmul.f32 %v2180, %v2183
        %v2186 = vmul.f32 %v2179, %v2183
        %v2187 = vmul.f32 %v2178, %v2183
        %v2188 = vmul.f32 %v2177, %v2183
        %v2189 = vmul.f32 %v2176, %v2183
        %v2190 = vmul.f32 %v2175, %v2183
        %v2191 = vmul.f32 %v2174, %v2183
        %v2192 = vmul.f32 %v2173, %v2183
        %v2193 = vadd.f32 %v2149, %v2185
        %v2194 = vadd.f32 %v2150, %v2186
        %v2195 = vadd.f32 %v2151, %v2187
        %v2196 = vadd.f32 %v2152, %v2188
        %v2197 = vadd.f32 %v2153, %v2189
        %v2198 = vadd.f32 %v2154, %v2190
        %v2199 = vadd.f32 %v2155, %v2191
        %v2200 = vadd.f32 %v2156, %v2192
        %2201 = vrot.lane.b32.xlu0 %v1759, 10
        %v2202 = vpop.permute.xlu0 %2201
        %2203 = vrot.lane.b32.xlu0 %v1760, 10
        %v2204 = vpop.permute.xlu0 %2203
        %2205 = vrot.lane.b32.xlu0 %v1761, 10
        %v2206 = vpop.permute.xlu0 %2205
        %2207 = vrot.lane.b32.xlu0 %v1762, 10
        %v2208 = vpop.permute.xlu0 %2207
        %2209 = vrot.lane.b32.xlu0 %v1763, 10
        %v2210 = vpop.permute.xlu0 %2209
        %2211 = vrot.lane.b32.xlu0 %v1764, 10
        %v2212 = vpop.permute.xlu0 %2211
        %2213 = vrot.lane.b32.xlu0 %v1765, 10
        %v2214 = vpop.permute.xlu0 %2213
        %2215 = vrot.lane.b32.xlu0 %v1766, 10
        %v2216 = vpop.permute.xlu0 %2215
        %v2217 = vsel %vm862, %v2214, %v2216
        %v2218 = vsel %vm862, %v2212, %v2214
        %v2219 = vsel %vm862, %v2210, %v2212
        %v2220 = vsel %vm862, %v2208, %v2210
        %v2221 = vsel %vm862, %v2206, %v2208
        %v2222 = vsel %vm862, %v2204, %v2206
        %v2223 = vsel %vm862, %v2202, %v2204
        %v2224 = vsel %vm862, %v2216, %v2202
        %2225 = vset.pattern.permute.xlu0 10
        %2226 = vperm.xlu0 %2225, %v1791
        %v2227 = vpop.permute.xlu0 %2226
        %v2229 = vmul.f32 %v2224, %v2227
        %v2230 = vmul.f32 %v2223, %v2227
        %v2231 = vmul.f32 %v2222, %v2227
        %v2232 = vmul.f32 %v2221, %v2227
        %v2233 = vmul.f32 %v2220, %v2227
        %v2234 = vmul.f32 %v2219, %v2227
        %v2235 = vmul.f32 %v2218, %v2227
        %v2236 = vmul.f32 %v2217, %v2227
        %v2237 = vadd.f32 %v2193, %v2229
        %v2238 = vadd.f32 %v2194, %v2230
        %v2239 = vadd.f32 %v2195, %v2231
        %v2240 = vadd.f32 %v2196, %v2232
        %v2241 = vadd.f32 %v2197, %v2233
        %v2242 = vadd.f32 %v2198, %v2234
        %v2243 = vadd.f32 %v2199, %v2235
        %v2244 = vadd.f32 %v2200, %v2236
        %2245 = vrot.lane.b32.xlu0 %v1759, 9
        %v2246 = vpop.permute.xlu0 %2245
        %2247 = vrot.lane.b32.xlu0 %v1760, 9
        %v2248 = vpop.permute.xlu0 %2247
        %2249 = vrot.lane.b32.xlu0 %v1761, 9
        %v2250 = vpop.permute.xlu0 %2249
        %2251 = vrot.lane.b32.xlu0 %v1762, 9
        %v2252 = vpop.permute.xlu0 %2251
        %2253 = vrot.lane.b32.xlu0 %v1763, 9
        %v2254 = vpop.permute.xlu0 %2253
        %2255 = vrot.lane.b32.xlu0 %v1764, 9
        %v2256 = vpop.permute.xlu0 %2255
        %2257 = vrot.lane.b32.xlu0 %v1765, 9
        %v2258 = vpop.permute.xlu0 %2257
        %2259 = vrot.lane.b32.xlu0 %v1766, 9
        %v2260 = vpop.permute.xlu0 %2259
        %v2261 = vsel %vm907, %v2258, %v2260
        %v2262 = vsel %vm907, %v2256, %v2258
        %v2263 = vsel %vm907, %v2254, %v2256
        %v2264 = vsel %vm907, %v2252, %v2254
        %v2265 = vsel %vm907, %v2250, %v2252
        %v2266 = vsel %vm907, %v2248, %v2250
        %v2267 = vsel %vm907, %v2246, %v2248
        %v2268 = vsel %vm907, %v2260, %v2246
        %2269 = vset.pattern.permute.xlu0 11
        %2270 = vperm.xlu0 %2269, %v1791
        %v2271 = vpop.permute.xlu0 %2270
        %v2273 = vmul.f32 %v2268, %v2271
        %v2274 = vmul.f32 %v2267, %v2271
        %v2275 = vmul.f32 %v2266, %v2271
        %v2276 = vmul.f32 %v2265, %v2271
        %v2277 = vmul.f32 %v2264, %v2271
        %v2278 = vmul.f32 %v2263, %v2271
        %v2279 = vmul.f32 %v2262, %v2271
        %v2280 = vmul.f32 %v2261, %v2271
        %v2281 = vadd.f32 %v2237, %v2273
        %v2282 = vadd.f32 %v2238, %v2274
        %v2283 = vadd.f32 %v2239, %v2275
        %v2284 = vadd.f32 %v2240, %v2276
        %v2285 = vadd.f32 %v2241, %v2277
        %v2286 = vadd.f32 %v2242, %v2278
        %v2287 = vadd.f32 %v2243, %v2279
        %v2288 = vadd.f32 %v2244, %v2280
        %2289 = vrot.lane.b32.xlu0 %v1759, 1
        %v2290 = vpop.permute.xlu0 %2289
        %2291 = vrot.lane.b32.xlu0 %v1760, 1
        %v2292 = vpop.permute.xlu0 %2291
        %2293 = vrot.lane.b32.xlu0 %v1761, 1
        %v2294 = vpop.permute.xlu0 %2293
        %2295 = vrot.lane.b32.xlu0 %v1762, 1
        %v2296 = vpop.permute.xlu0 %2295
        %2297 = vrot.lane.b32.xlu0 %v1763, 1
        %v2298 = vpop.permute.xlu0 %2297
        %2299 = vrot.lane.b32.xlu0 %v1764, 1
        %v2300 = vpop.permute.xlu0 %2299
        %2301 = vrot.lane.b32.xlu0 %v1765, 1
        %v2302 = vpop.permute.xlu0 %2301
        %2303 = vrot.lane.b32.xlu0 %v1766, 1
        %v2304 = vpop.permute.xlu0 %2303
        %v2305 = vsel %vm952, %v2302, %v2304
        %v2306 = vsel %vm952, %v2300, %v2302
        %v2307 = vsel %vm952, %v2298, %v2300
        %v2308 = vsel %vm952, %v2296, %v2298
        %v2309 = vsel %vm952, %v2294, %v2296
        %v2310 = vsel %vm952, %v2292, %v2294
        %v2311 = vsel %vm952, %v2290, %v2292
        %v2312 = vsel %vm952, %v2304, %v2290
        %2313 = vset.pattern.permute.xlu0 12
        %2314 = vperm.xlu0 %2313, %v1791
        %v2315 = vpop.permute.xlu0 %2314
        %v2317 = vmul.f32 %v2312, %v2315
        %v2318 = vmul.f32 %v2311, %v2315
        %v2319 = vmul.f32 %v2310, %v2315
        %v2320 = vmul.f32 %v2309, %v2315
        %v2321 = vmul.f32 %v2308, %v2315
        %v2322 = vmul.f32 %v2307, %v2315
        %v2323 = vmul.f32 %v2306, %v2315
        %v2324 = vmul.f32 %v2305, %v2315
        %v2325 = vadd.f32 %v2281, %v2317
        %v2326 = vadd.f32 %v2282, %v2318
        %v2327 = vadd.f32 %v2283, %v2319
        %v2328 = vadd.f32 %v2284, %v2320
        %v2329 = vadd.f32 %v2285, %v2321
        %v2330 = vadd.f32 %v2286, %v2322
        %v2331 = vadd.f32 %v2287, %v2323
        %v2332 = vadd.f32 %v2288, %v2324
        %2333 = vset.pattern.permute.xlu0 13
        %2334 = vperm.xlu0 %2333, %v1791
        %v2335 = vpop.permute.xlu0 %2334
        %v2337 = vmul.f32 %v1759, %v2335
        %v2338 = vmul.f32 %v1760, %v2335
        %v2339 = vmul.f32 %v1761, %v2335
        %v2340 = vmul.f32 %v1762, %v2335
        %v2341 = vmul.f32 %v1763, %v2335
        %v2342 = vmul.f32 %v1764, %v2335
        %v2343 = vmul.f32 %v1765, %v2335
        %v2344 = vmul.f32 %v1766, %v2335
        %v2345 = vadd.f32 %v2325, %v2337
        %v2346 = vadd.f32 %v2326, %v2338
        %v2347 = vadd.f32 %v2327, %v2339
        %v2348 = vadd.f32 %v2328, %v2340
        %v2349 = vadd.f32 %v2329, %v2341
        %v2350 = vadd.f32 %v2330, %v2342
        %v2351 = vadd.f32 %v2331, %v2343
        %v2352 = vadd.f32 %v2332, %v2344
        %2353 = vrot.lane.b32.xlu0 %v1759, 127
        %v2354 = vpop.permute.xlu0 %2353
        %2355 = vrot.lane.b32.xlu0 %v1760, 127
        %v2356 = vpop.permute.xlu0 %2355
        %2357 = vrot.lane.b32.xlu0 %v1761, 127
        %v2358 = vpop.permute.xlu0 %2357
        %2359 = vrot.lane.b32.xlu0 %v1762, 127
        %v2360 = vpop.permute.xlu0 %2359
        %2361 = vrot.lane.b32.xlu0 %v1763, 127
        %v2362 = vpop.permute.xlu0 %2361
        %2363 = vrot.lane.b32.xlu0 %v1764, 127
        %v2364 = vpop.permute.xlu0 %2363
        %2365 = vrot.lane.b32.xlu0 %v1765, 127
        %v2366 = vpop.permute.xlu0 %2365
        %2367 = vrot.lane.b32.xlu0 %v1766, 127
        %v2368 = vpop.permute.xlu0 %2367
        %v2369 = vsel %vm1017, %v2366, %v2368
        %v2370 = vsel %vm1017, %v2364, %v2366
        %v2371 = vsel %vm1017, %v2362, %v2364
        %v2372 = vsel %vm1017, %v2360, %v2362
        %v2373 = vsel %vm1017, %v2358, %v2360
        %v2374 = vsel %vm1017, %v2356, %v2358
        %v2375 = vsel %vm1017, %v2354, %v2356
        %v2376 = vsel %vm1017, %v2368, %v2354
        %2377 = vset.pattern.permute.xlu0 14
        %2378 = vperm.xlu0 %2377, %v1791
        %v2379 = vpop.permute.xlu0 %2378
        %v2381 = vmul.f32 %v2375, %v2379
        %v2382 = vmul.f32 %v2374, %v2379
        %v2383 = vmul.f32 %v2373, %v2379
        %v2384 = vmul.f32 %v2372, %v2379
        %v2385 = vmul.f32 %v2371, %v2379
        %v2386 = vmul.f32 %v2370, %v2379
        %v2387 = vmul.f32 %v2369, %v2379
        %v2388 = vmul.f32 %v2376, %v2379
        %v2389 = vadd.f32 %v2345, %v2381
        %v2390 = vadd.f32 %v2346, %v2382
        %v2391 = vadd.f32 %v2347, %v2383
        %v2392 = vadd.f32 %v2348, %v2384
        %v2393 = vadd.f32 %v2349, %v2385
        %v2394 = vadd.f32 %v2350, %v2386
        %v2395 = vadd.f32 %v2351, %v2387
        %v2396 = vadd.f32 %v2352, %v2388
        %2397 = vrot.lane.b32.xlu0 %v1759, 119
        %v2398 = vpop.permute.xlu0 %2397
        %2399 = vrot.lane.b32.xlu0 %v1760, 119
        %v2400 = vpop.permute.xlu0 %2399
        %2401 = vrot.lane.b32.xlu0 %v1761, 119
        %v2402 = vpop.permute.xlu0 %2401
        %2403 = vrot.lane.b32.xlu0 %v1762, 119
        %v2404 = vpop.permute.xlu0 %2403
        %2405 = vrot.lane.b32.xlu0 %v1763, 119
        %v2406 = vpop.permute.xlu0 %2405
        %2407 = vrot.lane.b32.xlu0 %v1764, 119
        %v2408 = vpop.permute.xlu0 %2407
        %2409 = vrot.lane.b32.xlu0 %v1765, 119
        %v2410 = vpop.permute.xlu0 %2409
        %2411 = vrot.lane.b32.xlu0 %v1766, 119
        %v2412 = vpop.permute.xlu0 %2411
        %v2413 = vsel %vm1062, %v2410, %v2412
        %v2414 = vsel %vm1062, %v2408, %v2410
        %v2415 = vsel %vm1062, %v2406, %v2408
        %v2416 = vsel %vm1062, %v2404, %v2406
        %v2417 = vsel %vm1062, %v2402, %v2404
        %v2418 = vsel %vm1062, %v2400, %v2402
        %v2419 = vsel %vm1062, %v2398, %v2400
        %v2420 = vsel %vm1062, %v2412, %v2398
        %2421 = vset.pattern.permute.xlu0 15
        %2422 = vperm.xlu0 %2421, %v1791
        %v2423 = vpop.permute.xlu0 %2422
        %v2425 = vmul.f32 %v2419, %v2423
        %v2426 = vmul.f32 %v2418, %v2423
        %v2427 = vmul.f32 %v2417, %v2423
        %v2428 = vmul.f32 %v2416, %v2423
        %v2429 = vmul.f32 %v2415, %v2423
        %v2430 = vmul.f32 %v2414, %v2423
        %v2431 = vmul.f32 %v2413, %v2423
        %v2432 = vmul.f32 %v2420, %v2423
        %v2433 = vadd.f32 %v2389, %v2425
        %v2434 = vadd.f32 %v2390, %v2426
        %v2435 = vadd.f32 %v2391, %v2427
        %v2436 = vadd.f32 %v2392, %v2428
        %v2437 = vadd.f32 %v2393, %v2429
        %v2438 = vadd.f32 %v2394, %v2430
        %v2439 = vadd.f32 %v2395, %v2431
        %v2440 = vadd.f32 %v2396, %v2432
        %2441 = vrot.lane.b32.xlu0 %v1759, 118
        %v2442 = vpop.permute.xlu0 %2441
        %2443 = vrot.lane.b32.xlu0 %v1760, 118
        %v2444 = vpop.permute.xlu0 %2443
        %2445 = vrot.lane.b32.xlu0 %v1761, 118
        %v2446 = vpop.permute.xlu0 %2445
        %2447 = vrot.lane.b32.xlu0 %v1762, 118
        %v2448 = vpop.permute.xlu0 %2447
        %2449 = vrot.lane.b32.xlu0 %v1763, 118
        %v2450 = vpop.permute.xlu0 %2449
        %2451 = vrot.lane.b32.xlu0 %v1764, 118
        %v2452 = vpop.permute.xlu0 %2451
        %2453 = vrot.lane.b32.xlu0 %v1765, 118
        %v2454 = vpop.permute.xlu0 %2453
        %2455 = vrot.lane.b32.xlu0 %v1766, 118
        %v2456 = vpop.permute.xlu0 %2455
        %v2457 = vsel %vm1107, %v2454, %v2456
        %v2458 = vsel %vm1107, %v2452, %v2454
        %v2459 = vsel %vm1107, %v2450, %v2452
        %v2460 = vsel %vm1107, %v2448, %v2450
        %v2461 = vsel %vm1107, %v2446, %v2448
        %v2462 = vsel %vm1107, %v2444, %v2446
        %v2463 = vsel %vm1107, %v2442, %v2444
        %v2464 = vsel %vm1107, %v2456, %v2442
        %2465 = vset.pattern.permute.xlu0 16
        %2466 = vperm.xlu0 %2465, %v1791
        %v2467 = vpop.permute.xlu0 %2466
        %v2469 = vmul.f32 %v2463, %v2467
        %v2470 = vmul.f32 %v2462, %v2467
        %v2471 = vmul.f32 %v2461, %v2467
        %v2472 = vmul.f32 %v2460, %v2467
        %v2473 = vmul.f32 %v2459, %v2467
        %v2474 = vmul.f32 %v2458, %v2467
        %v2475 = vmul.f32 %v2457, %v2467
        %v2476 = vmul.f32 %v2464, %v2467
        %v2477 = vadd.f32 %v2433, %v2469
        %v2478 = vadd.f32 %v2434, %v2470
        %v2479 = vadd.f32 %v2435, %v2471
        %v2480 = vadd.f32 %v2436, %v2472
        %v2481 = vadd.f32 %v2437, %v2473
        %v2482 = vadd.f32 %v2438, %v2474
        %v2483 = vadd.f32 %v2439, %v2475
        %v2484 = vadd.f32 %v2440, %v2476
        %2485 = vrot.lane.b32.xlu0 %v1759, 117
        %v2486 = vpop.permute.xlu0 %2485
        %2487 = vrot.lane.b32.xlu0 %v1760, 117
        %v2488 = vpop.permute.xlu0 %2487
        %2489 = vrot.lane.b32.xlu0 %v1761, 117
        %v2490 = vpop.permute.xlu0 %2489
        %2491 = vrot.lane.b32.xlu0 %v1762, 117
        %v2492 = vpop.permute.xlu0 %2491
        %2493 = vrot.lane.b32.xlu0 %v1763, 117
        %v2494 = vpop.permute.xlu0 %2493
        %2495 = vrot.lane.b32.xlu0 %v1764, 117
        %v2496 = vpop.permute.xlu0 %2495
        %2497 = vrot.lane.b32.xlu0 %v1765, 117
        %v2498 = vpop.permute.xlu0 %2497
        %2499 = vrot.lane.b32.xlu0 %v1766, 117
        %v2500 = vpop.permute.xlu0 %2499
        %v2501 = vsel %vm1152, %v2498, %v2500
        %v2502 = vsel %vm1152, %v2496, %v2498
        %v2503 = vsel %vm1152, %v2494, %v2496
        %v2504 = vsel %vm1152, %v2492, %v2494
        %v2505 = vsel %vm1152, %v2490, %v2492
        %v2506 = vsel %vm1152, %v2488, %v2490
        %v2507 = vsel %vm1152, %v2486, %v2488
        %v2508 = vsel %vm1152, %v2500, %v2486
        %2509 = vset.pattern.permute.xlu0 17
        %2510 = vperm.xlu0 %2509, %v1791
        %v2511 = vpop.permute.xlu0 %2510
        %v2513 = vmul.f32 %v2507, %v2511
        %v2514 = vmul.f32 %v2506, %v2511
        %v2515 = vmul.f32 %v2505, %v2511
        %v2516 = vmul.f32 %v2504, %v2511
        %v2517 = vmul.f32 %v2503, %v2511
        %v2518 = vmul.f32 %v2502, %v2511
        %v2519 = vmul.f32 %v2501, %v2511
        %v2520 = vmul.f32 %v2508, %v2511
        %v2521 = vadd.f32 %v2477, %v2513
        %v2522 = vadd.f32 %v2478, %v2514
        %v2523 = vadd.f32 %v2479, %v2515
        %v2524 = vadd.f32 %v2480, %v2516
        %v2525 = vadd.f32 %v2481, %v2517
        %v2526 = vadd.f32 %v2482, %v2518
        %v2527 = vadd.f32 %v2483, %v2519
        %v2528 = vadd.f32 %v2484, %v2520
        %2529 = vrot.lane.b32.xlu0 %v1759, 39
        %v2530 = vpop.permute.xlu0 %2529
        %2531 = vrot.lane.b32.xlu0 %v1760, 39
        %v2532 = vpop.permute.xlu0 %2531
        %2533 = vrot.lane.b32.xlu0 %v1761, 39
        %v2534 = vpop.permute.xlu0 %2533
        %2535 = vrot.lane.b32.xlu0 %v1762, 39
        %v2536 = vpop.permute.xlu0 %2535
        %2537 = vrot.lane.b32.xlu0 %v1763, 39
        %v2538 = vpop.permute.xlu0 %2537
        %2539 = vrot.lane.b32.xlu0 %v1764, 39
        %v2540 = vpop.permute.xlu0 %2539
        %2541 = vrot.lane.b32.xlu0 %v1765, 39
        %v2542 = vpop.permute.xlu0 %2541
        %2543 = vrot.lane.b32.xlu0 %v1766, 39
        %v2544 = vpop.permute.xlu0 %2543
        %v2545 = vsel %vm1197, %v2542, %v2544
        %v2546 = vsel %vm1197, %v2540, %v2542
        %v2547 = vsel %vm1197, %v2538, %v2540
        %v2548 = vsel %vm1197, %v2536, %v2538
        %v2549 = vsel %vm1197, %v2534, %v2536
        %v2550 = vsel %vm1197, %v2532, %v2534
        %v2551 = vsel %vm1197, %v2530, %v2532
        %v2552 = vsel %vm1197, %v2544, %v2530
        %2553 = vset.pattern.permute.xlu0 18
        %2554 = vperm.xlu0 %2553, %v1791
        %v2555 = vpop.permute.xlu0 %2554
        %v2557 = vmul.f32 %v2551, %v2555
        %v2558 = vmul.f32 %v2550, %v2555
        %v2559 = vmul.f32 %v2549, %v2555
        %v2560 = vmul.f32 %v2548, %v2555
        %v2561 = vmul.f32 %v2547, %v2555
        %v2562 = vmul.f32 %v2546, %v2555
        %v2563 = vmul.f32 %v2545, %v2555
        %v2564 = vmul.f32 %v2552, %v2555
        %v2565 = vadd.f32 %v2521, %v2557
        %v2566 = vadd.f32 %v2522, %v2558
        %v2567 = vadd.f32 %v2523, %v2559
        %v2568 = vadd.f32 %v2524, %v2560
        %v2569 = vadd.f32 %v2525, %v2561
        %v2570 = vadd.f32 %v2526, %v2562
        %v2571 = vadd.f32 %v2527, %v2563
        %v2572 = vadd.f32 %v2528, %v2564
        %2573 = vrot.lane.b32.xlu0 %v1759, 38
        %v2574 = vpop.permute.xlu0 %2573
        %2575 = vrot.lane.b32.xlu0 %v1760, 38
        %v2576 = vpop.permute.xlu0 %2575
        %2577 = vrot.lane.b32.xlu0 %v1761, 38
        %v2578 = vpop.permute.xlu0 %2577
        %2579 = vrot.lane.b32.xlu0 %v1762, 38
        %v2580 = vpop.permute.xlu0 %2579
        %2581 = vrot.lane.b32.xlu0 %v1763, 38
        %v2582 = vpop.permute.xlu0 %2581
        %2583 = vrot.lane.b32.xlu0 %v1764, 38
        %v2584 = vpop.permute.xlu0 %2583
        %2585 = vrot.lane.b32.xlu0 %v1765, 38
        %v2586 = vpop.permute.xlu0 %2585
        %2587 = vrot.lane.b32.xlu0 %v1766, 38
        %v2588 = vpop.permute.xlu0 %2587
        %v2589 = vsel %vm1242, %v2586, %v2588
        %v2590 = vsel %vm1242, %v2584, %v2586
        %v2591 = vsel %vm1242, %v2582, %v2584
        %v2592 = vsel %vm1242, %v2580, %v2582
        %v2593 = vsel %vm1242, %v2578, %v2580
        %v2594 = vsel %vm1242, %v2576, %v2578
        %v2595 = vsel %vm1242, %v2574, %v2576
        %v2596 = vsel %vm1242, %v2588, %v2574
        %2597 = vset.pattern.permute.xlu0 19
        %2598 = vperm.xlu0 %2597, %v1791
        %v2599 = vpop.permute.xlu0 %2598
        %v2601 = vmul.f32 %v2595, %v2599
        %v2602 = vmul.f32 %v2594, %v2599
        %v2603 = vmul.f32 %v2593, %v2599
        %v2604 = vmul.f32 %v2592, %v2599
        %v2605 = vmul.f32 %v2591, %v2599
        %v2606 = vmul.f32 %v2590, %v2599
        %v2607 = vmul.f32 %v2589, %v2599
        %v2608 = vmul.f32 %v2596, %v2599
        %v2609 = vadd.f32 %v2565, %v2601
        %v2610 = vadd.f32 %v2566, %v2602
        %v2611 = vadd.f32 %v2567, %v2603
        %v2612 = vadd.f32 %v2568, %v2604
        %v2613 = vadd.f32 %v2569, %v2605
        %v2614 = vadd.f32 %v2570, %v2606
        %v2615 = vadd.f32 %v2571, %v2607
        %v2616 = vadd.f32 %v2572, %v2608
        %2617 = vrot.lane.b32.xlu0 %v1759, 37
        %v2618 = vpop.permute.xlu0 %2617
        %2619 = vrot.lane.b32.xlu0 %v1760, 37
        %v2620 = vpop.permute.xlu0 %2619
        %2621 = vrot.lane.b32.xlu0 %v1761, 37
        %v2622 = vpop.permute.xlu0 %2621
        %2623 = vrot.lane.b32.xlu0 %v1762, 37
        %v2624 = vpop.permute.xlu0 %2623
        %2625 = vrot.lane.b32.xlu0 %v1763, 37
        %v2626 = vpop.permute.xlu0 %2625
        %2627 = vrot.lane.b32.xlu0 %v1764, 37
        %v2628 = vpop.permute.xlu0 %2627
        %2629 = vrot.lane.b32.xlu0 %v1765, 37
        %v2630 = vpop.permute.xlu0 %2629
        %2631 = vrot.lane.b32.xlu0 %v1766, 37
        %v2632 = vpop.permute.xlu0 %2631
        %v2633 = vsel %vm1287, %v2630, %v2632
        %v2634 = vsel %vm1287, %v2628, %v2630
        %v2635 = vsel %vm1287, %v2626, %v2628
        %v2636 = vsel %vm1287, %v2624, %v2626
        %v2637 = vsel %vm1287, %v2622, %v2624
        %v2638 = vsel %vm1287, %v2620, %v2622
        %v2639 = vsel %vm1287, %v2618, %v2620
        %v2640 = vsel %vm1287, %v2632, %v2618
        %2641 = vset.pattern.permute.xlu0 20
        %2642 = vperm.xlu0 %2641, %v1791
        %v2643 = vpop.permute.xlu0 %2642
        %v2645 = vmul.f32 %v2639, %v2643
        %v2646 = vmul.f32 %v2638, %v2643
        %v2647 = vmul.f32 %v2637, %v2643
        %v2648 = vmul.f32 %v2636, %v2643
        %v2649 = vmul.f32 %v2635, %v2643
        %v2650 = vmul.f32 %v2634, %v2643
        %v2651 = vmul.f32 %v2633, %v2643
        %v2652 = vmul.f32 %v2640, %v2643
        %v2653 = vadd.f32 %v2609, %v2645
        %v2654 = vadd.f32 %v2610, %v2646
        %v2655 = vadd.f32 %v2611, %v2647
        %v2656 = vadd.f32 %v2612, %v2648
        %v2657 = vadd.f32 %v2613, %v2649
        %v2658 = vadd.f32 %v2614, %v2650
        %v2659 = vadd.f32 %v2615, %v2651
        %v2660 = vadd.f32 %v2616, %v2652
        %2661 = vrot.lane.b32.xlu0 %v1759, 29
        %v2662 = vpop.permute.xlu0 %2661
        %2663 = vrot.lane.b32.xlu0 %v1760, 29
        %v2664 = vpop.permute.xlu0 %2663
        %2665 = vrot.lane.b32.xlu0 %v1761, 29
        %v2666 = vpop.permute.xlu0 %2665
        %2667 = vrot.lane.b32.xlu0 %v1762, 29
        %v2668 = vpop.permute.xlu0 %2667
        %2669 = vrot.lane.b32.xlu0 %v1763, 29
        %v2670 = vpop.permute.xlu0 %2669
        %2671 = vrot.lane.b32.xlu0 %v1764, 29
        %v2672 = vpop.permute.xlu0 %2671
        %2673 = vrot.lane.b32.xlu0 %v1765, 29
        %v2674 = vpop.permute.xlu0 %2673
        %2675 = vrot.lane.b32.xlu0 %v1766, 29
        %v2676 = vpop.permute.xlu0 %2675
        %v2677 = vsel %vm1332, %v2674, %v2676
        %v2678 = vsel %vm1332, %v2672, %v2674
        %v2679 = vsel %vm1332, %v2670, %v2672
        %v2680 = vsel %vm1332, %v2668, %v2670
        %v2681 = vsel %vm1332, %v2666, %v2668
        %v2682 = vsel %vm1332, %v2664, %v2666
        %v2683 = vsel %vm1332, %v2662, %v2664
        %v2684 = vsel %vm1332, %v2676, %v2662
        %2685 = vset.pattern.permute.xlu0 21
        %2686 = vperm.xlu0 %2685, %v1791
        %v2687 = vpop.permute.xlu0 %2686
        %v2689 = vmul.f32 %v2683, %v2687
        %v2690 = vmul.f32 %v2682, %v2687
        %v2691 = vmul.f32 %v2681, %v2687
        %v2692 = vmul.f32 %v2680, %v2687
        %v2693 = vmul.f32 %v2679, %v2687
        %v2694 = vmul.f32 %v2678, %v2687
        %v2695 = vmul.f32 %v2677, %v2687
        %v2696 = vmul.f32 %v2684, %v2687
        %v2697 = vadd.f32 %v2653, %v2689
        %v2698 = vadd.f32 %v2654, %v2690
        %v2699 = vadd.f32 %v2655, %v2691
        %v2700 = vadd.f32 %v2656, %v2692
        %v2701 = vadd.f32 %v2657, %v2693
        %v2702 = vadd.f32 %v2658, %v2694
        %v2703 = vadd.f32 %v2659, %v2695
        %v2704 = vadd.f32 %v2660, %v2696
        %2705 = vrot.lane.b32.xlu0 %v1759, 28
        %v2706 = vpop.permute.xlu0 %2705
        %2707 = vrot.lane.b32.xlu0 %v1760, 28
        %v2708 = vpop.permute.xlu0 %2707
        %2709 = vrot.lane.b32.xlu0 %v1761, 28
        %v2710 = vpop.permute.xlu0 %2709
        %2711 = vrot.lane.b32.xlu0 %v1762, 28
        %v2712 = vpop.permute.xlu0 %2711
        %2713 = vrot.lane.b32.xlu0 %v1763, 28
        %v2714 = vpop.permute.xlu0 %2713
        %2715 = vrot.lane.b32.xlu0 %v1764, 28
        %v2716 = vpop.permute.xlu0 %2715
        %2717 = vrot.lane.b32.xlu0 %v1765, 28
        %v2718 = vpop.permute.xlu0 %2717
        %2719 = vrot.lane.b32.xlu0 %v1766, 28
        %v2720 = vpop.permute.xlu0 %2719
        %v2721 = vsel %vm1377, %v2718, %v2720
        %v2722 = vsel %vm1377, %v2716, %v2718
        %v2723 = vsel %vm1377, %v2714, %v2716
        %v2724 = vsel %vm1377, %v2712, %v2714
        %v2725 = vsel %vm1377, %v2710, %v2712
        %v2726 = vsel %vm1377, %v2708, %v2710
        %v2727 = vsel %vm1377, %v2706, %v2708
        %v2728 = vsel %vm1377, %v2720, %v2706
        %2729 = vset.pattern.permute.xlu0 22
        %2730 = vperm.xlu0 %2729, %v1791
        %v2731 = vpop.permute.xlu0 %2730
        %v2733 = vmul.f32 %v2727, %v2731
        %v2734 = vmul.f32 %v2726, %v2731
        %v2735 = vmul.f32 %v2725, %v2731
        %v2736 = vmul.f32 %v2724, %v2731
        %v2737 = vmul.f32 %v2723, %v2731
        %v2738 = vmul.f32 %v2722, %v2731
        %v2739 = vmul.f32 %v2721, %v2731
        %v2740 = vmul.f32 %v2728, %v2731
        %v2741 = vadd.f32 %v2697, %v2733
        %v2742 = vadd.f32 %v2698, %v2734
        %v2743 = vadd.f32 %v2699, %v2735
        %v2744 = vadd.f32 %v2700, %v2736
        %v2745 = vadd.f32 %v2701, %v2737
        %v2746 = vadd.f32 %v2702, %v2738
        %v2747 = vadd.f32 %v2703, %v2739
        %v2748 = vadd.f32 %v2704, %v2740
        %2749 = vrot.lane.b32.xlu0 %v1759, 27
        %v2750 = vpop.permute.xlu0 %2749
        %2751 = vrot.lane.b32.xlu0 %v1760, 27
        %v2752 = vpop.permute.xlu0 %2751
        %2753 = vrot.lane.b32.xlu0 %v1761, 27
        %v2754 = vpop.permute.xlu0 %2753
        %2755 = vrot.lane.b32.xlu0 %v1762, 27
        %v2756 = vpop.permute.xlu0 %2755
        %2757 = vrot.lane.b32.xlu0 %v1763, 27
        %v2758 = vpop.permute.xlu0 %2757
        %2759 = vrot.lane.b32.xlu0 %v1764, 27
        %v2760 = vpop.permute.xlu0 %2759
        %2761 = vrot.lane.b32.xlu0 %v1765, 27
        %v2762 = vpop.permute.xlu0 %2761
        %2763 = vrot.lane.b32.xlu0 %v1766, 27
        %v2764 = vpop.permute.xlu0 %2763
        %v2765 = vsel %vm1422, %v2762, %v2764
        %v2766 = vsel %vm1422, %v2760, %v2762
        %v2767 = vsel %vm1422, %v2758, %v2760
        %v2768 = vsel %vm1422, %v2756, %v2758
        %v2769 = vsel %vm1422, %v2754, %v2756
        %v2770 = vsel %vm1422, %v2752, %v2754
        %v2771 = vsel %vm1422, %v2750, %v2752
        %v2772 = vsel %vm1422, %v2764, %v2750
        %2773 = vset.pattern.permute.xlu0 23
        %2774 = vperm.xlu0 %2773, %v1791
        %v2775 = vpop.permute.xlu0 %2774
        %v2777 = vmul.f32 %v2771, %v2775
        %v2778 = vmul.f32 %v2770, %v2775
        %v2779 = vmul.f32 %v2769, %v2775
        %v2780 = vmul.f32 %v2768, %v2775
        %v2781 = vmul.f32 %v2767, %v2775
        %v2782 = vmul.f32 %v2766, %v2775
        %v2783 = vmul.f32 %v2765, %v2775
        %v2784 = vmul.f32 %v2772, %v2775
        %v2785 = vadd.f32 %v2741, %v2777
        %v2786 = vadd.f32 %v2742, %v2778
        %v2787 = vadd.f32 %v2743, %v2779
        %v2788 = vadd.f32 %v2744, %v2780
        %v2789 = vadd.f32 %v2745, %v2781
        %v2790 = vadd.f32 %v2746, %v2782
        %v2791 = vadd.f32 %v2747, %v2783
        %v2792 = vadd.f32 %v2748, %v2784
        %2793 = vrot.lane.b32.xlu0 %v1759, 19
        %v2794 = vpop.permute.xlu0 %2793
        %2795 = vrot.lane.b32.xlu0 %v1760, 19
        %v2796 = vpop.permute.xlu0 %2795
        %2797 = vrot.lane.b32.xlu0 %v1761, 19
        %v2798 = vpop.permute.xlu0 %2797
        %2799 = vrot.lane.b32.xlu0 %v1762, 19
        %v2800 = vpop.permute.xlu0 %2799
        %2801 = vrot.lane.b32.xlu0 %v1763, 19
        %v2802 = vpop.permute.xlu0 %2801
        %2803 = vrot.lane.b32.xlu0 %v1764, 19
        %v2804 = vpop.permute.xlu0 %2803
        %2805 = vrot.lane.b32.xlu0 %v1765, 19
        %v2806 = vpop.permute.xlu0 %2805
        %2807 = vrot.lane.b32.xlu0 %v1766, 19
        %v2808 = vpop.permute.xlu0 %2807
        %v2809 = vsel %vm1467, %v2806, %v2808
        %v2810 = vsel %vm1467, %v2804, %v2806
        %v2811 = vsel %vm1467, %v2802, %v2804
        %v2812 = vsel %vm1467, %v2800, %v2802
        %v2813 = vsel %vm1467, %v2798, %v2800
        %v2814 = vsel %vm1467, %v2796, %v2798
        %v2815 = vsel %vm1467, %v2794, %v2796
        %v2816 = vsel %vm1467, %v2808, %v2794
        %2817 = vset.pattern.permute.xlu0 24
        %2818 = vperm.xlu0 %2817, %v1791
        %v2819 = vpop.permute.xlu0 %2818
        %v2821 = vmul.f32 %v2815, %v2819
        %v2822 = vmul.f32 %v2814, %v2819
        %v2823 = vmul.f32 %v2813, %v2819
        %v2824 = vmul.f32 %v2812, %v2819
        %v2825 = vmul.f32 %v2811, %v2819
        %v2826 = vmul.f32 %v2810, %v2819
        %v2827 = vmul.f32 %v2809, %v2819
        %v2828 = vmul.f32 %v2816, %v2819
        %v2829 = vadd.f32 %v2785, %v2821
        %v2830 = vadd.f32 %v2786, %v2822
        %v2831 = vadd.f32 %v2787, %v2823
        %v2832 = vadd.f32 %v2788, %v2824
        %v2833 = vadd.f32 %v2789, %v2825
        %v2834 = vadd.f32 %v2790, %v2826
        %v2835 = vadd.f32 %v2791, %v2827
        %v2836 = vadd.f32 %v2792, %v2828
        %2837 = vrot.lane.b32.xlu0 %v1759, 18
        %v2838 = vpop.permute.xlu0 %2837
        %2839 = vrot.lane.b32.xlu0 %v1760, 18
        %v2840 = vpop.permute.xlu0 %2839
        %2841 = vrot.lane.b32.xlu0 %v1761, 18
        %v2842 = vpop.permute.xlu0 %2841
        %2843 = vrot.lane.b32.xlu0 %v1762, 18
        %v2844 = vpop.permute.xlu0 %2843
        %2845 = vrot.lane.b32.xlu0 %v1763, 18
        %v2846 = vpop.permute.xlu0 %2845
        %2847 = vrot.lane.b32.xlu0 %v1764, 18
        %v2848 = vpop.permute.xlu0 %2847
        %2849 = vrot.lane.b32.xlu0 %v1765, 18
        %v2850 = vpop.permute.xlu0 %2849
        %2851 = vrot.lane.b32.xlu0 %v1766, 18
        %v2852 = vpop.permute.xlu0 %2851
        %v2853 = vsel %vm1512, %v2850, %v2852
        %v2854 = vsel %vm1512, %v2848, %v2850
        %v2855 = vsel %vm1512, %v2846, %v2848
        %v2856 = vsel %vm1512, %v2844, %v2846
        %v2857 = vsel %vm1512, %v2842, %v2844
        %v2858 = vsel %vm1512, %v2840, %v2842
        %v2859 = vsel %vm1512, %v2838, %v2840
        %v2860 = vsel %vm1512, %v2852, %v2838
        %2861 = vset.pattern.permute.xlu0 25
        %2862 = vperm.xlu0 %2861, %v1791
        %v2863 = vpop.permute.xlu0 %2862
        %v2865 = vmul.f32 %v2859, %v2863
        %v2866 = vmul.f32 %v2858, %v2863
        %v2867 = vmul.f32 %v2857, %v2863
        %v2868 = vmul.f32 %v2856, %v2863
        %v2869 = vmul.f32 %v2855, %v2863
        %v2870 = vmul.f32 %v2854, %v2863
        %v2871 = vmul.f32 %v2853, %v2863
        %v2872 = vmul.f32 %v2860, %v2863
        %v2873 = vadd.f32 %v2829, %v2865
        %v2874 = vadd.f32 %v2830, %v2866
        %v2875 = vadd.f32 %v2831, %v2867
        %v2876 = vadd.f32 %v2832, %v2868
        %v2877 = vadd.f32 %v2833, %v2869
        %v2878 = vadd.f32 %v2834, %v2870
        %v2879 = vadd.f32 %v2835, %v2871
        %v2880 = vadd.f32 %v2836, %v2872
        %2881 = vrot.lane.b32.xlu0 %v1759, 17
        %v2882 = vpop.permute.xlu0 %2881
        %2883 = vrot.lane.b32.xlu0 %v1760, 17
        %v2884 = vpop.permute.xlu0 %2883
        %2885 = vrot.lane.b32.xlu0 %v1761, 17
        %v2886 = vpop.permute.xlu0 %2885
        %2887 = vrot.lane.b32.xlu0 %v1762, 17
        %v2888 = vpop.permute.xlu0 %2887
        %2889 = vrot.lane.b32.xlu0 %v1763, 17
        %v2890 = vpop.permute.xlu0 %2889
        %2891 = vrot.lane.b32.xlu0 %v1764, 17
        %v2892 = vpop.permute.xlu0 %2891
        %2893 = vrot.lane.b32.xlu0 %v1765, 17
        %v2894 = vpop.permute.xlu0 %2893
        %2895 = vrot.lane.b32.xlu0 %v1766, 17
        %v2896 = vpop.permute.xlu0 %2895
        %v2897 = vsel %vm1557, %v2894, %v2896
        %v2898 = vsel %vm1557, %v2892, %v2894
        %v2899 = vsel %vm1557, %v2890, %v2892
        %v2900 = vsel %vm1557, %v2888, %v2890
        %v2901 = vsel %vm1557, %v2886, %v2888
        %v2902 = vsel %vm1557, %v2884, %v2886
        %v2903 = vsel %vm1557, %v2882, %v2884
        %v2904 = vsel %vm1557, %v2896, %v2882
        %2905 = vset.pattern.permute.xlu0 26
        %2906 = vperm.xlu0 %2905, %v1791
        %v2907 = vpop.permute.xlu0 %2906
        %v2909 = vmul.f32 %v2903, %v2907
        %v2910 = vmul.f32 %v2902, %v2907
        %v2911 = vmul.f32 %v2901, %v2907
        %v2912 = vmul.f32 %v2900, %v2907
        %v2913 = vmul.f32 %v2899, %v2907
        %v2914 = vmul.f32 %v2898, %v2907
        %v2915 = vmul.f32 %v2897, %v2907
        %v2916 = vmul.f32 %v2904, %v2907
        %v2917 = vadd.f32 %v2873, %v2909
        %v2918 = vadd.f32 %v2874, %v2910
        %v2919 = vadd.f32 %v2875, %v2911
        %v2920 = vadd.f32 %v2876, %v2912
        %v2921 = vadd.f32 %v2877, %v2913
        %v2922 = vadd.f32 %v2878, %v2914
        %v2923 = vadd.f32 %v2879, %v2915
        %v2924 = vadd.f32 %v2880, %v2916
        %v2925 = vld [vmem:[#allocation8] sm:$0xf]
        %v2926 = vpack.c.bf16 %v2917, %v2917
        %v2927 = vpack.c.bf16 %v2918, %v2918
        %v2928 = vpack.c.bf16 %v2919, %v2919
        %v2929 = vpack.c.bf16 %v2920, %v2920
        %v2930 = vpack.c.bf16 %v2921, %v2921
        %v2931 = vpack.c.bf16 %v2922, %v2922
        %v2932 = vpack.c.bf16 %v2923, %v2923
        %v2933 = vpack.c.bf16 %v2924, %v2924
        %2934 = vset.pattern.permute.xlu0 1
        %2935 = vperm.xlu0 %2934, %v1595
        %v2936 = vpop.permute.xlu0 %2935
        %v2939 = vsel %vm1601, %v2925, 0
        %v2942 = vsel %vm1605, %v2926, 0
        %v2945 = vsel %vm1605, %v2927, 0
        %v2948 = vsel %vm1605, %v2928, 0
        %v2951 = vsel %vm1605, %v2929, 0
        %v2954 = vsel %vm1605, %v2930, 0
        %v2957 = vsel %vm1605, %v2931, 0
        %v2960 = vsel %vm1605, %v2932, 0
        %v2963 = vsel %vm1605, %v2933, 0
        %2965 = vmatpush.bf16.msra.mxu0 0
        %2966 = vmatpush.bf16.msra.mxu0 0
        %2967 = vmatpush.bf16.msra.mxu0 0
        %2968 = vmatpush.bf16.msra.mxu0 0
        %2969 = vmatpush.bf16.msra.mxu0 0
        %2970 = vmatpush.bf16.msra.mxu0 0
        %2971 = vmatpush.bf16.msra.mxu0 0
        %2972 = vmatpush.bf16.msra.mxu0 %v2942
        %2973 = vmatmul.bf16.gmra.mxu0 %v2939
        %v2974 = vpop.f32.mrf.mxu0
        %v2975 = vadd.f32 %v2936, %v2974
        %v2976 = vpop.f32.mrf.mxu0
        %2977 = vdwg.mxu0
        %2978 = vmatpush.bf16.msra.mxu0 0
        %2979 = vmatpush.bf16.msra.mxu0 0
        %2980 = vmatpush.bf16.msra.mxu0 0
        %2981 = vmatpush.bf16.msra.mxu0 0
        %2982 = vmatpush.bf16.msra.mxu0 0
        %2983 = vmatpush.bf16.msra.mxu0 0
        %2984 = vmatpush.bf16.msra.mxu0 0
        %2985 = vmatpush.bf16.msra.mxu0 %v2945
        %2986 = vmatmul.bf16.gmra.mxu0 %v2939
        %v2987 = vpop.f32.mrf.mxu0
        %v2988 = vadd.f32 %v2936, %v2987
        %v2989 = vpop.f32.mrf.mxu0
        %2990 = vdwg.mxu0
        %2991 = vmatpush.bf16.msra.mxu0 0
        %2992 = vmatpush.bf16.msra.mxu0 0
        %2993 = vmatpush.bf16.msra.mxu0 0
        %2994 = vmatpush.bf16.msra.mxu0 0
        %2995 = vmatpush.bf16.msra.mxu0 0
        %2996 = vmatpush.bf16.msra.mxu0 0
        %2997 = vmatpush.bf16.msra.mxu0 0
        %2998 = vmatpush.bf16.msra.mxu0 %v2948
        %2999 = vmatmul.bf16.gmra.mxu0 %v2939
        %v3000 = vpop.f32.mrf.mxu0
        %v3001 = vadd.f32 %v2936, %v3000
        %v3002 = vpop.f32.mrf.mxu0
        %3003 = vdwg.mxu0
        %3004 = vmatpush.bf16.msra.mxu0 0
        %3005 = vmatpush.bf16.msra.mxu0 0
        %3006 = vmatpush.bf16.msra.mxu0 0
        %3007 = vmatpush.bf16.msra.mxu0 0
        %3008 = vmatpush.bf16.msra.mxu0 0
        %3009 = vmatpush.bf16.msra.mxu0 0
        %3010 = vmatpush.bf16.msra.mxu0 0
        %3011 = vmatpush.bf16.msra.mxu0 %v2951
        %3012 = vmatmul.bf16.gmra.mxu0 %v2939
        %v3013 = vpop.f32.mrf.mxu0
        %v3014 = vadd.f32 %v2936, %v3013
        %v3015 = vpop.f32.mrf.mxu0
        %3016 = vdwg.mxu0
        %3017 = vmatpush.bf16.msra.mxu0 0
        %3018 = vmatpush.bf16.msra.mxu0 0
        %3019 = vmatpush.bf16.msra.mxu0 0
        %3020 = vmatpush.bf16.msra.mxu0 0
        %3021 = vmatpush.bf16.msra.mxu0 0
        %3022 = vmatpush.bf16.msra.mxu0 0
        %3023 = vmatpush.bf16.msra.mxu0 0
        %3024 = vmatpush.bf16.msra.mxu0 %v2954
        %3025 = vmatmul.bf16.gmra.mxu0 %v2939
        %v3026 = vpop.f32.mrf.mxu0
        %v3027 = vadd.f32 %v2936, %v3026
        %v3028 = vpop.f32.mrf.mxu0
        %3029 = vdwg.mxu0
        %3030 = vmatpush.bf16.msra.mxu0 0
        %3031 = vmatpush.bf16.msra.mxu0 0
        %3032 = vmatpush.bf16.msra.mxu0 0
        %3033 = vmatpush.bf16.msra.mxu0 0
        %3034 = vmatpush.bf16.msra.mxu0 0
        %3035 = vmatpush.bf16.msra.mxu0 0
        %3036 = vmatpush.bf16.msra.mxu0 0
        %3037 = vmatpush.bf16.msra.mxu0 %v2957
        %3038 = vmatmul.bf16.gmra.mxu0 %v2939
        %v3039 = vpop.f32.mrf.mxu0
        %v3040 = vadd.f32 %v2936, %v3039
        %v3041 = vpop.f32.mrf.mxu0
        %3042 = vdwg.mxu0
        %3043 = vmatpush.bf16.msra.mxu0 0
        %3044 = vmatpush.bf16.msra.mxu0 0
        %3045 = vmatpush.bf16.msra.mxu0 0
        %3046 = vmatpush.bf16.msra.mxu0 0
        %3047 = vmatpush.bf16.msra.mxu0 0
        %3048 = vmatpush.bf16.msra.mxu0 0
        %3049 = vmatpush.bf16.msra.mxu0 0
        %3050 = vmatpush.bf16.msra.mxu0 %v2960
        %3051 = vmatmul.bf16.gmra.mxu0 %v2939
        %v3052 = vpop.f32.mrf.mxu0
        %v3053 = vadd.f32 %v2936, %v3052
        %v3054 = vpop.f32.mrf.mxu0
        %3055 = vdwg.mxu0
        %3056 = vmatpush.bf16.msra.mxu0 0
        %3057 = vmatpush.bf16.msra.mxu0 0
        %3058 = vmatpush.bf16.msra.mxu0 0
        %3059 = vmatpush.bf16.msra.mxu0 0
        %3060 = vmatpush.bf16.msra.mxu0 0
        %3061 = vmatpush.bf16.msra.mxu0 0
        %3062 = vmatpush.bf16.msra.mxu0 0
        %3063 = vmatpush.bf16.msra.mxu0 %v2963
        %3064 = vmatmul.bf16.gmra.mxu0 %v2939
        %v3065 = vpop.f32.mrf.mxu0
        %v3066 = vadd.f32 %v2936, %v3065
        %v3067 = vpop.f32.mrf.mxu0
        %3068 = vdwg.mxu0
        %v3069 = vld [vmem:[#allocation10] sm:$0xf]
        %v3070 = vpack.c.bf16 %v383, %v383
        %v3071 = vpack.c.bf16 %v384, %v384
        %v3072 = vpack.c.bf16 %v385, %v385
        %v3073 = vpack.c.bf16 %v386, %v386
        %v3074 = vpack.c.bf16 %v387, %v387
        %v3075 = vpack.c.bf16 %v388, %v388
        %v3076 = vpack.c.bf16 %v389, %v389
        %v3077 = vpack.c.bf16 %v390, %v390
        %3078 = vset.pattern.permute.xlu0 2
        %3079 = vperm.xlu0 %3078, %v1595
        %v3080 = vpop.permute.xlu0 %3079
        %v3083 = vsel %vm1601, %v3069, 0
        %v3086 = vsel %vm1605, %v3070, 0
        %v3089 = vsel %vm1605, %v3071, 0
        %v3092 = vsel %vm1605, %v3072, 0
        %v3095 = vsel %vm1605, %v3073, 0
        %v3098 = vsel %vm1605, %v3074, 0
        %v3101 = vsel %vm1605, %v3075, 0
        %v3104 = vsel %vm1605, %v3076, 0
        %v3107 = vsel %vm1605, %v3077, 0
        %3109 = vmatpush.bf16.msra.mxu0 0
        %3110 = vmatpush.bf16.msra.mxu0 0
        %3111 = vmatpush.bf16.msra.mxu0 0
        %3112 = vmatpush.bf16.msra.mxu0 0
        %3113 = vmatpush.bf16.msra.mxu0 0
        %3114 = vmatpush.bf16.msra.mxu0 0
        %3115 = vmatpush.bf16.msra.mxu0 0
        %3116 = vmatpush.bf16.msra.mxu0 %v3086
        %3117 = vmatmul.bf16.gmra.mxu0 %v3083
        %v3118 = vpop.f32.mrf.mxu0
        %v3119 = vadd.f32 %v3080, %v3118
        %v3120 = vpop.f32.mrf.mxu0
        %3121 = vdwg.mxu0
        %3122 = vmatpush.bf16.msra.mxu0 0
        %3123 = vmatpush.bf16.msra.mxu0 0
        %3124 = vmatpush.bf16.msra.mxu0 0
        %3125 = vmatpush.bf16.msra.mxu0 0
        %3126 = vmatpush.bf16.msra.mxu0 0
        %3127 = vmatpush.bf16.msra.mxu0 0
        %3128 = vmatpush.bf16.msra.mxu0 0
        %3129 = vmatpush.bf16.msra.mxu0 %v3089
        %3130 = vmatmul.bf16.gmra.mxu0 %v3083
        %v3131 = vpop.f32.mrf.mxu0
        %v3132 = vadd.f32 %v3080, %v3131
        %v3133 = vpop.f32.mrf.mxu0
        %3134 = vdwg.mxu0
        %3135 = vmatpush.bf16.msra.mxu0 0
        %3136 = vmatpush.bf16.msra.mxu0 0
        %3137 = vmatpush.bf16.msra.mxu0 0
        %3138 = vmatpush.bf16.msra.mxu0 0
        %3139 = vmatpush.bf16.msra.mxu0 0
        %3140 = vmatpush.bf16.msra.mxu0 0
        %3141 = vmatpush.bf16.msra.mxu0 0
        %3142 = vmatpush.bf16.msra.mxu0 %v3092
        %3143 = vmatmul.bf16.gmra.mxu0 %v3083
        %v3144 = vpop.f32.mrf.mxu0
        %v3145 = vadd.f32 %v3080, %v3144
        %v3146 = vpop.f32.mrf.mxu0
        %3147 = vdwg.mxu0
        %3148 = vmatpush.bf16.msra.mxu0 0
        %3149 = vmatpush.bf16.msra.mxu0 0
        %3150 = vmatpush.bf16.msra.mxu0 0
        %3151 = vmatpush.bf16.msra.mxu0 0
        %3152 = vmatpush.bf16.msra.mxu0 0
        %3153 = vmatpush.bf16.msra.mxu0 0
        %3154 = vmatpush.bf16.msra.mxu0 0
        %3155 = vmatpush.bf16.msra.mxu0 %v3095
        %3156 = vmatmul.bf16.gmra.mxu0 %v3083
        %v3157 = vpop.f32.mrf.mxu0
        %v3158 = vadd.f32 %v3080, %v3157
        %v3159 = vpop.f32.mrf.mxu0
        %3160 = vdwg.mxu0
        %3161 = vmatpush.bf16.msra.mxu0 0
        %3162 = vmatpush.bf16.msra.mxu0 0
        %3163 = vmatpush.bf16.msra.mxu0 0
        %3164 = vmatpush.bf16.msra.mxu0 0
        %3165 = vmatpush.bf16.msra.mxu0 0
        %3166 = vmatpush.bf16.msra.mxu0 0
        %3167 = vmatpush.bf16.msra.mxu0 0
        %3168 = vmatpush.bf16.msra.mxu0 %v3098
        %3169 = vmatmul.bf16.gmra.mxu0 %v3083
        %v3170 = vpop.f32.mrf.mxu0
        %v3171 = vadd.f32 %v3080, %v3170
        %v3172 = vpop.f32.mrf.mxu0
        %3173 = vdwg.mxu0
        %3174 = vmatpush.bf16.msra.mxu0 0
        %3175 = vmatpush.bf16.msra.mxu0 0
        %3176 = vmatpush.bf16.msra.mxu0 0
        %3177 = vmatpush.bf16.msra.mxu0 0
        %3178 = vmatpush.bf16.msra.mxu0 0
        %3179 = vmatpush.bf16.msra.mxu0 0
        %3180 = vmatpush.bf16.msra.mxu0 0
        %3181 = vmatpush.bf16.msra.mxu0 %v3101
        %3182 = vmatmul.bf16.gmra.mxu0 %v3083
        %v3183 = vpop.f32.mrf.mxu0
        %v3184 = vadd.f32 %v3080, %v3183
        %v3185 = vpop.f32.mrf.mxu0
        %3186 = vdwg.mxu0
        %3187 = vmatpush.bf16.msra.mxu0 0
        %3188 = vmatpush.bf16.msra.mxu0 0
        %3189 = vmatpush.bf16.msra.mxu0 0
        %3190 = vmatpush.bf16.msra.mxu0 0
        %3191 = vmatpush.bf16.msra.mxu0 0
        %3192 = vmatpush.bf16.msra.mxu0 0
        %3193 = vmatpush.bf16.msra.mxu0 0
        %3194 = vmatpush.bf16.msra.mxu0 %v3104
        %3195 = vmatmul.bf16.gmra.mxu0 %v3083
        %v3196 = vpop.f32.mrf.mxu0
        %v3197 = vadd.f32 %v3080, %v3196
        %v3198 = vpop.f32.mrf.mxu0
        %3199 = vdwg.mxu0
        %3200 = vmatpush.bf16.msra.mxu0 0
        %3201 = vmatpush.bf16.msra.mxu0 0
        %3202 = vmatpush.bf16.msra.mxu0 0
        %3203 = vmatpush.bf16.msra.mxu0 0
        %3204 = vmatpush.bf16.msra.mxu0 0
        %3205 = vmatpush.bf16.msra.mxu0 0
        %3206 = vmatpush.bf16.msra.mxu0 0
        %3207 = vmatpush.bf16.msra.mxu0 %v3107
        %3208 = vmatmul.bf16.gmra.mxu0 %v3083
        %v3209 = vpop.f32.mrf.mxu0
        %v3210 = vadd.f32 %v3080, %v3209
        %v3211 = vpop.f32.mrf.mxu0
        %3212 = vdwg.mxu0
        %v3213 = vadd.f32 %v2975, %v3119
        %v3214 = vadd.f32 %v2988, %v3132
        %v3215 = vadd.f32 %v3001, %v3145
        %v3216 = vadd.f32 %v3014, %v3158
        %v3217 = vadd.f32 %v3027, %v3171
        %v3218 = vadd.f32 %v3040, %v3184
        %v3219 = vadd.f32 %v3053, %v3197
        %v3220 = vadd.f32 %v3066, %v3210
        %3221 = vst [vmem:[%s381] sm:$0xff] %v3213
        %3222 = vst [vmem:[%s381 + $0x8] sm:$0xff] %v3214
        %3223 = vst [vmem:[%s381 + $0x10] sm:$0xff] %v3215
        %3224 = vst [vmem:[%s381 + $0x18] sm:$0xff] %v3216
        %3225 = vst [vmem:[%s381 + $0x20] sm:$0xff] %v3217
        %3226 = vst [vmem:[%s381 + $0x28] sm:$0xff] %v3218
        %3227 = vst [vmem:[%s381 + $0x30] sm:$0xff] %v3219
        %3228 = vst [vmem:[%s381 + $0x38] sm:$0xff] %v3220
        %s3229 = sand.u32 %s208, 1
        %s3230 = scalar_lea.sflag [#allocation4], %s3229
        %s3231 = sand.u32 %s208, 1
        %s3232 = smul.addr %s3231, 64
        %s3233 = scalar_lea.vmem [#allocation11], %s3232
        // Predicated region
        $region73: #{tpu_custom_call.1} parent=51 // pred_check
          %p3234 = pneg %p218
        $region74: #{tpu_custom_call.1} parent=51 // pred_check_branch
          %3236 = sbr.rel (%p3234) target = $region76
        $region75: #{tpu_custom_call.1} parent=51 // pred_region
          %3238 = vsyncadd %s3230, 0
          %s3239 = smul.addr %s27, 8
          %s3240 = smul.addr %s3239, 8
          %s3241 = scalar_lea.hbm %s8, %s3240
          %s3243 = sshll.u32 %s3233, 4
          %s3244 = int_to_ptr.vmem [resolvable:$true] %s3243
          %s3245 = sshll.u32 %s3241, 4
          %s3246 = int_to_ptr.hbm [resolvable:$true] %s3245
          %3248 = dma.vmem_to_hbm [thread:$0]  %s3244, 1024, %s3246, %s3230
        $region76: #{tpu_custom_call.1} parent=51 // pred_fallthru
          _
      $region52: #{tpu_custom_call.1} parent=5 // pred_fallthru
        _
      %p3249 = scmp.le.s32.totalorder 2, %s22
      // Predicated region
      $region77: #{tpu_custom_call.1} parent=5 // pred_check
        %p3250 = pneg %p3249
      $region78: #{tpu_custom_call.1} parent=5 // pred_check_branch
        %3252 = sbr.rel (%p3250) target = $region80
      $region79: #{tpu_custom_call.1} parent=5 // pred_region
        %s3253 = ssub.s32 %s22, 2
        // Predicated region
        $region81: #{tpu_custom_call.1} parent=79 // pred_check
          %p3254 = pneg %p224
        $region82: #{tpu_custom_call.1} parent=79 // pred_check_branch
          %3256 = sbr.rel (%p3254) target = $region84
        $region83: #{tpu_custom_call.1} parent=79 // pred_region
          %s3257 = sand.u32 %s209, 1
          %s3258 = scalar_lea.sflag [#allocation4], %s3257
          %s3259 = sand.u32 %s209, 1
          %s3260 = smul.addr %s3259, 64
          %s3261 = scalar_lea.vmem [#allocation11], %s3260
          %3263 = dma.done %s3258, 1024
        $region84: #{tpu_custom_call.1} parent=79 // pred_fallthru
          _
      $region80: #{tpu_custom_call.1} parent=5 // pred_fallthru
        _
    $region6: #{tpu_custom_call.1} parent=1 // loop_footer
      %s26 = sadd.s32 1, %s22
    $region7: #{tpu_custom_call.1} parent=1 // loop_footer_branch
      %21 = sbr.rel target = $region3
    $region8: #{tpu_custom_call.1} parent=1 // loop_exit
      _
    %3264 = vsyncpa [#allocation3], 1
    %s3265 = scalar_lea.sflag [#allocation3], 1
    %3266 = vsyncpa %s3265, 1
    %3267 = vsyncpa [#allocation6], 1
    %3268 = vsyncpa [#allocation9], 1
    %3269 = vsyncpa [#allocation4], 1
    %s3270 = scalar_lea.sflag [#allocation4], 1
    %3271 = vsyncpa %s3270, 1

</llo_original>
